<compile_context>
chip_gen: v7x
topology: tpu7x:2x2x1
jax: 0.10.0
libtpu: 0.0.40
codegen_flags: <defaults>
</compile_context>

<pallas_src>
import functools

import jax
import jax.numpy as jnp
from jax import lax
from jax.experimental import pallas as pl
from jax.experimental.pallas import tpu as pltpu

EPS = 1e-12  # torch.nn.functional.normalize default eps


def _l2norm(t):
    # F.normalize(t, dim=-1): t / max(||t||, eps)  ==  t * rsqrt(max(||t||^2, eps^2))
    n2 = jnp.sum(t * t, axis=-1, keepdims=True)
    return t * lax.rsqrt(jnp.maximum(n2, EPS * EPS))


def attention_kernel(x_ref, wq_ref, wk_ref, wv_ref, cs_ref, wout_ref, o_ref,
                     *, heads):
    """One batch element, all heads.

    x_ref    : (N, dim)                 f32
    wq/wk/wv : (heads, dim, dim_head)   bf16  (RMSNorm gain*sqrt(dim) pre-folded)
    cs_ref   : (1, dim_head)            f32   q_scale * k_scale * scale
    wout_ref : (heads, dim_head, dim)   bf16
    o_ref    : (N, dim)                 f32
    """
    # RMSNorm: the gain*sqrt(dim) factor is folded into the projection weights,
    # so only the l2 normalization remains here (f32).
    xn16 = _l2norm(x_ref[...]).astype(jnp.bfloat16)          # (N, dim)
    comb = cs_ref[...]                                        # (1, dim_head)

    acc = None
    for h in range(heads):                                    # static unroll
        # Per-head projections (bf16 in, f32 accumulate). No lane slices.
        q = jnp.dot(xn16, wq_ref[h], preferred_element_type=jnp.float32)   # (N, dh)
        k = jnp.dot(xn16, wk_ref[h], preferred_element_type=jnp.float32)
        v = jnp.dot(xn16, wv_ref[h], preferred_element_type=jnp.float32)

        # l2norm in f32; q_scale*k_scale*scale folded into k (commutes through q k^T).
        q16 = _l2norm(q).astype(jnp.bfloat16)
        k16 = (_l2norm(k) * comb).astype(jnp.bfloat16)
        v16 = v.astype(jnp.bfloat16)

        sim = lax.dot_general(q16, k16, (((1,), (1,)), ((), ())),
                              preferred_element_type=jnp.float32)           # (N, N)
        m = jnp.max(sim, axis=-1, keepdims=True)
        p = jnp.exp(sim - m)
        attn = p * pl.reciprocal(jnp.sum(p, axis=-1, keepdims=True), approx=True)
        # attn_dropout(p=0.0) is the identity.

        ob = jnp.dot(attn.astype(jnp.bfloat16), v16,
                     preferred_element_type=jnp.float32)                    # (N, dh)
        part = jnp.dot(ob.astype(jnp.bfloat16), wout_ref[h],
                       preferred_element_type=jnp.float32)                  # (N, dim)
        acc = part if acc is None else acc + part

    o_ref[...] = acc.astype(o_ref.dtype)


def attention_forward(x, params, *, heads, dim_head, scale):
    """x: (B, N, dim).  params laid out so projections compute y = x @ W."""
    B, N, dim = x.shape
    hidden = heads * dim_head
    f32 = jnp.float32
    assert params["wqkv"].shape == (dim, 3 * hidden)
    assert params["wout"].shape == (hidden, dim)

    # ---- offline constant folding & per-head weight layout -----------------
    gain = params["g"].reshape(dim).astype(f32)
    w_scaled = params["wqkv"].astype(f32) * (gain * jnp.sqrt(f32(dim)))[:, None]
    wq, wk, wv = jnp.split(w_scaled, 3, axis=-1)              # (dim, hidden) each

    def per_head(w):  # (dim, hidden) -> (heads, dim, dim_head) bf16 MXU operand
        return jnp.transpose(w.reshape(dim, heads, dim_head), (1, 0, 2)).astype(jnp.bfloat16)

    wq_h, wk_h, wv_h = per_head(wq), per_head(wk), per_head(wv)
    wout_h = params["wout"].astype(f32).reshape(heads, dim_head, dim).astype(jnp.bfloat16)
    comb = (params["q_scale"].reshape(dim_head).astype(f32)
            * params["k_scale"].reshape(dim_head).astype(f32)
            * f32(scale)).reshape(1, dim_head)

    x2 = x.astype(f32).reshape(B * N, dim)                    # batch folded into rows

    kernel = functools.partial(attention_kernel, heads=heads)

    out = pl.pallas_call(
        kernel,
        out_shape=jax.ShapeDtypeStruct((B * N, dim), jnp.float32),
        grid=(B,),
        in_specs=[
            pl.BlockSpec((N, dim), lambda b: (b, 0)),                      # x rows of batch b
            pl.BlockSpec((heads, dim, dim_head), lambda b: (0, 0, 0)),     # Wq (all heads)
            pl.BlockSpec((heads, dim, dim_head), lambda b: (0, 0, 0)),     # Wk
            pl.BlockSpec((heads, dim, dim_head), lambda b: (0, 0, 0)),     # Wv
            pl.BlockSpec((1, dim_head), lambda b: (0, 0)),                 # qs*ks*scale
            pl.BlockSpec((heads, dim_head, dim), lambda b: (0, 0, 0)),     # Wout
        ],
        out_specs=pl.BlockSpec((N, dim), lambda b: (b, 0)),
        compiler_params=pltpu.CompilerParams(
            dimension_semantics=("parallel",)),   # batch elements shard across TCs
    )(x2, wq_h, wk_h, wv_h, comb, wout_h)

    # TODO(synk): for realistic diffusion resolutions (large N) switch the
    # per-head block to a KV-tiled online softmax (flash-style) instead of the
    # full (N, N) sim held in VMEM.
    return out.reshape(B, N, dim).astype(x.dtype)


def init_params(key, dim, heads, dim_head):
    hidden = heads * dim_head
    k1, k2 = jax.random.split(key)
    # nn.Linear default init ~ U(-1/sqrt(fan_in), 1/sqrt(fan_in)); stored transposed.
    wqkv = jax.random.uniform(k1, (dim, 3 * hidden), jnp.float32,
                              minval=-1.0, maxval=1.0) / jnp.sqrt(dim)
    wout = jax.random.uniform(k2, (hidden, dim), jnp.float32,
                              minval=-1.0, maxval=1.0) / jnp.sqrt(hidden)
    return {
        "g": jnp.ones((1, dim), jnp.float32),            # RMSNorm gain (init = 1)
        "wqkv": wqkv,
        "wout": wout,
        "q_scale": jnp.ones((1, dim_head), jnp.float32),
        "k_scale": jnp.ones((1, dim_head), jnp.float32),
    }


def _reference(x, params, *, heads, dim_head, scale):
    # Pure-JAX f32 reference, faithful to the PyTorch module.
    dim = x.shape[-1]
    hidden = heads * dim_head
    xn = _l2norm(x) * params["g"].reshape(1, 1, dim) * jnp.sqrt(jnp.float32(dim))
    qkv = xn @ params["wqkv"]
    q, k, v = jnp.split(qkv, 3, axis=-1)

    def to_heads(t):
        B, N, _ = t.shape
        return t.reshape(B, N, heads, dim_head).transpose(0, 2, 1, 3)

    q, k, v = map(to_heads, (q, k, v))
    q = _l2norm(q) * params["q_scale"].reshape(dim_head)
    k = _l2norm(k) * params["k_scale"].reshape(dim_head)
    sim = jnp.einsum("bhid,bhjd->bhij", q, k) * scale
    attn = jax.nn.softmax(sim, axis=-1)
    out = jnp.einsum("bhij,bhjd->bhid", attn, v)
    B, _, N, _ = out.shape
    out = out.transpose(0, 2, 1, 3).reshape(B, N, hidden)
    return out @ params["wout"]


if __name__ == "__main__":
    B, N, dim = 2, 64, 32            # N = H*W pixels (e.g. 8x8)
    heads, dim_head, scale = 4, 32, 8

    key = jax.random.PRNGKey(0)
    kx, kp = jax.random.split(key)
    x = jax.random.normal(kx, (B, N, dim), jnp.float32)
    params = init_params(kp, dim, heads, dim_head)

    out = attention_forward(x, params, heads=heads, dim_head=dim_head, scale=scale)
    out = jax.block_until_ready(out)

    ref = _reference(x, params, heads=heads, dim_head=dim_head, scale=scale)
    assert out.shape == (B, N, dim)
    err = float(jnp.max(jnp.abs(out - ref)))
    assert err < 2e-2, f"mismatch vs reference: max abs err = {err}"
    print("KERNEL_OK")
</pallas_src>

<mosaic_0001>
module attributes {stable_mosaic.version = 11 : i64} {
  func.func @attention_kernel(%arg0: i32, %arg1: memref<64x32xf32, #tpu.memory_space<vmem>>, %arg2: memref<4x32x32xbf16, #tpu.memory_space<vmem>>, %arg3: memref<4x32x32xbf16, #tpu.memory_space<vmem>>, %arg4: memref<4x32x32xbf16, #tpu.memory_space<vmem>>, %arg5: memref<1x32xf32, #tpu.memory_space<vmem>>, %arg6: memref<4x32x32xbf16, #tpu.memory_space<vmem>>, %arg7: memref<64x32xf32, #tpu.memory_space<vmem>>) attributes {dimension_semantics = [#tpu.dimension_semantics<parallel>], iteration_bounds = array<i64: 2>, scalar_prefetch = 0 : i64, scratch_operands = 0 : i64, tpu.core_type = #tpu.core_type<tc>, window_params = [{transform_indices = @transform_0, window_bounds = array<i64: 64, 32>}, {pipeline_mode = #tpu.pipeline_mode<synchronous>, transform_indices = @transform_1, window_bounds = array<i64: 4, 32, 32>}, {pipeline_mode = #tpu.pipeline_mode<synchronous>, transform_indices = @transform_2, window_bounds = array<i64: 4, 32, 32>}, {pipeline_mode = #tpu.pipeline_mode<synchronous>, transform_indices = @transform_3, window_bounds = array<i64: 4, 32, 32>}, {pipeline_mode = #tpu.pipeline_mode<synchronous>, transform_indices = @transform_4, window_bounds = array<i64: 1, 32>}, {pipeline_mode = #tpu.pipeline_mode<synchronous>, transform_indices = @transform_5, window_bounds = array<i64: 4, 32, 32>}, {transform_indices = @transform_6, window_bounds = array<i64: 64, 32>}]} {
    %c0 = arith.constant 0 : index
    %c0_0 = arith.constant 0 : index
    %0 = vector.load %arg1[%c0, %c0_0] : memref<64x32xf32, #tpu.memory_space<vmem>>, vector<64x32xf32>
    %1 = arith.mulf %0, %0 : vector<64x32xf32>
    %cst = arith.constant dense<0.000000e+00> : vector<64xf32>
    %2 = vector.multi_reduction <add>, %1, %cst [1] : vector<64x32xf32> to vector<64xf32>
    %3 = vector.shape_cast %2 : vector<64xf32> to vector<64x1xf32>
    %cst_1 = arith.constant 1.000000e-24 : f32
    %4 = vector.broadcast %cst_1 : f32 to vector<64x1xf32>
    %5 = arith.maximumf %3, %4 : vector<64x1xf32>
    %6 = math.rsqrt %5 : vector<64x1xf32>
    %7 = vector.broadcast %6 : vector<64x1xf32> to vector<64x32xf32>
    %8 = arith.mulf %0, %7 : vector<64x32xf32>
    %9 = arith.truncf %8 : vector<64x32xf32> to vector<64x32xbf16>
    %c0_2 = arith.constant 0 : index
    %c0_3 = arith.constant 0 : index
    %10 = vector.load %arg5[%c0_2, %c0_3] : memref<1x32xf32, #tpu.memory_space<vmem>>, vector<1x32xf32>
    %c0_4 = arith.constant 0 : index
    %c0_5 = arith.constant 0 : index
    %c0_6 = arith.constant 0 : index
    %11 = vector.load %arg2[%c0_4, %c0_5, %c0_6] : memref<4x32x32xbf16, #tpu.memory_space<vmem>>, vector<1x32x32xbf16>
    %12 = vector.shape_cast %11 : vector<1x32x32xbf16> to vector<32x32xbf16>
    %cst_7 = arith.constant dense<0.000000e+00> : vector<64x32xf32>
    %13 = tpu.matmul %9, %12, %cst_7 {dimension_numbers = #tpu.dot_dimension_numbers<[1], [0], [0], [1], [0, 0, 1, 1], [], []>} : vector<64x32xbf16>, vector<32x32xbf16>, vector<64x32xf32> -> vector<64x32xf32>
    %c0_8 = arith.constant 0 : index
    %c0_9 = arith.constant 0 : index
    %c0_10 = arith.constant 0 : index
    %14 = vector.load %arg3[%c0_8, %c0_9, %c0_10] : memref<4x32x32xbf16, #tpu.memory_space<vmem>>, vector<1x32x32xbf16>
    %15 = vector.shape_cast %14 : vector<1x32x32xbf16> to vector<32x32xbf16>
    %cst_11 = arith.constant dense<0.000000e+00> : vector<64x32xf32>
    %16 = tpu.matmul %9, %15, %cst_11 {dimension_numbers = #tpu.dot_dimension_numbers<[1], [0], [0], [1], [0, 0, 1, 1], [], []>} : vector<64x32xbf16>, vector<32x32xbf16>, vector<64x32xf32> -> vector<64x32xf32>
    %c0_12 = arith.constant 0 : index
    %c0_13 = arith.constant 0 : index
    %c0_14 = arith.constant 0 : index
    %17 = vector.load %arg4[%c0_12, %c0_13, %c0_14] : memref<4x32x32xbf16, #tpu.memory_space<vmem>>, vector<1x32x32xbf16>
    %18 = vector.shape_cast %17 : vector<1x32x32xbf16> to vector<32x32xbf16>
    %cst_15 = arith.constant dense<0.000000e+00> : vector<64x32xf32>
    %19 = tpu.matmul %9, %18, %cst_15 {dimension_numbers = #tpu.dot_dimension_numbers<[1], [0], [0], [1], [0, 0, 1, 1], [], []>} : vector<64x32xbf16>, vector<32x32xbf16>, vector<64x32xf32> -> vector<64x32xf32>
    %20 = arith.mulf %13, %13 : vector<64x32xf32>
    %cst_16 = arith.constant dense<0.000000e+00> : vector<64xf32>
    %21 = vector.multi_reduction <add>, %20, %cst_16 [1] : vector<64x32xf32> to vector<64xf32>
    %22 = vector.shape_cast %21 : vector<64xf32> to vector<64x1xf32>
    %cst_17 = arith.constant 1.000000e-24 : f32
    %23 = vector.broadcast %cst_17 : f32 to vector<64x1xf32>
    %24 = arith.maximumf %22, %23 : vector<64x1xf32>
    %25 = math.rsqrt %24 : vector<64x1xf32>
    %26 = vector.broadcast %25 : vector<64x1xf32> to vector<64x32xf32>
    %27 = arith.mulf %13, %26 : vector<64x32xf32>
    %28 = arith.truncf %27 : vector<64x32xf32> to vector<64x32xbf16>
    %29 = arith.mulf %16, %16 : vector<64x32xf32>
    %cst_18 = arith.constant dense<0.000000e+00> : vector<64xf32>
    %30 = vector.multi_reduction <add>, %29, %cst_18 [1] : vector<64x32xf32> to vector<64xf32>
    %31 = vector.shape_cast %30 : vector<64xf32> to vector<64x1xf32>
    %cst_19 = arith.constant 1.000000e-24 : f32
    %32 = vector.broadcast %cst_19 : f32 to vector<64x1xf32>
    %33 = arith.maximumf %31, %32 : vector<64x1xf32>
    %34 = math.rsqrt %33 : vector<64x1xf32>
    %35 = vector.broadcast %34 : vector<64x1xf32> to vector<64x32xf32>
    %36 = arith.mulf %16, %35 : vector<64x32xf32>
    %37 = vector.broadcast %10 : vector<1x32xf32> to vector<64x32xf32>
    %38 = arith.mulf %36, %37 : vector<64x32xf32>
    %39 = arith.truncf %38 : vector<64x32xf32> to vector<64x32xbf16>
    %40 = arith.truncf %19 : vector<64x32xf32> to vector<64x32xbf16>
    %cst_20 = arith.constant dense<0.000000e+00> : vector<64x64xf32>
    %41 = tpu.matmul %28, %39, %cst_20 {dimension_numbers = #tpu.dot_dimension_numbers<[1], [1], [0], [0], [0, 0, 1, 0], [], []>} : vector<64x32xbf16>, vector<64x32xbf16>, vector<64x64xf32> -> vector<64x64xf32>
    %cst_21 = arith.constant dense<0xFF800000> : vector<64xf32>
    %42 = vector.multi_reduction <maximumf>, %41, %cst_21 [1] : vector<64x64xf32> to vector<64xf32>
    %43 = vector.shape_cast %42 : vector<64xf32> to vector<64x1xf32>
    %44 = vector.broadcast %43 : vector<64x1xf32> to vector<64x64xf32>
    %45 = arith.subf %41, %44 : vector<64x64xf32>
    %46 = math.exp %45 : vector<64x64xf32>
    %cst_22 = arith.constant dense<0.000000e+00> : vector<64xf32>
    %47 = vector.multi_reduction <add>, %46, %cst_22 [1] : vector<64x64xf32> to vector<64xf32>
    %48 = vector.shape_cast %47 : vector<64xf32> to vector<64x1xf32>
    %49 = tpu.reciprocal %48 {approx = true} : vector<64x1xf32> -> vector<64x1xf32>
    %50 = vector.broadcast %49 : vector<64x1xf32> to vector<64x64xf32>
    %51 = arith.mulf %46, %50 : vector<64x64xf32>
    %52 = arith.truncf %51 : vector<64x64xf32> to vector<64x64xbf16>
    %cst_23 = arith.constant dense<0.000000e+00> : vector<64x32xf32>
    %53 = tpu.matmul %52, %40, %cst_23 {dimension_numbers = #tpu.dot_dimension_numbers<[1], [0], [0], [1], [0, 0, 1, 1], [], []>} : vector<64x64xbf16>, vector<64x32xbf16>, vector<64x32xf32> -> vector<64x32xf32>
    %54 = arith.truncf %53 : vector<64x32xf32> to vector<64x32xbf16>
    %c0_24 = arith.constant 0 : index
    %c0_25 = arith.constant 0 : index
    %c0_26 = arith.constant 0 : index
    %55 = vector.load %arg6[%c0_24, %c0_25, %c0_26] : memref<4x32x32xbf16, #tpu.memory_space<vmem>>, vector<1x32x32xbf16>
    %56 = vector.shape_cast %55 : vector<1x32x32xbf16> to vector<32x32xbf16>
    %cst_27 = arith.constant dense<0.000000e+00> : vector<64x32xf32>
    %57 = tpu.matmul %54, %56, %cst_27 {dimension_numbers = #tpu.dot_dimension_numbers<[1], [0], [0], [1], [0, 0, 1, 1], [], []>} : vector<64x32xbf16>, vector<32x32xbf16>, vector<64x32xf32> -> vector<64x32xf32>
    %c1 = arith.constant 1 : index
    %c0_28 = arith.constant 0 : index
    %c0_29 = arith.constant 0 : index
    %58 = vector.load %arg2[%c1, %c0_28, %c0_29] : memref<4x32x32xbf16, #tpu.memory_space<vmem>>, vector<1x32x32xbf16>
    %59 = vector.shape_cast %58 : vector<1x32x32xbf16> to vector<32x32xbf16>
    %cst_30 = arith.constant dense<0.000000e+00> : vector<64x32xf32>
    %60 = tpu.matmul %9, %59, %cst_30 {dimension_numbers = #tpu.dot_dimension_numbers<[1], [0], [0], [1], [0, 0, 1, 1], [], []>} : vector<64x32xbf16>, vector<32x32xbf16>, vector<64x32xf32> -> vector<64x32xf32>
    %c1_31 = arith.constant 1 : index
    %c0_32 = arith.constant 0 : index
    %c0_33 = arith.constant 0 : index
    %61 = vector.load %arg3[%c1_31, %c0_32, %c0_33] : memref<4x32x32xbf16, #tpu.memory_space<vmem>>, vector<1x32x32xbf16>
    %62 = vector.shape_cast %61 : vector<1x32x32xbf16> to vector<32x32xbf16>
    %cst_34 = arith.constant dense<0.000000e+00> : vector<64x32xf32>
    %63 = tpu.matmul %9, %62, %cst_34 {dimension_numbers = #tpu.dot_dimension_numbers<[1], [0], [0], [1], [0, 0, 1, 1], [], []>} : vector<64x32xbf16>, vector<32x32xbf16>, vector<64x32xf32> -> vector<64x32xf32>
    %c1_35 = arith.constant 1 : index
    %c0_36 = arith.constant 0 : index
    %c0_37 = arith.constant 0 : index
    %64 = vector.load %arg4[%c1_35, %c0_36, %c0_37] : memref<4x32x32xbf16, #tpu.memory_space<vmem>>, vector<1x32x32xbf16>
    %65 = vector.shape_cast %64 : vector<1x32x32xbf16> to vector<32x32xbf16>
    %cst_38 = arith.constant dense<0.000000e+00> : vector<64x32xf32>
    %66 = tpu.matmul %9, %65, %cst_38 {dimension_numbers = #tpu.dot_dimension_numbers<[1], [0], [0], [1], [0, 0, 1, 1], [], []>} : vector<64x32xbf16>, vector<32x32xbf16>, vector<64x32xf32> -> vector<64x32xf32>
    %67 = arith.mulf %60, %60 : vector<64x32xf32>
    %cst_39 = arith.constant dense<0.000000e+00> : vector<64xf32>
    %68 = vector.multi_reduction <add>, %67, %cst_39 [1] : vector<64x32xf32> to vector<64xf32>
    %69 = vector.shape_cast %68 : vector<64xf32> to vector<64x1xf32>
    %cst_40 = arith.constant 1.000000e-24 : f32
    %70 = vector.broadcast %cst_40 : f32 to vector<64x1xf32>
    %71 = arith.maximumf %69, %70 : vector<64x1xf32>
    %72 = math.rsqrt %71 : vector<64x1xf32>
    %73 = vector.broadcast %72 : vector<64x1xf32> to vector<64x32xf32>
    %74 = arith.mulf %60, %73 : vector<64x32xf32>
    %75 = arith.truncf %74 : vector<64x32xf32> to vector<64x32xbf16>
    %76 = arith.mulf %63, %63 : vector<64x32xf32>
    %cst_41 = arith.constant dense<0.000000e+00> : vector<64xf32>
    %77 = vector.multi_reduction <add>, %76, %cst_41 [1] : vector<64x32xf32> to vector<64xf32>
    %78 = vector.shape_cast %77 : vector<64xf32> to vector<64x1xf32>
    %cst_42 = arith.constant 1.000000e-24 : f32
    %79 = vector.broadcast %cst_42 : f32 to vector<64x1xf32>
    %80 = arith.maximumf %78, %79 : vector<64x1xf32>
    %81 = math.rsqrt %80 : vector<64x1xf32>
    %82 = vector.broadcast %81 : vector<64x1xf32> to vector<64x32xf32>
    %83 = arith.mulf %63, %82 : vector<64x32xf32>
    %84 = vector.broadcast %10 : vector<1x32xf32> to vector<64x32xf32>
    %85 = arith.mulf %83, %84 : vector<64x32xf32>
    %86 = arith.truncf %85 : vector<64x32xf32> to vector<64x32xbf16>
    %87 = arith.truncf %66 : vector<64x32xf32> to vector<64x32xbf16>
    %cst_43 = arith.constant dense<0.000000e+00> : vector<64x64xf32>
    %88 = tpu.matmul %75, %86, %cst_43 {dimension_numbers = #tpu.dot_dimension_numbers<[1], [1], [0], [0], [0, 0, 1, 0], [], []>} : vector<64x32xbf16>, vector<64x32xbf16>, vector<64x64xf32> -> vector<64x64xf32>
    %cst_44 = arith.constant dense<0xFF800000> : vector<64xf32>
    %89 = vector.multi_reduction <maximumf>, %88, %cst_44 [1] : vector<64x64xf32> to vector<64xf32>
    %90 = vector.shape_cast %89 : vector<64xf32> to vector<64x1xf32>
    %91 = vector.broadcast %90 : vector<64x1xf32> to vector<64x64xf32>
    %92 = arith.subf %88, %91 : vector<64x64xf32>
    %93 = math.exp %92 : vector<64x64xf32>
    %cst_45 = arith.constant dense<0.000000e+00> : vector<64xf32>
    %94 = vector.multi_reduction <add>, %93, %cst_45 [1] : vector<64x64xf32> to vector<64xf32>
    %95 = vector.shape_cast %94 : vector<64xf32> to vector<64x1xf32>
    %96 = tpu.reciprocal %95 {approx = true} : vector<64x1xf32> -> vector<64x1xf32>
    %97 = vector.broadcast %96 : vector<64x1xf32> to vector<64x64xf32>
    %98 = arith.mulf %93, %97 : vector<64x64xf32>
    %99 = arith.truncf %98 : vector<64x64xf32> to vector<64x64xbf16>
    %cst_46 = arith.constant dense<0.000000e+00> : vector<64x32xf32>
    %100 = tpu.matmul %99, %87, %cst_46 {dimension_numbers = #tpu.dot_dimension_numbers<[1], [0], [0], [1], [0, 0, 1, 1], [], []>} : vector<64x64xbf16>, vector<64x32xbf16>, vector<64x32xf32> -> vector<64x32xf32>
    %101 = arith.truncf %100 : vector<64x32xf32> to vector<64x32xbf16>
    %c1_47 = arith.constant 1 : index
    %c0_48 = arith.constant 0 : index
    %c0_49 = arith.constant 0 : index
    %102 = vector.load %arg6[%c1_47, %c0_48, %c0_49] : memref<4x32x32xbf16, #tpu.memory_space<vmem>>, vector<1x32x32xbf16>
    %103 = vector.shape_cast %102 : vector<1x32x32xbf16> to vector<32x32xbf16>
    %cst_50 = arith.constant dense<0.000000e+00> : vector<64x32xf32>
    %104 = tpu.matmul %101, %103, %cst_50 {dimension_numbers = #tpu.dot_dimension_numbers<[1], [0], [0], [1], [0, 0, 1, 1], [], []>} : vector<64x32xbf16>, vector<32x32xbf16>, vector<64x32xf32> -> vector<64x32xf32>
    %105 = arith.addf %57, %104 : vector<64x32xf32>
    %c2 = arith.constant 2 : index
    %c0_51 = arith.constant 0 : index
    %c0_52 = arith.constant 0 : index
    %106 = vector.load %arg2[%c2, %c0_51, %c0_52] : memref<4x32x32xbf16, #tpu.memory_space<vmem>>, vector<1x32x32xbf16>
    %107 = vector.shape_cast %106 : vector<1x32x32xbf16> to vector<32x32xbf16>
    %cst_53 = arith.constant dense<0.000000e+00> : vector<64x32xf32>
    %108 = tpu.matmul %9, %107, %cst_53 {dimension_numbers = #tpu.dot_dimension_numbers<[1], [0], [0], [1], [0, 0, 1, 1], [], []>} : vector<64x32xbf16>, vector<32x32xbf16>, vector<64x32xf32> -> vector<64x32xf32>
    %c2_54 = arith.constant 2 : index
    %c0_55 = arith.constant 0 : index
    %c0_56 = arith.constant 0 : index
    %109 = vector.load %arg3[%c2_54, %c0_55, %c0_56] : memref<4x32x32xbf16, #tpu.memory_space<vmem>>, vector<1x32x32xbf16>
    %110 = vector.shape_cast %109 : vector<1x32x32xbf16> to vector<32x32xbf16>
    %cst_57 = arith.constant dense<0.000000e+00> : vector<64x32xf32>
    %111 = tpu.matmul %9, %110, %cst_57 {dimension_numbers = #tpu.dot_dimension_numbers<[1], [0], [0], [1], [0, 0, 1, 1], [], []>} : vector<64x32xbf16>, vector<32x32xbf16>, vector<64x32xf32> -> vector<64x32xf32>
    %c2_58 = arith.constant 2 : index
    %c0_59 = arith.constant 0 : index
    %c0_60 = arith.constant 0 : index
    %112 = vector.load %arg4[%c2_58, %c0_59, %c0_60] : memref<4x32x32xbf16, #tpu.memory_space<vmem>>, vector<1x32x32xbf16>
    %113 = vector.shape_cast %112 : vector<1x32x32xbf16> to vector<32x32xbf16>
    %cst_61 = arith.constant dense<0.000000e+00> : vector<64x32xf32>
    %114 = tpu.matmul %9, %113, %cst_61 {dimension_numbers = #tpu.dot_dimension_numbers<[1], [0], [0], [1], [0, 0, 1, 1], [], []>} : vector<64x32xbf16>, vector<32x32xbf16>, vector<64x32xf32> -> vector<64x32xf32>
    %115 = arith.mulf %108, %108 : vector<64x32xf32>
    %cst_62 = arith.constant dense<0.000000e+00> : vector<64xf32>
    %116 = vector.multi_reduction <add>, %115, %cst_62 [1] : vector<64x32xf32> to vector<64xf32>
    %117 = vector.shape_cast %116 : vector<64xf32> to vector<64x1xf32>
    %cst_63 = arith.constant 1.000000e-24 : f32
    %118 = vector.broadcast %cst_63 : f32 to vector<64x1xf32>
    %119 = arith.maximumf %117, %118 : vector<64x1xf32>
    %120 = math.rsqrt %119 : vector<64x1xf32>
    %121 = vector.broadcast %120 : vector<64x1xf32> to vector<64x32xf32>
    %122 = arith.mulf %108, %121 : vector<64x32xf32>
    %123 = arith.truncf %122 : vector<64x32xf32> to vector<64x32xbf16>
    %124 = arith.mulf %111, %111 : vector<64x32xf32>
    %cst_64 = arith.constant dense<0.000000e+00> : vector<64xf32>
    %125 = vector.multi_reduction <add>, %124, %cst_64 [1] : vector<64x32xf32> to vector<64xf32>
    %126 = vector.shape_cast %125 : vector<64xf32> to vector<64x1xf32>
    %cst_65 = arith.constant 1.000000e-24 : f32
    %127 = vector.broadcast %cst_65 : f32 to vector<64x1xf32>
    %128 = arith.maximumf %126, %127 : vector<64x1xf32>
    %129 = math.rsqrt %128 : vector<64x1xf32>
    %130 = vector.broadcast %129 : vector<64x1xf32> to vector<64x32xf32>
    %131 = arith.mulf %111, %130 : vector<64x32xf32>
    %132 = vector.broadcast %10 : vector<1x32xf32> to vector<64x32xf32>
    %133 = arith.mulf %131, %132 : vector<64x32xf32>
    %134 = arith.truncf %133 : vector<64x32xf32> to vector<64x32xbf16>
    %135 = arith.truncf %114 : vector<64x32xf32> to vector<64x32xbf16>
    %cst_66 = arith.constant dense<0.000000e+00> : vector<64x64xf32>
    %136 = tpu.matmul %123, %134, %cst_66 {dimension_numbers = #tpu.dot_dimension_numbers<[1], [1], [0], [0], [0, 0, 1, 0], [], []>} : vector<64x32xbf16>, vector<64x32xbf16>, vector<64x64xf32> -> vector<64x64xf32>
    %cst_67 = arith.constant dense<0xFF800000> : vector<64xf32>
    %137 = vector.multi_reduction <maximumf>, %136, %cst_67 [1] : vector<64x64xf32> to vector<64xf32>
    %138 = vector.shape_cast %137 : vector<64xf32> to vector<64x1xf32>
    %139 = vector.broadcast %138 : vector<64x1xf32> to vector<64x64xf32>
    %140 = arith.subf %136, %139 : vector<64x64xf32>
    %141 = math.exp %140 : vector<64x64xf32>
    %cst_68 = arith.constant dense<0.000000e+00> : vector<64xf32>
    %142 = vector.multi_reduction <add>, %141, %cst_68 [1] : vector<64x64xf32> to vector<64xf32>
    %143 = vector.shape_cast %142 : vector<64xf32> to vector<64x1xf32>
    %144 = tpu.reciprocal %143 {approx = true} : vector<64x1xf32> -> vector<64x1xf32>
    %145 = vector.broadcast %144 : vector<64x1xf32> to vector<64x64xf32>
    %146 = arith.mulf %141, %145 : vector<64x64xf32>
    %147 = arith.truncf %146 : vector<64x64xf32> to vector<64x64xbf16>
    %cst_69 = arith.constant dense<0.000000e+00> : vector<64x32xf32>
    %148 = tpu.matmul %147, %135, %cst_69 {dimension_numbers = #tpu.dot_dimension_numbers<[1], [0], [0], [1], [0, 0, 1, 1], [], []>} : vector<64x64xbf16>, vector<64x32xbf16>, vector<64x32xf32> -> vector<64x32xf32>
    %149 = arith.truncf %148 : vector<64x32xf32> to vector<64x32xbf16>
    %c2_70 = arith.constant 2 : index
    %c0_71 = arith.constant 0 : index
    %c0_72 = arith.constant 0 : index
    %150 = vector.load %arg6[%c2_70, %c0_71, %c0_72] : memref<4x32x32xbf16, #tpu.memory_space<vmem>>, vector<1x32x32xbf16>
    %151 = vector.shape_cast %150 : vector<1x32x32xbf16> to vector<32x32xbf16>
    %cst_73 = arith.constant dense<0.000000e+00> : vector<64x32xf32>
    %152 = tpu.matmul %149, %151, %cst_73 {dimension_numbers = #tpu.dot_dimension_numbers<[1], [0], [0], [1], [0, 0, 1, 1], [], []>} : vector<64x32xbf16>, vector<32x32xbf16>, vector<64x32xf32> -> vector<64x32xf32>
    %153 = arith.addf %105, %152 : vector<64x32xf32>
    %c3 = arith.constant 3 : index
    %c0_74 = arith.constant 0 : index
    %c0_75 = arith.constant 0 : index
    %154 = vector.load %arg2[%c3, %c0_74, %c0_75] : memref<4x32x32xbf16, #tpu.memory_space<vmem>>, vector<1x32x32xbf16>
    %155 = vector.shape_cast %154 : vector<1x32x32xbf16> to vector<32x32xbf16>
    %cst_76 = arith.constant dense<0.000000e+00> : vector<64x32xf32>
    %156 = tpu.matmul %9, %155, %cst_76 {dimension_numbers = #tpu.dot_dimension_numbers<[1], [0], [0], [1], [0, 0, 1, 1], [], []>} : vector<64x32xbf16>, vector<32x32xbf16>, vector<64x32xf32> -> vector<64x32xf32>
    %c3_77 = arith.constant 3 : index
    %c0_78 = arith.constant 0 : index
    %c0_79 = arith.constant 0 : index
    %157 = vector.load %arg3[%c3_77, %c0_78, %c0_79] : memref<4x32x32xbf16, #tpu.memory_space<vmem>>, vector<1x32x32xbf16>
    %158 = vector.shape_cast %157 : vector<1x32x32xbf16> to vector<32x32xbf16>
    %cst_80 = arith.constant dense<0.000000e+00> : vector<64x32xf32>
    %159 = tpu.matmul %9, %158, %cst_80 {dimension_numbers = #tpu.dot_dimension_numbers<[1], [0], [0], [1], [0, 0, 1, 1], [], []>} : vector<64x32xbf16>, vector<32x32xbf16>, vector<64x32xf32> -> vector<64x32xf32>
    %c3_81 = arith.constant 3 : index
    %c0_82 = arith.constant 0 : index
    %c0_83 = arith.constant 0 : index
    %160 = vector.load %arg4[%c3_81, %c0_82, %c0_83] : memref<4x32x32xbf16, #tpu.memory_space<vmem>>, vector<1x32x32xbf16>
    %161 = vector.shape_cast %160 : vector<1x32x32xbf16> to vector<32x32xbf16>
    %cst_84 = arith.constant dense<0.000000e+00> : vector<64x32xf32>
    %162 = tpu.matmul %9, %161, %cst_84 {dimension_numbers = #tpu.dot_dimension_numbers<[1], [0], [0], [1], [0, 0, 1, 1], [], []>} : vector<64x32xbf16>, vector<32x32xbf16>, vector<64x32xf32> -> vector<64x32xf32>
    %163 = arith.mulf %156, %156 : vector<64x32xf32>
    %cst_85 = arith.constant dense<0.000000e+00> : vector<64xf32>
    %164 = vector.multi_reduction <add>, %163, %cst_85 [1] : vector<64x32xf32> to vector<64xf32>
    %165 = vector.shape_cast %164 : vector<64xf32> to vector<64x1xf32>
    %cst_86 = arith.constant 1.000000e-24 : f32
    %166 = vector.broadcast %cst_86 : f32 to vector<64x1xf32>
    %167 = arith.maximumf %165, %166 : vector<64x1xf32>
    %168 = math.rsqrt %167 : vector<64x1xf32>
    %169 = vector.broadcast %168 : vector<64x1xf32> to vector<64x32xf32>
    %170 = arith.mulf %156, %169 : vector<64x32xf32>
    %171 = arith.truncf %170 : vector<64x32xf32> to vector<64x32xbf16>
    %172 = arith.mulf %159, %159 : vector<64x32xf32>
    %cst_87 = arith.constant dense<0.000000e+00> : vector<64xf32>
    %173 = vector.multi_reduction <add>, %172, %cst_87 [1] : vector<64x32xf32> to vector<64xf32>
    %174 = vector.shape_cast %173 : vector<64xf32> to vector<64x1xf32>
    %cst_88 = arith.constant 1.000000e-24 : f32
    %175 = vector.broadcast %cst_88 : f32 to vector<64x1xf32>
    %176 = arith.maximumf %174, %175 : vector<64x1xf32>
    %177 = math.rsqrt %176 : vector<64x1xf32>
    %178 = vector.broadcast %177 : vector<64x1xf32> to vector<64x32xf32>
    %179 = arith.mulf %159, %178 : vector<64x32xf32>
    %180 = vector.broadcast %10 : vector<1x32xf32> to vector<64x32xf32>
    %181 = arith.mulf %179, %180 : vector<64x32xf32>
    %182 = arith.truncf %181 : vector<64x32xf32> to vector<64x32xbf16>
    %183 = arith.truncf %162 : vector<64x32xf32> to vector<64x32xbf16>
    %cst_89 = arith.constant dense<0.000000e+00> : vector<64x64xf32>
    %184 = tpu.matmul %171, %182, %cst_89 {dimension_numbers = #tpu.dot_dimension_numbers<[1], [1], [0], [0], [0, 0, 1, 0], [], []>} : vector<64x32xbf16>, vector<64x32xbf16>, vector<64x64xf32> -> vector<64x64xf32>
    %cst_90 = arith.constant dense<0xFF800000> : vector<64xf32>
    %185 = vector.multi_reduction <maximumf>, %184, %cst_90 [1] : vector<64x64xf32> to vector<64xf32>
    %186 = vector.shape_cast %185 : vector<64xf32> to vector<64x1xf32>
    %187 = vector.broadcast %186 : vector<64x1xf32> to vector<64x64xf32>
    %188 = arith.subf %184, %187 : vector<64x64xf32>
    %189 = math.exp %188 : vector<64x64xf32>
    %cst_91 = arith.constant dense<0.000000e+00> : vector<64xf32>
    %190 = vector.multi_reduction <add>, %189, %cst_91 [1] : vector<64x64xf32> to vector<64xf32>
    %191 = vector.shape_cast %190 : vector<64xf32> to vector<64x1xf32>
    %192 = tpu.reciprocal %191 {approx = true} : vector<64x1xf32> -> vector<64x1xf32>
    %193 = vector.broadcast %192 : vector<64x1xf32> to vector<64x64xf32>
    %194 = arith.mulf %189, %193 : vector<64x64xf32>
    %195 = arith.truncf %194 : vector<64x64xf32> to vector<64x64xbf16>
    %cst_92 = arith.constant dense<0.000000e+00> : vector<64x32xf32>
    %196 = tpu.matmul %195, %183, %cst_92 {dimension_numbers = #tpu.dot_dimension_numbers<[1], [0], [0], [1], [0, 0, 1, 1], [], []>} : vector<64x64xbf16>, vector<64x32xbf16>, vector<64x32xf32> -> vector<64x32xf32>
    %197 = arith.truncf %196 : vector<64x32xf32> to vector<64x32xbf16>
    %c3_93 = arith.constant 3 : index
    %c0_94 = arith.constant 0 : index
    %c0_95 = arith.constant 0 : index
    %198 = vector.load %arg6[%c3_93, %c0_94, %c0_95] : memref<4x32x32xbf16, #tpu.memory_space<vmem>>, vector<1x32x32xbf16>
    %199 = vector.shape_cast %198 : vector<1x32x32xbf16> to vector<32x32xbf16>
    %cst_96 = arith.constant dense<0.000000e+00> : vector<64x32xf32>
    %200 = tpu.matmul %197, %199, %cst_96 {dimension_numbers = #tpu.dot_dimension_numbers<[1], [0], [0], [1], [0, 0, 1, 1], [], []>} : vector<64x32xbf16>, vector<32x32xbf16>, vector<64x32xf32> -> vector<64x32xf32>
    %201 = arith.addf %153, %200 : vector<64x32xf32>
    %c0_97 = arith.constant 0 : index
    %c0_98 = arith.constant 0 : index
    %202 = vector.load %arg7[%c0_97, %c0_98] : memref<64x32xf32, #tpu.memory_space<vmem>>, vector<64x32xf32>
    tpu.vector_store %arg7[%c0_97, %c0_98], %201 {strides = array<i32>} : memref<64x32xf32, #tpu.memory_space<vmem>>, vector<64x32xf32>,
    return
  }
  func.func @transform_0(%arg0: i32) -> (i32, i32) {
    %c0_i32 = arith.constant 0 : i32
    %c0_i32_0 = arith.constant 0 : i32
    return %arg0, %c0_i32 : i32, i32
  }
  func.func @transform_1(%arg0: i32) -> (i32, i32, i32) {
    %c0_i32 = arith.constant 0 : i32
    %c0_i32_0 = arith.constant 0 : i32
    %c0_i32_1 = arith.constant 0 : i32
    %c0_i32_2 = arith.constant 0 : i32
    return %c0_i32, %c0_i32_0, %c0_i32_1 : i32, i32, i32
  }
  func.func @transform_2(%arg0: i32) -> (i32, i32, i32) {
    %c0_i32 = arith.constant 0 : i32
    %c0_i32_0 = arith.constant 0 : i32
    %c0_i32_1 = arith.constant 0 : i32
    %c0_i32_2 = arith.constant 0 : i32
    return %c0_i32, %c0_i32_0, %c0_i32_1 : i32, i32, i32
  }
  func.func @transform_3(%arg0: i32) -> (i32, i32, i32) {
    %c0_i32 = arith.constant 0 : i32
    %c0_i32_0 = arith.constant 0 : i32
    %c0_i32_1 = arith.constant 0 : i32
    %c0_i32_2 = arith.constant 0 : i32
    return %c0_i32, %c0_i32_0, %c0_i32_1 : i32, i32, i32
  }
  func.func @transform_4(%arg0: i32) -> (i32, i32) {
    %c0_i32 = arith.constant 0 : i32
    %c0_i32_0 = arith.constant 0 : i32
    %c0_i32_1 = arith.constant 0 : i32
    return %c0_i32, %c0_i32_0 : i32, i32
  }
  func.func @transform_5(%arg0: i32) -> (i32, i32, i32) {
    %c0_i32 = arith.constant 0 : i32
    %c0_i32_0 = arith.constant 0 : i32
    %c0_i32_1 = arith.constant 0 : i32
    %c0_i32_2 = arith.constant 0 : i32
    return %c0_i32, %c0_i32_0, %c0_i32_1 : i32, i32, i32
  }
  func.func @transform_6(%arg0: i32) -> (i32, i32) {
    %c0_i32 = arith.constant 0 : i32
    %c0_i32_0 = arith.constant 0 : i32
    return %arg0, %c0_i32 : i32, i32
  }
}

</mosaic_0001>

<llo_original>
// kernel: tpu_custom_call.1
$region0: #{tpu_custom_call.1}
  #allocation0 [shape = 'u32[]', space=smem, size = 0x4, offset = 0x4, fixed_abs, tag = 'smem constant byte address 0x4 - core index']
  #allocation1 [shape = 'u32[144,128]{1,0:T(1,128)}', space=vmem, size = 0x12000, scoped, tag = 'internal scratch']
  %s0 = inlined_call_operand.vmem [shape: f32[128,32], index: 0, kind: input, shape index: {}]
  %s1 = inlined_call_operand.vmem [shape: bf16[4,32,32], index: 1, kind: input, shape index: {}]
  %s2 = inlined_call_operand.vmem [shape: bf16[4,32,32], index: 2, kind: input, shape index: {}]
  %s3 = inlined_call_operand.hbm [shape: bf16[4,32,32], index: 3, kind: input, shape index: {}]
  %s4 = inlined_call_operand.vmem [shape: f32[1,32], index: 4, kind: input, shape index: {}]
  %s5 = inlined_call_operand.hbm [shape: bf16[4,32,32], index: 5, kind: input, shape index: {}]
  %s6 = inlined_call_operand.vmem [shape: f32[128,32], index: 6, kind: output, shape index: {}]
  %s7 = sld [smem:[#allocation0]]
  $region65: #{tpu_custom_call.1} parent=0
    _
  %s9 = ssub.s32 1, %s7
  %s10 = scalar_select 0, %s9, %s7
  $region1: #{tpu_custom_call.1} parent=0
    #allocation2 [shape = 'u8[32768]{0}', space=vmem, size = 0x8000, scoped, tag = 'input window, operand 3, single buffered']
    #allocation3 [shape = 's32[2]{0}', space=sflag, size = 0x8, scoped, tag = 'scoped memory for tpu_custom_call.1']
    #allocation4 [shape = 'u8[32768]{0}', space=vmem, size = 0x8000, scoped, tag = 'input window, operand 5, single buffered']
    #allocation5 [shape = 's32[1]{0}', space=sflag, size = 0x4, scoped, tag = 'scoped memory for tpu_custom_call.1']
    %11 = vsyncpa [#allocation3], 0
    %12 = vsyncpa [#allocation5], 0
    loop: start=0, step=1, limit=4
    $region2: #{tpu_custom_call.1} parent=1 // loop_pre_header
      _
    $region3: #{tpu_custom_call.1} parent=1 // loop_header
      %s14 = sphi 0, %s18
      %p15 = scmp.ge.s32.totalorder %s14, 4
      %s24 = sphi 0, %s26
      %s27 = sphi 0, %s24
      %s28 = sphi 0, %s27
      %s44 = sphi 0, %s28
      %s48 = sphi 0, %s48
      %s50 = sphi 0, %s48
      %s51 = sphi 0, %s50
      %s65 = sphi 0, %s51
      %s69 = sphi 0, %s69
      %s71 = sphi 0, %s69
      %s72 = sphi 0, %s71
      %s86 = sphi 0, %s72
      %s90 = sphi 0, %s90
      %s92 = sphi 0, %s90
      %s93 = sphi 0, %s92
      %s107 = sphi 0, %s93
      %s111 = sphi 0, %s111
      %s113 = sphi 0, %s111
      %s114 = sphi 0, %s113
      %s128 = sphi 0, %s114
      %s132 = sphi 0, %s132
      %s134 = sphi 0, %s132
      %s135 = sphi 0, %s134
      %s149 = sphi 0, %s135
      %s155 = sphi 0, %s157
      %s158 = sphi 0, %s155
      %s159 = sphi 0, %s158
      %s175 = sphi 0, %s159
    $region4: #{tpu_custom_call.1} parent=1 // loop_header_branch
      %17 = sbr.rel (%p15) target = $region8
    $region5: #{tpu_custom_call.1} parent=1 // loop_body
      %s19 = ssub.s32 %s14, 1
      %s20 = ssub.s32 %s14, 2
      %s21 = sadd.s32 %s14, 1
      %s22 = ssub.s32 %s14, %s21
      %p23 = scmp.eq.s32.totalorder %s22, 0
      %s25 = sadd.s32 %s24, 1
      %s26 = scalar_select %p23, %s24, %s25
      %p29 = pneg %p23
      %p30 = scmp.eq.s32.totalorder %s14, 1
      %p31 = por %p29, %p30
      %p32 = scmp.ne.s32.totalorder %s24, %s27
      %p33 = scmp.eq.s32.totalorder %s14, 0
      %p34 = por %p32, %p33
      %p35 = scmp.ne.s32.totalorder %s24, %s27
      %p36 = scmp.eq.s32.totalorder %s19, 1
      %p37 = por %p35, %p36
      %p38 = scmp.ne.s32.totalorder %s27, %s28
      %p39 = scmp.eq.s32.totalorder %s19, 0
      %p40 = por %p38, %p39
      %p41 = scmp.ne.s32.totalorder %s27, %s28
      %p42 = scmp.eq.s32.totalorder %s20, 1
      %p43 = por %p41, %p42
      %p45 = scmp.ne.s32.totalorder %s28, %s44
      %p46 = scmp.eq.s32.totalorder %s20, 0
      %p47 = por %p45, %p46
      %s49 = sadd.s32 %s48, 1
      %p52 = scmp.eq.s32.totalorder %s14, 1
      %p53 = scmp.ne.s32.totalorder %s48, %s50
      %p54 = scmp.eq.s32.totalorder %s14, 0
      %p55 = por %p53, %p54
      %p56 = scmp.ne.s32.totalorder %s48, %s50
      %p57 = scmp.eq.s32.totalorder %s19, 1
      %p58 = por %p56, %p57
      %p59 = scmp.ne.s32.totalorder %s50, %s51
      %p60 = scmp.eq.s32.totalorder %s19, 0
      %p61 = por %p59, %p60
      %p62 = scmp.ne.s32.totalorder %s50, %s51
      %p63 = scmp.eq.s32.totalorder %s20, 1
      %p64 = por %p62, %p63
      %p66 = scmp.ne.s32.totalorder %s51, %s65
      %p67 = scmp.eq.s32.totalorder %s20, 0
      %p68 = por %p66, %p67
      %s70 = sadd.s32 %s69, 1
      %p73 = scmp.eq.s32.totalorder %s14, 1
      %p74 = scmp.ne.s32.totalorder %s69, %s71
      %p75 = scmp.eq.s32.totalorder %s14, 0
      %p76 = por %p74, %p75
      %p77 = scmp.ne.s32.totalorder %s69, %s71
      %p78 = scmp.eq.s32.totalorder %s19, 1
      %p79 = por %p77, %p78
      %p80 = scmp.ne.s32.totalorder %s71, %s72
      %p81 = scmp.eq.s32.totalorder %s19, 0
      %p82 = por %p80, %p81
      %p83 = scmp.ne.s32.totalorder %s71, %s72
      %p84 = scmp.eq.s32.totalorder %s20, 1
      %p85 = por %p83, %p84
      %p87 = scmp.ne.s32.totalorder %s72, %s86
      %p88 = scmp.eq.s32.totalorder %s20, 0
      %p89 = por %p87, %p88
      %s91 = sadd.s32 %s90, 1
      %p94 = scmp.eq.s32.totalorder %s14, 1
      %p95 = scmp.ne.s32.totalorder %s90, %s92
      %p96 = scmp.eq.s32.totalorder %s14, 0
      %p97 = por %p95, %p96
      %p98 = scmp.ne.s32.totalorder %s90, %s92
      %p99 = scmp.eq.s32.totalorder %s19, 1
      %p100 = por %p98, %p99
      %p101 = scmp.ne.s32.totalorder %s92, %s93
      %p102 = scmp.eq.s32.totalorder %s19, 0
      %p103 = por %p101, %p102
      %p104 = scmp.ne.s32.totalorder %s92, %s93
      %p105 = scmp.eq.s32.totalorder %s20, 1
      %p106 = por %p104, %p105
      %p108 = scmp.ne.s32.totalorder %s93, %s107
      %p109 = scmp.eq.s32.totalorder %s20, 0
      %p110 = por %p108, %p109
      %s112 = sadd.s32 %s111, 1
      %p115 = scmp.eq.s32.totalorder %s14, 1
      %p116 = scmp.ne.s32.totalorder %s111, %s113
      %p117 = scmp.eq.s32.totalorder %s14, 0
      %p118 = por %p116, %p117
      %p119 = scmp.ne.s32.totalorder %s111, %s113
      %p120 = scmp.eq.s32.totalorder %s19, 1
      %p121 = por %p119, %p120
      %p122 = scmp.ne.s32.totalorder %s113, %s114
      %p123 = scmp.eq.s32.totalorder %s19, 0
      %p124 = por %p122, %p123
      %p125 = scmp.ne.s32.totalorder %s113, %s114
      %p126 = scmp.eq.s32.totalorder %s20, 1
      %p127 = por %p125, %p126
      %p129 = scmp.ne.s32.totalorder %s114, %s128
      %p130 = scmp.eq.s32.totalorder %s20, 0
      %p131 = por %p129, %p130
      %s133 = sadd.s32 %s132, 1
      %p136 = scmp.eq.s32.totalorder %s14, 1
      %p137 = scmp.ne.s32.totalorder %s132, %s134
      %p138 = scmp.eq.s32.totalorder %s14, 0
      %p139 = por %p137, %p138
      %p140 = scmp.ne.s32.totalorder %s132, %s134
      %p141 = scmp.eq.s32.totalorder %s19, 1
      %p142 = por %p140, %p141
      %p143 = scmp.ne.s32.totalorder %s134, %s135
      %p144 = scmp.eq.s32.totalorder %s19, 0
      %p145 = por %p143, %p144
      %p146 = scmp.ne.s32.totalorder %s134, %s135
      %p147 = scmp.eq.s32.totalorder %s20, 1
      %p148 = por %p146, %p147
      %p150 = scmp.ne.s32.totalorder %s135, %s149
      %p151 = scmp.eq.s32.totalorder %s20, 0
      %p152 = por %p150, %p151
      %s153 = ssub.s32 %s14, %s21
      %p154 = scmp.eq.s32.totalorder %s153, 0
      %s156 = sadd.s32 %s155, 1
      %s157 = scalar_select %p154, %s155, %s156
      %p160 = pneg %p154
      %p161 = scmp.eq.s32.totalorder %s14, 1
      %p162 = por %p160, %p161
      %p163 = scmp.ne.s32.totalorder %s155, %s158
      %p164 = scmp.eq.s32.totalorder %s14, 0
      %p165 = por %p163, %p164
      %p166 = scmp.ne.s32.totalorder %s155, %s158
      %p167 = scmp.eq.s32.totalorder %s19, 1
      %p168 = por %p166, %p167
      %p169 = scmp.ne.s32.totalorder %s158, %s159
      %p170 = scmp.eq.s32.totalorder %s19, 0
      %p171 = por %p169, %p170
      %p172 = scmp.ne.s32.totalorder %s158, %s159
      %p173 = scmp.eq.s32.totalorder %s20, 1
      %p174 = por %p172, %p173
      %p176 = scmp.ne.s32.totalorder %s159, %s175
      %p177 = scmp.eq.s32.totalorder %s20, 0
      %p178 = por %p176, %p177
      %p179 = scmp.le.s32.totalorder 1, %s14
      %p180 = scmp.lt.s32.totalorder %s14, 3
      %p181 = pnand %p179, %p180
      %p182 = pneg %p181
      // Predicated region
      $region9: #{tpu_custom_call.1} parent=5 // pred_check
        _
      $region10: #{tpu_custom_call.1} parent=5 // pred_check_branch
        %184 = sbr.rel (%p181) target = $region12
      $region11: #{tpu_custom_call.1} parent=5 // pred_region
        %s185 = ssub.s32 %s14, 1
        // Predicated region
        $region13: #{tpu_custom_call.1} parent=11 // pred_check
          %p186 = pneg %p61
        $region14: #{tpu_custom_call.1} parent=11 // pred_check_branch
          %188 = sbr.rel (%p186) target = $region16
        $region15: #{tpu_custom_call.1} parent=11 // pred_region
          _
        $region16: #{tpu_custom_call.1} parent=11 // pred_fallthru
          _
        // Predicated region
        $region17: #{tpu_custom_call.1} parent=11 // pred_check
          %p189 = pneg %p82
        $region18: #{tpu_custom_call.1} parent=11 // pred_check_branch
          %191 = sbr.rel (%p189) target = $region20
        $region19: #{tpu_custom_call.1} parent=11 // pred_region
          _
        $region20: #{tpu_custom_call.1} parent=11 // pred_fallthru
          _
        // Predicated region
        $region21: #{tpu_custom_call.1} parent=11 // pred_check
          %p192 = pneg %p103
        $region22: #{tpu_custom_call.1} parent=11 // pred_check_branch
          %194 = sbr.rel (%p192) target = $region24
        $region23: #{tpu_custom_call.1} parent=11 // pred_region
          %s196 = ssub.s32 1024, 1024
          %197 = vsyncadd [#allocation3], %s196
          %s198 = sshll.u32 [#allocation2], 4
          %s199 = int_to_ptr.vmem [resolvable:$true] %s198
          %204 = dma.hbm_to_vmem [thread:$0]  %s3, 1024, %s199, [#allocation3], 64, 64, 4
        $region24: #{tpu_custom_call.1} parent=11 // pred_fallthru
          _
        // Predicated region
        $region25: #{tpu_custom_call.1} parent=11 // pred_check
          %p205 = pneg %p124
        $region26: #{tpu_custom_call.1} parent=11 // pred_check_branch
          %207 = sbr.rel (%p205) target = $region28
        $region27: #{tpu_custom_call.1} parent=11 // pred_region
          _
        $region28: #{tpu_custom_call.1} parent=11 // pred_fallthru
          _
        // Predicated region
        $region29: #{tpu_custom_call.1} parent=11 // pred_check
          %p208 = pneg %p145
        $region30: #{tpu_custom_call.1} parent=11 // pred_check_branch
          %210 = sbr.rel (%p208) target = $region32
        $region31: #{tpu_custom_call.1} parent=11 // pred_region
          %s212 = ssub.s32 1024, 1024
          %213 = vsyncadd [#allocation5], %s212
          %s214 = sshll.u32 [#allocation4], 4
          %s215 = int_to_ptr.vmem [resolvable:$true] %s214
          %220 = dma.hbm_to_vmem [thread:$0]  %s5, 1024, %s215, [#allocation5], 64, 64, 4
        $region32: #{tpu_custom_call.1} parent=11 // pred_fallthru
          _
      $region12: #{tpu_custom_call.1} parent=5 // pred_fallthru
        _
      %p221 = scmp.lt.s32.totalorder %s14, 2
      // Predicated region
      $region33: #{tpu_custom_call.1} parent=5 // pred_check
        %p222 = pneg %p221
      $region34: #{tpu_custom_call.1} parent=5 // pred_check_branch
        %224 = sbr.rel (%p222) target = $region36
      $region35: #{tpu_custom_call.1} parent=5 // pred_region
        // Predicated region
        $region37: #{tpu_custom_call.1} parent=35 // pred_check
          %p225 = pneg %p34
        $region38: #{tpu_custom_call.1} parent=35 // pred_check_branch
          %227 = sbr.rel (%p225) target = $region40
        $region39: #{tpu_custom_call.1} parent=35 // pred_region
          %s228 = smul.u32 8, %s14
          %p229 = scmp.lt.s32.totalorder %s228, 15
          %s230 = scalar_select %p229, %s228, 15
          %s231 = smul.addr %s230, 8
          %s232 = scalar_lea.vmem %s0, %s231
          %s233 = smul.u32 8, %s14
        $region40: #{tpu_custom_call.1} parent=35 // pred_fallthru
          _
      $region36: #{tpu_custom_call.1} parent=5 // pred_fallthru
        _
      %p234 = scmp.le.s32.totalorder 1, %s14
      %p235 = scmp.lt.s32.totalorder %s14, 3
      %p236 = pnand %p234, %p235
      %p237 = pneg %p236
      // Predicated region
      $region41: #{tpu_custom_call.1} parent=5 // pred_check
        _
      $region42: #{tpu_custom_call.1} parent=5 // pred_check_branch
        %239 = sbr.rel (%p236) target = $region44
      $region43: #{tpu_custom_call.1} parent=5 // pred_region
        %s240 = ssub.s32 %s14, 1
        // Predicated region
        $region45: #{tpu_custom_call.1} parent=43 // pred_check
          %p241 = pneg %p103
        $region46: #{tpu_custom_call.1} parent=43 // pred_check_branch
          %243 = sbr.rel (%p241) target = $region48
        $region47: #{tpu_custom_call.1} parent=43 // pred_region
          %244 = dma.done [#allocation3], 1024
        $region48: #{tpu_custom_call.1} parent=43 // pred_fallthru
          _
        // Predicated region
        $region49: #{tpu_custom_call.1} parent=43 // pred_check
          %p245 = pneg %p145
        $region50: #{tpu_custom_call.1} parent=43 // pred_check_branch
          %247 = sbr.rel (%p245) target = $region52
        $region51: #{tpu_custom_call.1} parent=43 // pred_region
          %248 = dma.done [#allocation5], 1024
        $region52: #{tpu_custom_call.1} parent=43 // pred_fallthru
          _
        %s249 = smul.u32 8, %s19
        %p250 = scmp.lt.s32.totalorder %s249, 15
        %s251 = scalar_select %p250, %s249, 15
        %s252 = smul.addr %s251, 8
        %s253 = scalar_lea.vmem %s0, %s252
        %p254 = pneg %p40
        %p255 = pneg %p37
        %p256 = pneg %p61
        %p257 = pneg %p58
        %p258 = pneg %p82
        %p259 = pneg %p79
        %p260 = pneg %p103
        %p261 = pneg %p100
        %p262 = pneg %p124
        %p263 = pneg %p121
        %p264 = pneg %p145
        %p265 = pneg %p142
        %p266 = pneg %p171
        %p267 = pneg %p168
        %s268 = smul.u32 8, %s19
        %p269 = scmp.lt.s32.totalorder %s268, 15
        %s270 = scalar_select %p269, %s268, 15
        %s271 = smul.addr %s270, 8
        %s272 = scalar_lea.vmem %s6, %s271
        %s273 = smul.u32 8, %s19
        %p274 = scmp.lt.s32.totalorder %s273, 15
        %s275 = scalar_select %p274, %s273, 15
        %s276 = smul.addr %s275, 8
        %s277 = scalar_lea.vmem %s0, %s276
        %s278 = smul.u32 8, %s19
        %s279 = smul.u32 8, %s19
        %p280 = scmp.lt.s32.totalorder %s279, 15
        %s281 = scalar_select %p280, %s279, 15
        %s282 = smul.addr %s281, 8
        %s283 = scalar_lea.vmem %s6, %s282
        %s284 = smul.u32 8, %s19
        %v286 = vld [vmem:[%s277] sm:$0xff]
        %v287 = vld [vmem:[%s277 + $0x8] sm:$0xff]
        %v288 = vld [vmem:[%s277 + $0x10] sm:$0xff]
        %v289 = vld [vmem:[%s277 + $0x18] sm:$0xff]
        %v290 = vld [vmem:[%s277 + $0x20] sm:$0xff]
        %v291 = vld [vmem:[%s277 + $0x28] sm:$0xff]
        %v292 = vld [vmem:[%s277 + $0x30] sm:$0xff]
        %v293 = vld [vmem:[%s277 + $0x38] sm:$0xff]
        %v294 = vmul.f32 %v286, %v286
        %v295 = vmul.f32 %v287, %v287
        %v296 = vmul.f32 %v288, %v288
        %v297 = vmul.f32 %v289, %v289
        %v298 = vmul.f32 %v290, %v290
        %v299 = vmul.f32 %v291, %v291
        %v300 = vmul.f32 %v292, %v292
        %v301 = vmul.f32 %v293, %v293
        %vm302 = vcmask 261120
        %v303 = vsel %vm302, %v294, 0.0
        %304 = vadd.xlane.f32.xlu0 %v303
        %v305 = vpop.xlane.xlu0 %304
        %v306 = vsel %vm302, %v295, 0.0
        %307 = vadd.xlane.f32.xlu0 %v306
        %v308 = vpop.xlane.xlu0 %307
        %v309 = vsel %vm302, %v296, 0.0
        %310 = vadd.xlane.f32.xlu0 %v309
        %v311 = vpop.xlane.xlu0 %310
        %v312 = vsel %vm302, %v297, 0.0
        %313 = vadd.xlane.f32.xlu0 %v312
        %v314 = vpop.xlane.xlu0 %313
        %v315 = vsel %vm302, %v298, 0.0
        %316 = vadd.xlane.f32.xlu0 %v315
        %v317 = vpop.xlane.xlu0 %316
        %v318 = vsel %vm302, %v299, 0.0
        %319 = vadd.xlane.f32.xlu0 %v318
        %v320 = vpop.xlane.xlu0 %319
        %v321 = vsel %vm302, %v300, 0.0
        %322 = vadd.xlane.f32.xlu0 %v321
        %v323 = vpop.xlane.xlu0 %322
        %v324 = vsel %vm302, %v301, 0.0
        %325 = vadd.xlane.f32.xlu0 %v324
        %v326 = vpop.xlane.xlu0 %325
        %v327 = vmax.f32 %v305, 1e-24
        %v328 = vmax.f32 %v308, 1e-24
        %v329 = vmax.f32 %v311, 1e-24
        %v330 = vmax.f32 %v314, 1e-24
        %v331 = vmax.f32 %v317, 1e-24
        %v332 = vmax.f32 %v320, 1e-24
        %v333 = vmax.f32 %v323, 1e-24
        %v334 = vmax.f32 %v326, 1e-24
        %v335 = vrsqrt.pop %v327
        %v336 = vrsqrt.pop %v328
        %v337 = vrsqrt.pop %v329
        %v338 = vrsqrt.pop %v330
        %v339 = vrsqrt.pop %v331
        %v340 = vrsqrt.pop %v332
        %v341 = vrsqrt.pop %v333
        %v342 = vrsqrt.pop %v334
        %v343 = vmul.f32 %v286, %v335
        %v344 = vmul.f32 %v287, %v336
        %v345 = vmul.f32 %v288, %v337
        %v346 = vmul.f32 %v289, %v338
        %v347 = vmul.f32 %v290, %v339
        %v348 = vmul.f32 %v291, %v340
        %v349 = vmul.f32 %v292, %v341
        %v350 = vmul.f32 %v293, %v342
        %v351 = vpack.c.bf16 %v344, %v343
        %v352 = vpack.c.bf16 %v346, %v345
        %v353 = vpack.c.bf16 %v348, %v347
        %v354 = vpack.c.bf16 %v350, %v349
        %v355 = vld [vmem:[%s4] sm:$0x1]
        %v356 = vld [vmem:[%s1] sm:$0xf]
        %v357 = vld [vmem:[%s1 + $0x4] sm:$0xf]
        %v358 = vld [vmem:[%s1 + $0x8] sm:$0xf]
        %v359 = vld [vmem:[%s1 + $0xc] sm:$0xf]
        %v364 = vunpack.c.l.b16 %v356
        %v365 = vunpack.c.l.b16 %v357
        %v366 = vunpack.c.l.b16 %v358
        %v367 = vunpack.c.l.b16 %v359
        %v368 = vpack.c.b16 %v365, %v364
        %v369 = vpack.c.b16 %v367, %v366
        %v373 = vsel %vm302, %v351, 0
        %v376 = vsel %vm302, %v352, 0
        %v379 = vsel %vm302, %v353, 0
        %v382 = vsel %vm302, %v354, 0
        %384 = vmatprep.subr.bf16.mxu0 0
        %385 = vmatpush1.bf16.msra.mxu0 %v368
        %386 = vmatprep.subr.bf16.mxu0 0
        %387 = vmatpush1.bf16.msra.mxu0 %v369
        %388 = vmatprep.subr.bf16.mxu0 0
        %389 = vmatpush1.bf16.msra.mxu0 0
        %390 = vmatprep.subr.bf16.mxu0 0
        %391 = vmatpush1.bf16.msra.mxu0 0
        %392 = vmatprep.subr.bf16.mxu0 0
        %393 = vmatpush1.bf16.msra.mxu0 0
        %394 = vmatprep.subr.bf16.mxu0 0
        %395 = vmatpush1.bf16.msra.mxu0 0
        %396 = vmatprep.subr.bf16.mxu0 0
        %397 = vmatpush1.bf16.msra.mxu0 0
        %398 = vmatprep.subr.bf16.mxu0 0
        %399 = vmatpush1.bf16.msra.mxu0 0
        %400 = vmatprep.subr.bf16.mxu0 0
        %401 = vmatpush1.bf16.msra.mxu0 0
        %402 = vmatprep.subr.bf16.mxu0 0
        %403 = vmatpush1.bf16.msra.mxu0 0
        %404 = vmatprep.subr.bf16.mxu0 0
        %405 = vmatpush1.bf16.msra.mxu0 0
        %406 = vmatprep.subr.bf16.mxu0 0
        %407 = vmatpush1.bf16.msra.mxu0 0
        %408 = vmatprep.subr.bf16.mxu0 0
        %409 = vmatpush1.bf16.msra.mxu0 0
        %410 = vmatprep.subr.bf16.mxu0 0
        %411 = vmatpush1.bf16.msra.mxu0 0
        %412 = vmatprep.subr.bf16.mxu0 0
        %413 = vmatpush1.bf16.msra.mxu0 0
        %414 = vmatprep.subr.bf16.mxu0 0
        %415 = vmatpush1.bf16.msra.mxu0 0
        %416 = vmatprep.mubr.bf16.mxu0 0
        %417 = vmatmul.mubr.bf16.gmra.mrb[0].mxu0 %v373
        %v418 = vpop.f32.mrb[0].mxu0
        %v419 = vadd.f32 0.0, %v418
        %v420 = vpop.f32.mrb[0].mxu0
        %v421 = vpop.f32.mrb[0].mxu0
        %v422 = vadd.f32 0.0, %v421
        %v423 = vpop.f32.mrb[0].mxu0
        %424 = vmatprep.mubr.bf16.mxu0 0
        %425 = vmatmul.mubr.bf16.gmra.mrb[0].mxu0 %v376
        %v426 = vpop.f32.mrb[0].mxu0
        %v427 = vadd.f32 0.0, %v426
        %v428 = vpop.f32.mrb[0].mxu0
        %v429 = vpop.f32.mrb[0].mxu0
        %v430 = vadd.f32 0.0, %v429
        %v431 = vpop.f32.mrb[0].mxu0
        %432 = vmatprep.mubr.bf16.mxu0 0
        %433 = vmatmul.mubr.bf16.gmra.mrb[0].mxu0 %v379
        %v434 = vpop.f32.mrb[0].mxu0
        %v435 = vadd.f32 0.0, %v434
        %v436 = vpop.f32.mrb[0].mxu0
        %v437 = vpop.f32.mrb[0].mxu0
        %v438 = vadd.f32 0.0, %v437
        %v439 = vpop.f32.mrb[0].mxu0
        %440 = vmatprep.mubr.bf16.mxu0 0
        %441 = vmatmul.mubr.bf16.gmra.mrb[0].mxu0 %v382
        %v442 = vpop.f32.mrb[0].mxu0
        %v443 = vadd.f32 0.0, %v442
        %v444 = vpop.f32.mrb[0].mxu0
        %v445 = vpop.f32.mrb[0].mxu0
        %v446 = vadd.f32 0.0, %v445
        %v447 = vpop.f32.mrb[0].mxu0
        %448 = vdwg.mxu0
        %v449 = vld [vmem:[%s2] sm:$0xf]
        %v450 = vld [vmem:[%s2 + $0x4] sm:$0xf]
        %v451 = vld [vmem:[%s2 + $0x8] sm:$0xf]
        %v452 = vld [vmem:[%s2 + $0xc] sm:$0xf]
        %v457 = vunpack.c.l.b16 %v449
        %v458 = vunpack.c.l.b16 %v450
        %v459 = vunpack.c.l.b16 %v451
        %v460 = vunpack.c.l.b16 %v452
        %v461 = vpack.c.b16 %v458, %v457
        %v462 = vpack.c.b16 %v460, %v459
        %465 = vmatprep.subr.bf16.mxu0 0
        %466 = vmatpush1.bf16.msra.mxu0 %v461
        %467 = vmatprep.subr.bf16.mxu0 0
        %468 = vmatpush1.bf16.msra.mxu0 %v462
        %469 = vmatprep.subr.bf16.mxu0 0
        %470 = vmatpush1.bf16.msra.mxu0 0
        %471 = vmatprep.subr.bf16.mxu0 0
        %472 = vmatpush1.bf16.msra.mxu0 0
        %473 = vmatprep.subr.bf16.mxu0 0
        %474 = vmatpush1.bf16.msra.mxu0 0
        %475 = vmatprep.subr.bf16.mxu0 0
        %476 = vmatpush1.bf16.msra.mxu0 0
        %477 = vmatprep.subr.bf16.mxu0 0
        %478 = vmatpush1.bf16.msra.mxu0 0
        %479 = vmatprep.subr.bf16.mxu0 0
        %480 = vmatpush1.bf16.msra.mxu0 0
        %481 = vmatprep.subr.bf16.mxu0 0
        %482 = vmatpush1.bf16.msra.mxu0 0
        %483 = vmatprep.subr.bf16.mxu0 0
        %484 = vmatpush1.bf16.msra.mxu0 0
        %485 = vmatprep.subr.bf16.mxu0 0
        %486 = vmatpush1.bf16.msra.mxu0 0
        %487 = vmatprep.subr.bf16.mxu0 0
        %488 = vmatpush1.bf16.msra.mxu0 0
        %489 = vmatprep.subr.bf16.mxu0 0
        %490 = vmatpush1.bf16.msra.mxu0 0
        %491 = vmatprep.subr.bf16.mxu0 0
        %492 = vmatpush1.bf16.msra.mxu0 0
        %493 = vmatprep.subr.bf16.mxu0 0
        %494 = vmatpush1.bf16.msra.mxu0 0
        %495 = vmatprep.subr.bf16.mxu0 0
        %496 = vmatpush1.bf16.msra.mxu0 0
        %497 = vmatprep.mubr.bf16.mxu0 0
        %498 = vmatmul.mubr.bf16.gmra.mrb[0].mxu0 %v373
        %v499 = vpop.f32.mrb[0].mxu0
        %v500 = vadd.f32 0.0, %v499
        %v501 = vpop.f32.mrb[0].mxu0
        %v502 = vpop.f32.mrb[0].mxu0
        %v503 = vadd.f32 0.0, %v502
        %v504 = vpop.f32.mrb[0].mxu0
        %505 = vmatprep.mubr.bf16.mxu0 0
        %506 = vmatmul.mubr.bf16.gmra.mrb[0].mxu0 %v376
        %v507 = vpop.f32.mrb[0].mxu0
        %v508 = vadd.f32 0.0, %v507
        %v509 = vpop.f32.mrb[0].mxu0
        %v510 = vpop.f32.mrb[0].mxu0
        %v511 = vadd.f32 0.0, %v510
        %v512 = vpop.f32.mrb[0].mxu0
        %513 = vmatprep.mubr.bf16.mxu0 0
        %514 = vmatmul.mubr.bf16.gmra.mrb[0].mxu0 %v379
        %v515 = vpop.f32.mrb[0].mxu0
        %v516 = vadd.f32 0.0, %v515
        %v517 = vpop.f32.mrb[0].mxu0
        %v518 = vpop.f32.mrb[0].mxu0
        %v519 = vadd.f32 0.0, %v518
        %v520 = vpop.f32.mrb[0].mxu0
        %521 = vmatprep.mubr.bf16.mxu0 0
        %522 = vmatmul.mubr.bf16.gmra.mrb[0].mxu0 %v382
        %v523 = vpop.f32.mrb[0].mxu0
        %v524 = vadd.f32 0.0, %v523
        %v525 = vpop.f32.mrb[0].mxu0
        %v526 = vpop.f32.mrb[0].mxu0
        %v527 = vadd.f32 0.0, %v526
        %v528 = vpop.f32.mrb[0].mxu0
        %529 = vdwg.mxu0
        %v530 = vld [vmem:[#allocation2] sm:$0xf]
        %v531 = vld [vmem:[#allocation2 + $0x4] sm:$0xf]
        %v532 = vld [vmem:[#allocation2 + $0x8] sm:$0xf]
        %v533 = vld [vmem:[#allocation2 + $0xc] sm:$0xf]
        %v538 = vunpack.c.l.b16 %v530
        %v539 = vunpack.c.l.b16 %v531
        %v540 = vunpack.c.l.b16 %v532
        %v541 = vunpack.c.l.b16 %v533
        %v542 = vpack.c.b16 %v539, %v538
        %v543 = vpack.c.b16 %v541, %v540
        %546 = vmatprep.subr.bf16.mxu0 0
        %547 = vmatpush1.bf16.msra.mxu0 %v542
        %548 = vmatprep.subr.bf16.mxu0 0
        %549 = vmatpush1.bf16.msra.mxu0 %v543
        %550 = vmatprep.subr.bf16.mxu0 0
        %551 = vmatpush1.bf16.msra.mxu0 0
        %552 = vmatprep.subr.bf16.mxu0 0
        %553 = vmatpush1.bf16.msra.mxu0 0
        %554 = vmatprep.subr.bf16.mxu0 0
        %555 = vmatpush1.bf16.msra.mxu0 0
        %556 = vmatprep.subr.bf16.mxu0 0
        %557 = vmatpush1.bf16.msra.mxu0 0
        %558 = vmatprep.subr.bf16.mxu0 0
        %559 = vmatpush1.bf16.msra.mxu0 0
        %560 = vmatprep.subr.bf16.mxu0 0
        %561 = vmatpush1.bf16.msra.mxu0 0
        %562 = vmatprep.subr.bf16.mxu0 0
        %563 = vmatpush1.bf16.msra.mxu0 0
        %564 = vmatprep.subr.bf16.mxu0 0
        %565 = vmatpush1.bf16.msra.mxu0 0
        %566 = vmatprep.subr.bf16.mxu0 0
        %567 = vmatpush1.bf16.msra.mxu0 0
        %568 = vmatprep.subr.bf16.mxu0 0
        %569 = vmatpush1.bf16.msra.mxu0 0
        %570 = vmatprep.subr.bf16.mxu0 0
        %571 = vmatpush1.bf16.msra.mxu0 0
        %572 = vmatprep.subr.bf16.mxu0 0
        %573 = vmatpush1.bf16.msra.mxu0 0
        %574 = vmatprep.subr.bf16.mxu0 0
        %575 = vmatpush1.bf16.msra.mxu0 0
        %576 = vmatprep.subr.bf16.mxu0 0
        %577 = vmatpush1.bf16.msra.mxu0 0
        %578 = vmatprep.mubr.bf16.mxu0 0
        %579 = vmatmul.mubr.bf16.gmra.mrb[0].mxu0 %v373
        %v580 = vpop.f32.mrb[0].mxu0
        %v581 = vadd.f32 0.0, %v580
        %v582 = vpop.f32.mrb[0].mxu0
        %v583 = vpop.f32.mrb[0].mxu0
        %v584 = vadd.f32 0.0, %v583
        %v585 = vpop.f32.mrb[0].mxu0
        %586 = vmatprep.mubr.bf16.mxu0 0
        %587 = vmatmul.mubr.bf16.gmra.mrb[0].mxu0 %v376
        %v588 = vpop.f32.mrb[0].mxu0
        %v589 = vadd.f32 0.0, %v588
        %v590 = vpop.f32.mrb[0].mxu0
        %v591 = vpop.f32.mrb[0].mxu0
        %v592 = vadd.f32 0.0, %v591
        %v593 = vpop.f32.mrb[0].mxu0
        %594 = vmatprep.mubr.bf16.mxu0 0
        %595 = vmatmul.mubr.bf16.gmra.mrb[0].mxu0 %v379
        %v596 = vpop.f32.mrb[0].mxu0
        %v597 = vadd.f32 0.0, %v596
        %v598 = vpop.f32.mrb[0].mxu0
        %v599 = vpop.f32.mrb[0].mxu0
        %v600 = vadd.f32 0.0, %v599
        %v601 = vpop.f32.mrb[0].mxu0
        %602 = vmatprep.mubr.bf16.mxu0 0
        %603 = vmatmul.mubr.bf16.gmra.mrb[0].mxu0 %v382
        %v604 = vpop.f32.mrb[0].mxu0
        %v605 = vadd.f32 0.0, %v604
        %v606 = vpop.f32.mrb[0].mxu0
        %v607 = vpop.f32.mrb[0].mxu0
        %v608 = vadd.f32 0.0, %v607
        %v609 = vpop.f32.mrb[0].mxu0
        %610 = vdwg.mxu0
        %v611 = vmul.f32 %v419, %v419
        %v612 = vmul.f32 %v422, %v422
        %v613 = vmul.f32 %v427, %v427
        %v614 = vmul.f32 %v430, %v430
        %v615 = vmul.f32 %v435, %v435
        %v616 = vmul.f32 %v438, %v438
        %v617 = vmul.f32 %v443, %v443
        %v618 = vmul.f32 %v446, %v446
        %v619 = vsel %vm302, %v611, 0.0
        %620 = vadd.xlane.f32.xlu0 %v619
        %v621 = vpop.xlane.xlu0 %620
        %v622 = vsel %vm302, %v612, 0.0
        %623 = vadd.xlane.f32.xlu0 %v622
        %v624 = vpop.xlane.xlu0 %623
        %v625 = vsel %vm302, %v613, 0.0
        %626 = vadd.xlane.f32.xlu0 %v625
        %v627 = vpop.xlane.xlu0 %626
        %v628 = vsel %vm302, %v614, 0.0
        %629 = vadd.xlane.f32.xlu0 %v628
        %v630 = vpop.xlane.xlu0 %629
        %v631 = vsel %vm302, %v615, 0.0
        %632 = vadd.xlane.f32.xlu0 %v631
        %v633 = vpop.xlane.xlu0 %632
        %v634 = vsel %vm302, %v616, 0.0
        %635 = vadd.xlane.f32.xlu0 %v634
        %v636 = vpop.xlane.xlu0 %635
        %v637 = vsel %vm302, %v617, 0.0
        %638 = vadd.xlane.f32.xlu0 %v637
        %v639 = vpop.xlane.xlu0 %638
        %v640 = vsel %vm302, %v618, 0.0
        %641 = vadd.xlane.f32.xlu0 %v640
        %v642 = vpop.xlane.xlu0 %641
        %v643 = vmax.f32 %v621, 1e-24
        %v644 = vmax.f32 %v624, 1e-24
        %v645 = vmax.f32 %v627, 1e-24
        %v646 = vmax.f32 %v630, 1e-24
        %v647 = vmax.f32 %v633, 1e-24
        %v648 = vmax.f32 %v636, 1e-24
        %v649 = vmax.f32 %v639, 1e-24
        %v650 = vmax.f32 %v642, 1e-24
        %v651 = vrsqrt.pop %v643
        %v652 = vrsqrt.pop %v644
        %v653 = vrsqrt.pop %v645
        %v654 = vrsqrt.pop %v646
        %v655 = vrsqrt.pop %v647
        %v656 = vrsqrt.pop %v648
        %v657 = vrsqrt.pop %v649
        %v658 = vrsqrt.pop %v650
        %v659 = vmul.f32 %v419, %v651
        %v660 = vmul.f32 %v422, %v652
        %v661 = vmul.f32 %v427, %v653
        %v662 = vmul.f32 %v430, %v654
        %v663 = vmul.f32 %v435, %v655
        %v664 = vmul.f32 %v438, %v656
        %v665 = vmul.f32 %v443, %v657
        %v666 = vmul.f32 %v446, %v658
        %v667 = vpack.c.bf16 %v660, %v659
        %v668 = vpack.c.bf16 %v662, %v661
        %v669 = vpack.c.bf16 %v664, %v663
        %v670 = vpack.c.bf16 %v666, %v665
        %v671 = vmul.f32 %v500, %v500
        %v672 = vmul.f32 %v503, %v503
        %v673 = vmul.f32 %v508, %v508
        %v674 = vmul.f32 %v511, %v511
        %v675 = vmul.f32 %v516, %v516
        %v676 = vmul.f32 %v519, %v519
        %v677 = vmul.f32 %v524, %v524
        %v678 = vmul.f32 %v527, %v527
        %v679 = vsel %vm302, %v671, 0.0
        %680 = vadd.xlane.f32.xlu0 %v679
        %v681 = vpop.xlane.xlu0 %680
        %v682 = vsel %vm302, %v672, 0.0
        %683 = vadd.xlane.f32.xlu0 %v682
        %v684 = vpop.xlane.xlu0 %683
        %v685 = vsel %vm302, %v673, 0.0
        %686 = vadd.xlane.f32.xlu0 %v685
        %v687 = vpop.xlane.xlu0 %686
        %v688 = vsel %vm302, %v674, 0.0
        %689 = vadd.xlane.f32.xlu0 %v688
        %v690 = vpop.xlane.xlu0 %689
        %v691 = vsel %vm302, %v675, 0.0
        %692 = vadd.xlane.f32.xlu0 %v691
        %v693 = vpop.xlane.xlu0 %692
        %v694 = vsel %vm302, %v676, 0.0
        %695 = vadd.xlane.f32.xlu0 %v694
        %v696 = vpop.xlane.xlu0 %695
        %v697 = vsel %vm302, %v677, 0.0
        %698 = vadd.xlane.f32.xlu0 %v697
        %v699 = vpop.xlane.xlu0 %698
        %v700 = vsel %vm302, %v678, 0.0
        %701 = vadd.xlane.f32.xlu0 %v700
        %v702 = vpop.xlane.xlu0 %701
        %v703 = vmax.f32 %v681, 1e-24
        %v704 = vmax.f32 %v684, 1e-24
        %v705 = vmax.f32 %v687, 1e-24
        %v706 = vmax.f32 %v690, 1e-24
        %v707 = vmax.f32 %v693, 1e-24
        %v708 = vmax.f32 %v696, 1e-24
        %v709 = vmax.f32 %v699, 1e-24
        %v710 = vmax.f32 %v702, 1e-24
        %v711 = vrsqrt.pop %v703
        %v712 = vrsqrt.pop %v704
        %v713 = vrsqrt.pop %v705
        %v714 = vrsqrt.pop %v706
        %v715 = vrsqrt.pop %v707
        %v716 = vrsqrt.pop %v708
        %v717 = vrsqrt.pop %v709
        %v718 = vrsqrt.pop %v710
        %v719 = vmul.f32 %v500, %v711
        %v720 = vmul.f32 %v503, %v712
        %v721 = vmul.f32 %v508, %v713
        %v722 = vmul.f32 %v511, %v714
        %v723 = vmul.f32 %v516, %v715
        %v724 = vmul.f32 %v519, %v716
        %v725 = vmul.f32 %v524, %v717
        %v726 = vmul.f32 %v527, %v718
        %v728 = vlaneseq
        %v729 = vshrl.u32 %v728, 7
        %v730 = vsub.s32 0, %v729
        %v731 = vrot.slane %v355, %v730
        %v733 = vmul.f32 %v719, %v731
        %v734 = vmul.f32 %v720, %v731
        %v735 = vmul.f32 %v721, %v731
        %v736 = vmul.f32 %v722, %v731
        %v737 = vmul.f32 %v723, %v731
        %v738 = vmul.f32 %v724, %v731
        %v739 = vmul.f32 %v725, %v731
        %v740 = vmul.f32 %v726, %v731
        %v741 = vpack.c.bf16 %v734, %v733
        %v742 = vpack.c.bf16 %v736, %v735
        %v743 = vpack.c.bf16 %v738, %v737
        %v744 = vpack.c.bf16 %v740, %v739
        %v745 = vpack.c.bf16 %v584, %v581
        %v746 = vpack.c.bf16 %v592, %v589
        %v747 = vpack.c.bf16 %v600, %v597
        %v748 = vpack.c.bf16 %v608, %v605
        %v750 = vsel %vm302, %v667, 0
        %v753 = vsel %vm302, %v668, 0
        %v756 = vsel %vm302, %v669, 0
        %v759 = vsel %vm302, %v670, 0
        %v762 = vsel %vm302, %v741, 0
        %v765 = vsel %vm302, %v742, 0
        %v768 = vsel %vm302, %v743, 0
        %v771 = vsel %vm302, %v744, 0
        %773 = vmatprep.subr.bf16.mxu0 0
        %774 = vmatpush1.bf16.xpose.msra.mxu0 %v762
        %775 = vmatprep.subr.bf16.mxu0 0
        %776 = vmatpush1.bf16.xpose.msra.mxu0 %v765
        %777 = vmatprep.subr.bf16.mxu0 0
        %778 = vmatpush1.bf16.xpose.msra.mxu0 %v768
        %779 = vmatprep.subr.bf16.mxu0 0
        %780 = vmatpush1.bf16.xpose.msra.mxu0 %v771
        %781 = vmatprep.subr.bf16.mxu0 0
        %782 = vmatpush1.bf16.xpose.msra.mxu0 0
        %783 = vmatprep.subr.bf16.mxu0 0
        %784 = vmatpush1.bf16.xpose.msra.mxu0 0
        %785 = vmatprep.subr.bf16.mxu0 0
        %786 = vmatpush1.bf16.xpose.msra.mxu0 0
        %787 = vmatprep.subr.bf16.mxu0 0
        %788 = vmatpush1.bf16.xpose.msra.mxu0 0
        %789 = vmatprep.subr.bf16.mxu0 0
        %790 = vmatpush1.bf16.xpose.msra.mxu0 0
        %791 = vmatprep.subr.bf16.mxu0 0
        %792 = vmatpush1.bf16.xpose.msra.mxu0 0
        %793 = vmatprep.subr.bf16.mxu0 0
        %794 = vmatpush1.bf16.xpose.msra.mxu0 0
        %795 = vmatprep.subr.bf16.mxu0 0
        %796 = vmatpush1.bf16.xpose.msra.mxu0 0
        %797 = vmatprep.subr.bf16.mxu0 0
        %798 = vmatpush1.bf16.xpose.msra.mxu0 0
        %799 = vmatprep.subr.bf16.mxu0 0
        %800 = vmatpush1.bf16.xpose.msra.mxu0 0
        %801 = vmatprep.subr.bf16.mxu0 0
        %802 = vmatpush1.bf16.xpose.msra.mxu0 0
        %803 = vmatprep.subr.bf16.mxu0 0
        %804 = vmatpush1.bf16.xpose.msra.mxu0 0
        %805 = vmatprep.mubr.bf16.mxu0 0
        %806 = vmatmul.mubr.bf16.gmra.mrb[0].mxu0 %v750
        %v807 = vpop.f32.mrb[0].mxu0
        %v808 = vadd.f32 0.0, %v807
        %v809 = vpop.f32.mrb[0].mxu0
        %v810 = vpop.f32.mrb[0].mxu0
        %v811 = vadd.f32 0.0, %v810
        %v812 = vpop.f32.mrb[0].mxu0
        %813 = vmatprep.mubr.bf16.mxu0 0
        %814 = vmatmul.mubr.bf16.gmra.mrb[0].mxu0 %v753
        %v815 = vpop.f32.mrb[0].mxu0
        %v816 = vadd.f32 0.0, %v815
        %v817 = vpop.f32.mrb[0].mxu0
        %v818 = vpop.f32.mrb[0].mxu0
        %v819 = vadd.f32 0.0, %v818
        %v820 = vpop.f32.mrb[0].mxu0
        %821 = vmatprep.mubr.bf16.mxu0 0
        %822 = vmatmul.mubr.bf16.gmra.mrb[0].mxu0 %v756
        %v823 = vpop.f32.mrb[0].mxu0
        %v824 = vadd.f32 0.0, %v823
        %v825 = vpop.f32.mrb[0].mxu0
        %v826 = vpop.f32.mrb[0].mxu0
        %v827 = vadd.f32 0.0, %v826
        %v828 = vpop.f32.mrb[0].mxu0
        %829 = vmatprep.mubr.bf16.mxu0 0
        %830 = vmatmul.mubr.bf16.gmra.mrb[0].mxu0 %v759
        %v831 = vpop.f32.mrb[0].mxu0
        %v832 = vadd.f32 0.0, %v831
        %v833 = vpop.f32.mrb[0].mxu0
        %v834 = vpop.f32.mrb[0].mxu0
        %v835 = vadd.f32 0.0, %v834
        %v836 = vpop.f32.mrb[0].mxu0
        %837 = vdwg.mxu0
        %vm838 = vcmask 523264
        %v839 = vsel %vm838, %v808, -inf
        %840 = vmax.xlane.f32.xlu0 %v839
        %v841 = vpop.xlane.xlu0 %840
        %v842 = vsel %vm838, %v811, -inf
        %843 = vmax.xlane.f32.xlu0 %v842
        %v844 = vpop.xlane.xlu0 %843
        %v845 = vsel %vm838, %v816, -inf
        %846 = vmax.xlane.f32.xlu0 %v845
        %v847 = vpop.xlane.xlu0 %846
        %v848 = vsel %vm838, %v819, -inf
        %849 = vmax.xlane.f32.xlu0 %v848
        %v850 = vpop.xlane.xlu0 %849
        %v851 = vsel %vm838, %v824, -inf
        %852 = vmax.xlane.f32.xlu0 %v851
        %v853 = vpop.xlane.xlu0 %852
        %v854 = vsel %vm838, %v827, -inf
        %855 = vmax.xlane.f32.xlu0 %v854
        %v856 = vpop.xlane.xlu0 %855
        %v857 = vsel %vm838, %v832, -inf
        %858 = vmax.xlane.f32.xlu0 %v857
        %v859 = vpop.xlane.xlu0 %858
        %v860 = vsel %vm838, %v835, -inf
        %861 = vmax.xlane.f32.xlu0 %v860
        %v862 = vpop.xlane.xlu0 %861
        %v863 = vsub.f32 %v808, %v841
        %v864 = vsub.f32 %v811, %v844
        %v865 = vsub.f32 %v816, %v847
        %v866 = vsub.f32 %v819, %v850
        %v867 = vsub.f32 %v824, %v853
        %v868 = vsub.f32 %v827, %v856
        %v869 = vsub.f32 %v832, %v859
        %v870 = vsub.f32 %v835, %v862
        %v871 = vmul.f32 %v863, 1.442695
        %v872 = vpow.pop %v871
        %v873 = vmul.f32 %v864, 1.442695
        %v874 = vpow.pop %v873
        %v875 = vmul.f32 %v865, 1.442695
        %v876 = vpow.pop %v875
        %v877 = vmul.f32 %v866, 1.442695
        %v878 = vpow.pop %v877
        %v879 = vmul.f32 %v867, 1.442695
        %v880 = vpow.pop %v879
        %v881 = vmul.f32 %v868, 1.442695
        %v882 = vpow.pop %v881
        %v883 = vmul.f32 %v869, 1.442695
        %v884 = vpow.pop %v883
        %v885 = vmul.f32 %v870, 1.442695
        %v886 = vpow.pop %v885
        %v887 = vsel %vm838, %v872, 0.0
        %888 = vadd.xlane.f32.xlu0 %v887
        %v889 = vpop.xlane.xlu0 %888
        %v890 = vsel %vm838, %v874, 0.0
        %891 = vadd.xlane.f32.xlu0 %v890
        %v892 = vpop.xlane.xlu0 %891
        %v893 = vsel %vm838, %v876, 0.0
        %894 = vadd.xlane.f32.xlu0 %v893
        %v895 = vpop.xlane.xlu0 %894
        %v896 = vsel %vm838, %v878, 0.0
        %897 = vadd.xlane.f32.xlu0 %v896
        %v898 = vpop.xlane.xlu0 %897
        %v899 = vsel %vm838, %v880, 0.0
        %900 = vadd.xlane.f32.xlu0 %v899
        %v901 = vpop.xlane.xlu0 %900
        %v902 = vsel %vm838, %v882, 0.0
        %903 = vadd.xlane.f32.xlu0 %v902
        %v904 = vpop.xlane.xlu0 %903
        %v905 = vsel %vm838, %v884, 0.0
        %906 = vadd.xlane.f32.xlu0 %v905
        %v907 = vpop.xlane.xlu0 %906
        %v908 = vsel %vm838, %v886, 0.0
        %909 = vadd.xlane.f32.xlu0 %v908
        %v910 = vpop.xlane.xlu0 %909
        %v911 = vrcp.pop %v889
        %v912 = vrcp.pop %v892
        %v913 = vrcp.pop %v895
        %v914 = vrcp.pop %v898
        %v915 = vrcp.pop %v901
        %v916 = vrcp.pop %v904
        %v917 = vrcp.pop %v907
        %v918 = vrcp.pop %v910
        %v919 = vmul.f32 %v872, %v911
        %v920 = vmul.f32 %v874, %v912
        %v921 = vmul.f32 %v876, %v913
        %v922 = vmul.f32 %v878, %v914
        %v923 = vmul.f32 %v880, %v915
        %v924 = vmul.f32 %v882, %v916
        %v925 = vmul.f32 %v884, %v917
        %v926 = vmul.f32 %v886, %v918
        %v927 = vpack.c.bf16 %v920, %v919
        %v928 = vpack.c.bf16 %v922, %v921
        %v929 = vpack.c.bf16 %v924, %v923
        %v930 = vpack.c.bf16 %v926, %v925
        %v932 = vsel %vm838, %v927, 0
        %v935 = vsel %vm838, %v928, 0
        %v938 = vsel %vm838, %v929, 0
        %v941 = vsel %vm838, %v930, 0
        %943 = vmatprep.subr.bf16.mxu0 0
        %944 = vmatpush1.bf16.msra.mxu0 %v745
        %945 = vmatprep.subr.bf16.mxu0 0
        %946 = vmatpush1.bf16.msra.mxu0 %v746
        %947 = vmatprep.subr.bf16.mxu0 0
        %948 = vmatpush1.bf16.msra.mxu0 %v747
        %949 = vmatprep.subr.bf16.mxu0 0
        %950 = vmatpush1.bf16.msra.mxu0 %v748
        %951 = vmatprep.subr.bf16.mxu0 0
        %952 = vmatpush1.bf16.msra.mxu0 0
        %953 = vmatprep.subr.bf16.mxu0 0
        %954 = vmatpush1.bf16.msra.mxu0 0
        %955 = vmatprep.subr.bf16.mxu0 0
        %956 = vmatpush1.bf16.msra.mxu0 0
        %957 = vmatprep.subr.bf16.mxu0 0
        %958 = vmatpush1.bf16.msra.mxu0 0
        %959 = vmatprep.subr.bf16.mxu0 0
        %960 = vmatpush1.bf16.msra.mxu0 0
        %961 = vmatprep.subr.bf16.mxu0 0
        %962 = vmatpush1.bf16.msra.mxu0 0
        %963 = vmatprep.subr.bf16.mxu0 0
        %964 = vmatpush1.bf16.msra.mxu0 0
        %965 = vmatprep.subr.bf16.mxu0 0
        %966 = vmatpush1.bf16.msra.mxu0 0
        %967 = vmatprep.subr.bf16.mxu0 0
        %968 = vmatpush1.bf16.msra.mxu0 0
        %969 = vmatprep.subr.bf16.mxu0 0
        %970 = vmatpush1.bf16.msra.mxu0 0
        %971 = vmatprep.subr.bf16.mxu0 0
        %972 = vmatpush1.bf16.msra.mxu0 0
        %973 = vmatprep.subr.bf16.mxu0 0
        %974 = vmatpush1.bf16.msra.mxu0 0
        %975 = vmatprep.mubr.bf16.mxu0 0
        %976 = vmatmul.mubr.bf16.gmra.mrb[0].mxu0 %v932
        %v977 = vpop.f32.mrb[0].mxu0
        %v978 = vadd.f32 0.0, %v977
        %v979 = vpop.f32.mrb[0].mxu0
        %v980 = vpop.f32.mrb[0].mxu0
        %v981 = vadd.f32 0.0, %v980
        %v982 = vpop.f32.mrb[0].mxu0
        %983 = vmatprep.mubr.bf16.mxu0 0
        %984 = vmatmul.mubr.bf16.gmra.mrb[0].mxu0 %v935
        %v985 = vpop.f32.mrb[0].mxu0
        %v986 = vadd.f32 0.0, %v985
        %v987 = vpop.f32.mrb[0].mxu0
        %v988 = vpop.f32.mrb[0].mxu0
        %v989 = vadd.f32 0.0, %v988
        %v990 = vpop.f32.mrb[0].mxu0
        %991 = vmatprep.mubr.bf16.mxu0 0
        %992 = vmatmul.mubr.bf16.gmra.mrb[0].mxu0 %v938
        %v993 = vpop.f32.mrb[0].mxu0
        %v994 = vadd.f32 0.0, %v993
        %v995 = vpop.f32.mrb[0].mxu0
        %v996 = vpop.f32.mrb[0].mxu0
        %v997 = vadd.f32 0.0, %v996
        %v998 = vpop.f32.mrb[0].mxu0
        %999 = vmatprep.mubr.bf16.mxu0 0
        %1000 = vmatmul.mubr.bf16.gmra.mrb[0].mxu0 %v941
        %v1001 = vpop.f32.mrb[0].mxu0
        %v1002 = vadd.f32 0.0, %v1001
        %v1003 = vpop.f32.mrb[0].mxu0
        %v1004 = vpop.f32.mrb[0].mxu0
        %v1005 = vadd.f32 0.0, %v1004
        %v1006 = vpop.f32.mrb[0].mxu0
        %1007 = vdwg.mxu0
        %v1008 = vpack.c.bf16 %v981, %v978
        %v1009 = vpack.c.bf16 %v989, %v986
        %v1010 = vpack.c.bf16 %v997, %v994
        %v1011 = vpack.c.bf16 %v1005, %v1002
        %v1012 = vld [vmem:[#allocation4] sm:$0xf]
        %v1013 = vld [vmem:[#allocation4 + $0x4] sm:$0xf]
        %v1014 = vld [vmem:[#allocation4 + $0x8] sm:$0xf]
        %v1015 = vld [vmem:[#allocation4 + $0xc] sm:$0xf]
        %s1016 = scalar_lea.vmem %s1, 16
        %v1017 = vld [vmem:[%s1016] sm:$0xf]
        %v1018 = vld [vmem:[%s1016 + $0x4] sm:$0xf]
        %v1019 = vld [vmem:[%s1016 + $0x8] sm:$0xf]
        %v1020 = vld [vmem:[%s1016 + $0xc] sm:$0xf]
        %v1025 = vunpack.c.l.b16 %v1017
        %v1026 = vunpack.c.l.b16 %v1018
        %v1027 = vunpack.c.l.b16 %v1019
        %v1028 = vunpack.c.l.b16 %v1020
        %v1029 = vpack.c.b16 %v1026, %v1025
        %v1030 = vpack.c.b16 %v1028, %v1027
        %1033 = vmatprep.subr.bf16.mxu0 0
        %1034 = vmatpush1.bf16.msra.mxu0 %v1029
        %1035 = vmatprep.subr.bf16.mxu0 0
        %1036 = vmatpush1.bf16.msra.mxu0 %v1030
        %1037 = vmatprep.subr.bf16.mxu0 0
        %1038 = vmatpush1.bf16.msra.mxu0 0
        %1039 = vmatprep.subr.bf16.mxu0 0
        %1040 = vmatpush1.bf16.msra.mxu0 0
        %1041 = vmatprep.subr.bf16.mxu0 0
        %1042 = vmatpush1.bf16.msra.mxu0 0
        %1043 = vmatprep.subr.bf16.mxu0 0
        %1044 = vmatpush1.bf16.msra.mxu0 0
        %1045 = vmatprep.subr.bf16.mxu0 0
        %1046 = vmatpush1.bf16.msra.mxu0 0
        %1047 = vmatprep.subr.bf16.mxu0 0
        %1048 = vmatpush1.bf16.msra.mxu0 0
        %1049 = vmatprep.subr.bf16.mxu0 0
        %1050 = vmatpush1.bf16.msra.mxu0 0
        %1051 = vmatprep.subr.bf16.mxu0 0
        %1052 = vmatpush1.bf16.msra.mxu0 0
        %1053 = vmatprep.subr.bf16.mxu0 0
        %1054 = vmatpush1.bf16.msra.mxu0 0
        %1055 = vmatprep.subr.bf16.mxu0 0
        %1056 = vmatpush1.bf16.msra.mxu0 0
        %1057 = vmatprep.subr.bf16.mxu0 0
        %1058 = vmatpush1.bf16.msra.mxu0 0
        %1059 = vmatprep.subr.bf16.mxu0 0
        %1060 = vmatpush1.bf16.msra.mxu0 0
        %1061 = vmatprep.subr.bf16.mxu0 0
        %1062 = vmatpush1.bf16.msra.mxu0 0
        %1063 = vmatprep.subr.bf16.mxu0 0
        %1064 = vmatpush1.bf16.msra.mxu0 0
        %1065 = vmatprep.mubr.bf16.mxu0 0
        %1066 = vmatmul.mubr.bf16.gmra.mrb[0].mxu0 %v373
        %v1067 = vpop.f32.mrb[0].mxu0
        %v1068 = vadd.f32 0.0, %v1067
        %v1069 = vpop.f32.mrb[0].mxu0
        %v1070 = vpop.f32.mrb[0].mxu0
        %v1071 = vadd.f32 0.0, %v1070
        %v1072 = vpop.f32.mrb[0].mxu0
        %1073 = vmatprep.mubr.bf16.mxu0 0
        %1074 = vmatmul.mubr.bf16.gmra.mrb[0].mxu0 %v376
        %v1075 = vpop.f32.mrb[0].mxu0
        %v1076 = vadd.f32 0.0, %v1075
        %v1077 = vpop.f32.mrb[0].mxu0
        %v1078 = vpop.f32.mrb[0].mxu0
        %v1079 = vadd.f32 0.0, %v1078
        %v1080 = vpop.f32.mrb[0].mxu0
        %1081 = vmatprep.mubr.bf16.mxu0 0
        %1082 = vmatmul.mubr.bf16.gmra.mrb[0].mxu0 %v379
        %v1083 = vpop.f32.mrb[0].mxu0
        %v1084 = vadd.f32 0.0, %v1083
        %v1085 = vpop.f32.mrb[0].mxu0
        %v1086 = vpop.f32.mrb[0].mxu0
        %v1087 = vadd.f32 0.0, %v1086
        %v1088 = vpop.f32.mrb[0].mxu0
        %1089 = vmatprep.mubr.bf16.mxu0 0
        %1090 = vmatmul.mubr.bf16.gmra.mrb[0].mxu0 %v382
        %v1091 = vpop.f32.mrb[0].mxu0
        %v1092 = vadd.f32 0.0, %v1091
        %v1093 = vpop.f32.mrb[0].mxu0
        %v1094 = vpop.f32.mrb[0].mxu0
        %v1095 = vadd.f32 0.0, %v1094
        %v1096 = vpop.f32.mrb[0].mxu0
        %1097 = vdwg.mxu0
        %s1098 = scalar_lea.vmem %s2, 16
        %v1099 = vld [vmem:[%s1098] sm:$0xf]
        %v1100 = vld [vmem:[%s1098 + $0x4] sm:$0xf]
        %v1101 = vld [vmem:[%s1098 + $0x8] sm:$0xf]
        %v1102 = vld [vmem:[%s1098 + $0xc] sm:$0xf]
        %v1107 = vunpack.c.l.b16 %v1099
        %v1108 = vunpack.c.l.b16 %v1100
        %v1109 = vunpack.c.l.b16 %v1101
        %v1110 = vunpack.c.l.b16 %v1102
        %v1111 = vpack.c.b16 %v1108, %v1107
        %v1112 = vpack.c.b16 %v1110, %v1109
        %1115 = vmatprep.subr.bf16.mxu0 0
        %1116 = vmatpush1.bf16.msra.mxu0 %v1111
        %1117 = vmatprep.subr.bf16.mxu0 0
        %1118 = vmatpush1.bf16.msra.mxu0 %v1112
        %1119 = vmatprep.subr.bf16.mxu0 0
        %1120 = vmatpush1.bf16.msra.mxu0 0
        %1121 = vmatprep.subr.bf16.mxu0 0
        %1122 = vmatpush1.bf16.msra.mxu0 0
        %1123 = vmatprep.subr.bf16.mxu0 0
        %1124 = vmatpush1.bf16.msra.mxu0 0
        %1125 = vmatprep.subr.bf16.mxu0 0
        %1126 = vmatpush1.bf16.msra.mxu0 0
        %1127 = vmatprep.subr.bf16.mxu0 0
        %1128 = vmatpush1.bf16.msra.mxu0 0
        %1129 = vmatprep.subr.bf16.mxu0 0
        %1130 = vmatpush1.bf16.msra.mxu0 0
        %1131 = vmatprep.subr.bf16.mxu0 0
        %1132 = vmatpush1.bf16.msra.mxu0 0
        %1133 = vmatprep.subr.bf16.mxu0 0
        %1134 = vmatpush1.bf16.msra.mxu0 0
        %1135 = vmatprep.subr.bf16.mxu0 0
        %1136 = vmatpush1.bf16.msra.mxu0 0
        %1137 = vmatprep.subr.bf16.mxu0 0
        %1138 = vmatpush1.bf16.msra.mxu0 0
        %1139 = vmatprep.subr.bf16.mxu0 0
        %1140 = vmatpush1.bf16.msra.mxu0 0
        %1141 = vmatprep.subr.bf16.mxu0 0
        %1142 = vmatpush1.bf16.msra.mxu0 0
        %1143 = vmatprep.subr.bf16.mxu0 0
        %1144 = vmatpush1.bf16.msra.mxu0 0
        %1145 = vmatprep.subr.bf16.mxu0 0
        %1146 = vmatpush1.bf16.msra.mxu0 0
        %1147 = vmatprep.mubr.bf16.mxu0 0
        %1148 = vmatmul.mubr.bf16.gmra.mrb[0].mxu0 %v373
        %v1149 = vpop.f32.mrb[0].mxu0
        %v1150 = vadd.f32 0.0, %v1149
        %v1151 = vpop.f32.mrb[0].mxu0
        %v1152 = vpop.f32.mrb[0].mxu0
        %v1153 = vadd.f32 0.0, %v1152
        %v1154 = vpop.f32.mrb[0].mxu0
        %1155 = vmatprep.mubr.bf16.mxu0 0
        %1156 = vmatmul.mubr.bf16.gmra.mrb[0].mxu0 %v376
        %v1157 = vpop.f32.mrb[0].mxu0
        %v1158 = vadd.f32 0.0, %v1157
        %v1159 = vpop.f32.mrb[0].mxu0
        %v1160 = vpop.f32.mrb[0].mxu0
        %v1161 = vadd.f32 0.0, %v1160
        %v1162 = vpop.f32.mrb[0].mxu0
        %1163 = vmatprep.mubr.bf16.mxu0 0
        %1164 = vmatmul.mubr.bf16.gmra.mrb[0].mxu0 %v379
        %v1165 = vpop.f32.mrb[0].mxu0
        %v1166 = vadd.f32 0.0, %v1165
        %v1167 = vpop.f32.mrb[0].mxu0
        %v1168 = vpop.f32.mrb[0].mxu0
        %v1169 = vadd.f32 0.0, %v1168
        %v1170 = vpop.f32.mrb[0].mxu0
        %1171 = vmatprep.mubr.bf16.mxu0 0
        %1172 = vmatmul.mubr.bf16.gmra.mrb[0].mxu0 %v382
        %v1173 = vpop.f32.mrb[0].mxu0
        %v1174 = vadd.f32 0.0, %v1173
        %v1175 = vpop.f32.mrb[0].mxu0
        %v1176 = vpop.f32.mrb[0].mxu0
        %v1177 = vadd.f32 0.0, %v1176
        %v1178 = vpop.f32.mrb[0].mxu0
        %1179 = vdwg.mxu0
        %s1180 = scalar_lea.vmem [#allocation2], 16
        %v1181 = vld [vmem:[%s1180] sm:$0xf]
        %v1182 = vld [vmem:[%s1180 + $0x4] sm:$0xf]
        %v1183 = vld [vmem:[%s1180 + $0x8] sm:$0xf]
        %v1184 = vld [vmem:[%s1180 + $0xc] sm:$0xf]
        %v1189 = vunpack.c.l.b16 %v1181
        %v1190 = vunpack.c.l.b16 %v1182
        %v1191 = vunpack.c.l.b16 %v1183
        %v1192 = vunpack.c.l.b16 %v1184
        %v1193 = vpack.c.b16 %v1190, %v1189
        %v1194 = vpack.c.b16 %v1192, %v1191
        %1197 = vmatprep.subr.bf16.mxu0 0
        %1198 = vmatpush1.bf16.msra.mxu0 %v1193
        %1199 = vmatprep.subr.bf16.mxu0 0
        %1200 = vmatpush1.bf16.msra.mxu0 %v1194
        %1201 = vmatprep.subr.bf16.mxu0 0
        %1202 = vmatpush1.bf16.msra.mxu0 0
        %1203 = vmatprep.subr.bf16.mxu0 0
        %1204 = vmatpush1.bf16.msra.mxu0 0
        %1205 = vmatprep.subr.bf16.mxu0 0
        %1206 = vmatpush1.bf16.msra.mxu0 0
        %1207 = vmatprep.subr.bf16.mxu0 0
        %1208 = vmatpush1.bf16.msra.mxu0 0
        %1209 = vmatprep.subr.bf16.mxu0 0
        %1210 = vmatpush1.bf16.msra.mxu0 0
        %1211 = vmatprep.subr.bf16.mxu0 0
        %1212 = vmatpush1.bf16.msra.mxu0 0
        %1213 = vmatprep.subr.bf16.mxu0 0
        %1214 = vmatpush1.bf16.msra.mxu0 0
        %1215 = vmatprep.subr.bf16.mxu0 0
        %1216 = vmatpush1.bf16.msra.mxu0 0
        %1217 = vmatprep.subr.bf16.mxu0 0
        %1218 = vmatpush1.bf16.msra.mxu0 0
        %1219 = vmatprep.subr.bf16.mxu0 0
        %1220 = vmatpush1.bf16.msra.mxu0 0
        %1221 = vmatprep.subr.bf16.mxu0 0
        %1222 = vmatpush1.bf16.msra.mxu0 0
        %1223 = vmatprep.subr.bf16.mxu0 0
        %1224 = vmatpush1.bf16.msra.mxu0 0
        %1225 = vmatprep.subr.bf16.mxu0 0
        %1226 = vmatpush1.bf16.msra.mxu0 0
        %1227 = vmatprep.subr.bf16.mxu0 0
        %1228 = vmatpush1.bf16.msra.mxu0 0
        %1229 = vmatprep.mubr.bf16.mxu0 0
        %1230 = vmatmul.mubr.bf16.gmra.mrb[0].mxu0 %v373
        %v1231 = vpop.f32.mrb[0].mxu0
        %v1232 = vadd.f32 0.0, %v1231
        %v1233 = vpop.f32.mrb[0].mxu0
        %v1234 = vpop.f32.mrb[0].mxu0
        %v1235 = vadd.f32 0.0, %v1234
        %v1236 = vpop.f32.mrb[0].mxu0
        %1237 = vmatprep.mubr.bf16.mxu0 0
        %1238 = vmatmul.mubr.bf16.gmra.mrb[0].mxu0 %v376
        %v1239 = vpop.f32.mrb[0].mxu0
        %v1240 = vadd.f32 0.0, %v1239
        %v1241 = vpop.f32.mrb[0].mxu0
        %v1242 = vpop.f32.mrb[0].mxu0
        %v1243 = vadd.f32 0.0, %v1242
        %v1244 = vpop.f32.mrb[0].mxu0
        %1245 = vmatprep.mubr.bf16.mxu0 0
        %1246 = vmatmul.mubr.bf16.gmra.mrb[0].mxu0 %v379
        %v1247 = vpop.f32.mrb[0].mxu0
        %v1248 = vadd.f32 0.0, %v1247
        %v1249 = vpop.f32.mrb[0].mxu0
        %v1250 = vpop.f32.mrb[0].mxu0
        %v1251 = vadd.f32 0.0, %v1250
        %v1252 = vpop.f32.mrb[0].mxu0
        %1253 = vmatprep.mubr.bf16.mxu0 0
        %1254 = vmatmul.mubr.bf16.gmra.mrb[0].mxu0 %v382
        %v1255 = vpop.f32.mrb[0].mxu0
        %v1256 = vadd.f32 0.0, %v1255
        %v1257 = vpop.f32.mrb[0].mxu0
        %v1258 = vpop.f32.mrb[0].mxu0
        %v1259 = vadd.f32 0.0, %v1258
        %v1260 = vpop.f32.mrb[0].mxu0
        %1261 = vdwg.mxu0
        %v1262 = vmul.f32 %v1068, %v1068
        %v1263 = vmul.f32 %v1071, %v1071
        %v1264 = vmul.f32 %v1076, %v1076
        %v1265 = vmul.f32 %v1079, %v1079
        %v1266 = vmul.f32 %v1084, %v1084
        %v1267 = vmul.f32 %v1087, %v1087
        %v1268 = vmul.f32 %v1092, %v1092
        %v1269 = vmul.f32 %v1095, %v1095
        %v1270 = vsel %vm302, %v1262, 0.0
        %1271 = vadd.xlane.f32.xlu0 %v1270
        %v1272 = vpop.xlane.xlu0 %1271
        %v1273 = vsel %vm302, %v1263, 0.0
        %1274 = vadd.xlane.f32.xlu0 %v1273
        %v1275 = vpop.xlane.xlu0 %1274
        %v1276 = vsel %vm302, %v1264, 0.0
        %1277 = vadd.xlane.f32.xlu0 %v1276
        %v1278 = vpop.xlane.xlu0 %1277
        %v1279 = vsel %vm302, %v1265, 0.0
        %1280 = vadd.xlane.f32.xlu0 %v1279
        %v1281 = vpop.xlane.xlu0 %1280
        %v1282 = vsel %vm302, %v1266, 0.0
        %1283 = vadd.xlane.f32.xlu0 %v1282
        %v1284 = vpop.xlane.xlu0 %1283
        %v1285 = vsel %vm302, %v1267, 0.0
        %1286 = vadd.xlane.f32.xlu0 %v1285
        %v1287 = vpop.xlane.xlu0 %1286
        %v1288 = vsel %vm302, %v1268, 0.0
        %1289 = vadd.xlane.f32.xlu0 %v1288
        %v1290 = vpop.xlane.xlu0 %1289
        %v1291 = vsel %vm302, %v1269, 0.0
        %1292 = vadd.xlane.f32.xlu0 %v1291
        %v1293 = vpop.xlane.xlu0 %1292
        %v1294 = vmax.f32 %v1272, 1e-24
        %v1295 = vmax.f32 %v1275, 1e-24
        %v1296 = vmax.f32 %v1278, 1e-24
        %v1297 = vmax.f32 %v1281, 1e-24
        %v1298 = vmax.f32 %v1284, 1e-24
        %v1299 = vmax.f32 %v1287, 1e-24
        %v1300 = vmax.f32 %v1290, 1e-24
        %v1301 = vmax.f32 %v1293, 1e-24
        %v1302 = vrsqrt.pop %v1294
        %v1303 = vrsqrt.pop %v1295
        %v1304 = vrsqrt.pop %v1296
        %v1305 = vrsqrt.pop %v1297
        %v1306 = vrsqrt.pop %v1298
        %v1307 = vrsqrt.pop %v1299
        %v1308 = vrsqrt.pop %v1300
        %v1309 = vrsqrt.pop %v1301
        %v1310 = vmul.f32 %v1068, %v1302
        %v1311 = vmul.f32 %v1071, %v1303
        %v1312 = vmul.f32 %v1076, %v1304
        %v1313 = vmul.f32 %v1079, %v1305
        %v1314 = vmul.f32 %v1084, %v1306
        %v1315 = vmul.f32 %v1087, %v1307
        %v1316 = vmul.f32 %v1092, %v1308
        %v1317 = vmul.f32 %v1095, %v1309
        %v1318 = vpack.c.bf16 %v1311, %v1310
        %v1319 = vpack.c.bf16 %v1313, %v1312
        %v1320 = vpack.c.bf16 %v1315, %v1314
        %v1321 = vpack.c.bf16 %v1317, %v1316
        %v1322 = vmul.f32 %v1150, %v1150
        %v1323 = vmul.f32 %v1153, %v1153
        %v1324 = vmul.f32 %v1158, %v1158
        %v1325 = vmul.f32 %v1161, %v1161
        %v1326 = vmul.f32 %v1166, %v1166
        %v1327 = vmul.f32 %v1169, %v1169
        %v1328 = vmul.f32 %v1174, %v1174
        %v1329 = vmul.f32 %v1177, %v1177
        %v1330 = vsel %vm302, %v1322, 0.0
        %1331 = vadd.xlane.f32.xlu0 %v1330
        %v1332 = vpop.xlane.xlu0 %1331
        %v1333 = vsel %vm302, %v1323, 0.0
        %1334 = vadd.xlane.f32.xlu0 %v1333
        %v1335 = vpop.xlane.xlu0 %1334
        %v1336 = vsel %vm302, %v1324, 0.0
        %1337 = vadd.xlane.f32.xlu0 %v1336
        %v1338 = vpop.xlane.xlu0 %1337
        %v1339 = vsel %vm302, %v1325, 0.0
        %1340 = vadd.xlane.f32.xlu0 %v1339
        %v1341 = vpop.xlane.xlu0 %1340
        %v1342 = vsel %vm302, %v1326, 0.0
        %1343 = vadd.xlane.f32.xlu0 %v1342
        %v1344 = vpop.xlane.xlu0 %1343
        %v1345 = vsel %vm302, %v1327, 0.0
        %1346 = vadd.xlane.f32.xlu0 %v1345
        %v1347 = vpop.xlane.xlu0 %1346
        %v1348 = vsel %vm302, %v1328, 0.0
        %1349 = vadd.xlane.f32.xlu0 %v1348
        %v1350 = vpop.xlane.xlu0 %1349
        %v1351 = vsel %vm302, %v1329, 0.0
        %1352 = vadd.xlane.f32.xlu0 %v1351
        %v1353 = vpop.xlane.xlu0 %1352
        %v1354 = vmax.f32 %v1332, 1e-24
        %v1355 = vmax.f32 %v1335, 1e-24
        %v1356 = vmax.f32 %v1338, 1e-24
        %v1357 = vmax.f32 %v1341, 1e-24
        %v1358 = vmax.f32 %v1344, 1e-24
        %v1359 = vmax.f32 %v1347, 1e-24
        %v1360 = vmax.f32 %v1350, 1e-24
        %v1361 = vmax.f32 %v1353, 1e-24
        %v1362 = vrsqrt.pop %v1354
        %v1363 = vrsqrt.pop %v1355
        %v1364 = vrsqrt.pop %v1356
        %v1365 = vrsqrt.pop %v1357
        %v1366 = vrsqrt.pop %v1358
        %v1367 = vrsqrt.pop %v1359
        %v1368 = vrsqrt.pop %v1360
        %v1369 = vrsqrt.pop %v1361
        %v1370 = vmul.f32 %v1150, %v1362
        %v1371 = vmul.f32 %v1153, %v1363
        %v1372 = vmul.f32 %v1158, %v1364
        %v1373 = vmul.f32 %v1161, %v1365
        %v1374 = vmul.f32 %v1166, %v1366
        %v1375 = vmul.f32 %v1169, %v1367
        %v1376 = vmul.f32 %v1174, %v1368
        %v1377 = vmul.f32 %v1177, %v1369
        %v1378 = vmul.f32 %v1370, %v731
        %v1379 = vmul.f32 %v1371, %v731
        %v1380 = vmul.f32 %v1372, %v731
        %v1381 = vmul.f32 %v1373, %v731
        %v1382 = vmul.f32 %v1374, %v731
        %v1383 = vmul.f32 %v1375, %v731
        %v1384 = vmul.f32 %v1376, %v731
        %v1385 = vmul.f32 %v1377, %v731
        %v1386 = vpack.c.bf16 %v1379, %v1378
        %v1387 = vpack.c.bf16 %v1381, %v1380
        %v1388 = vpack.c.bf16 %v1383, %v1382
        %v1389 = vpack.c.bf16 %v1385, %v1384
        %v1390 = vpack.c.bf16 %v1235, %v1232
        %v1391 = vpack.c.bf16 %v1243, %v1240
        %v1392 = vpack.c.bf16 %v1251, %v1248
        %v1393 = vpack.c.bf16 %v1259, %v1256
        %v1395 = vsel %vm302, %v1318, 0
        %v1398 = vsel %vm302, %v1319, 0
        %v1401 = vsel %vm302, %v1320, 0
        %v1404 = vsel %vm302, %v1321, 0
        %v1407 = vsel %vm302, %v1386, 0
        %v1410 = vsel %vm302, %v1387, 0
        %v1413 = vsel %vm302, %v1388, 0
        %v1416 = vsel %vm302, %v1389, 0
        %1418 = vmatprep.subr.bf16.mxu0 0
        %1419 = vmatpush1.bf16.xpose.msra.mxu0 %v1407
        %1420 = vmatprep.subr.bf16.mxu0 0
        %1421 = vmatpush1.bf16.xpose.msra.mxu0 %v1410
        %1422 = vmatprep.subr.bf16.mxu0 0
        %1423 = vmatpush1.bf16.xpose.msra.mxu0 %v1413
        %1424 = vmatprep.subr.bf16.mxu0 0
        %1425 = vmatpush1.bf16.xpose.msra.mxu0 %v1416
        %1426 = vmatprep.subr.bf16.mxu0 0
        %1427 = vmatpush1.bf16.xpose.msra.mxu0 0
        %1428 = vmatprep.subr.bf16.mxu0 0
        %1429 = vmatpush1.bf16.xpose.msra.mxu0 0
        %1430 = vmatprep.subr.bf16.mxu0 0
        %1431 = vmatpush1.bf16.xpose.msra.mxu0 0
        %1432 = vmatprep.subr.bf16.mxu0 0
        %1433 = vmatpush1.bf16.xpose.msra.mxu0 0
        %1434 = vmatprep.subr.bf16.mxu0 0
        %1435 = vmatpush1.bf16.xpose.msra.mxu0 0
        %1436 = vmatprep.subr.bf16.mxu0 0
        %1437 = vmatpush1.bf16.xpose.msra.mxu0 0
        %1438 = vmatprep.subr.bf16.mxu0 0
        %1439 = vmatpush1.bf16.xpose.msra.mxu0 0
        %1440 = vmatprep.subr.bf16.mxu0 0
        %1441 = vmatpush1.bf16.xpose.msra.mxu0 0
        %1442 = vmatprep.subr.bf16.mxu0 0
        %1443 = vmatpush1.bf16.xpose.msra.mxu0 0
        %1444 = vmatprep.subr.bf16.mxu0 0
        %1445 = vmatpush1.bf16.xpose.msra.mxu0 0
        %1446 = vmatprep.subr.bf16.mxu0 0
        %1447 = vmatpush1.bf16.xpose.msra.mxu0 0
        %1448 = vmatprep.subr.bf16.mxu0 0
        %1449 = vmatpush1.bf16.xpose.msra.mxu0 0
        %1450 = vmatprep.mubr.bf16.mxu0 0
        %1451 = vmatmul.mubr.bf16.gmra.mrb[0].mxu0 %v1395
        %v1452 = vpop.f32.mrb[0].mxu0
        %v1453 = vadd.f32 0.0, %v1452
        %v1454 = vpop.f32.mrb[0].mxu0
        %v1455 = vpop.f32.mrb[0].mxu0
        %v1456 = vadd.f32 0.0, %v1455
        %v1457 = vpop.f32.mrb[0].mxu0
        %1458 = vmatprep.mubr.bf16.mxu0 0
        %1459 = vmatmul.mubr.bf16.gmra.mrb[0].mxu0 %v1398
        %v1460 = vpop.f32.mrb[0].mxu0
        %v1461 = vadd.f32 0.0, %v1460
        %v1462 = vpop.f32.mrb[0].mxu0
        %v1463 = vpop.f32.mrb[0].mxu0
        %v1464 = vadd.f32 0.0, %v1463
        %v1465 = vpop.f32.mrb[0].mxu0
        %1466 = vmatprep.mubr.bf16.mxu0 0
        %1467 = vmatmul.mubr.bf16.gmra.mrb[0].mxu0 %v1401
        %v1468 = vpop.f32.mrb[0].mxu0
        %v1469 = vadd.f32 0.0, %v1468
        %v1470 = vpop.f32.mrb[0].mxu0
        %v1471 = vpop.f32.mrb[0].mxu0
        %v1472 = vadd.f32 0.0, %v1471
        %v1473 = vpop.f32.mrb[0].mxu0
        %1474 = vmatprep.mubr.bf16.mxu0 0
        %1475 = vmatmul.mubr.bf16.gmra.mrb[0].mxu0 %v1404
        %v1476 = vpop.f32.mrb[0].mxu0
        %v1477 = vadd.f32 0.0, %v1476
        %v1478 = vpop.f32.mrb[0].mxu0
        %v1479 = vpop.f32.mrb[0].mxu0
        %v1480 = vadd.f32 0.0, %v1479
        %v1481 = vpop.f32.mrb[0].mxu0
        %1482 = vdwg.mxu0
        %v1483 = vsel %vm838, %v1453, -inf
        %1484 = vmax.xlane.f32.xlu0 %v1483
        %v1485 = vpop.xlane.xlu0 %1484
        %v1486 = vsel %vm838, %v1456, -inf
        %1487 = vmax.xlane.f32.xlu0 %v1486
        %v1488 = vpop.xlane.xlu0 %1487
        %v1489 = vsel %vm838, %v1461, -inf
        %1490 = vmax.xlane.f32.xlu0 %v1489
        %v1491 = vpop.xlane.xlu0 %1490
        %v1492 = vsel %vm838, %v1464, -inf
        %1493 = vmax.xlane.f32.xlu0 %v1492
        %v1494 = vpop.xlane.xlu0 %1493
        %v1495 = vsel %vm838, %v1469, -inf
        %1496 = vmax.xlane.f32.xlu0 %v1495
        %v1497 = vpop.xlane.xlu0 %1496
        %v1498 = vsel %vm838, %v1472, -inf
        %1499 = vmax.xlane.f32.xlu0 %v1498
        %v1500 = vpop.xlane.xlu0 %1499
        %v1501 = vsel %vm838, %v1477, -inf
        %1502 = vmax.xlane.f32.xlu0 %v1501
        %v1503 = vpop.xlane.xlu0 %1502
        %v1504 = vsel %vm838, %v1480, -inf
        %1505 = vmax.xlane.f32.xlu0 %v1504
        %v1506 = vpop.xlane.xlu0 %1505
        %v1507 = vsub.f32 %v1453, %v1485
        %v1508 = vsub.f32 %v1456, %v1488
        %v1509 = vsub.f32 %v1461, %v1491
        %v1510 = vsub.f32 %v1464, %v1494
        %v1511 = vsub.f32 %v1469, %v1497
        %v1512 = vsub.f32 %v1472, %v1500
        %v1513 = vsub.f32 %v1477, %v1503
        %v1514 = vsub.f32 %v1480, %v1506
        %v1515 = vmul.f32 %v1507, 1.442695
        %v1516 = vpow.pop %v1515
        %v1517 = vmul.f32 %v1508, 1.442695
        %v1518 = vpow.pop %v1517
        %v1519 = vmul.f32 %v1509, 1.442695
        %v1520 = vpow.pop %v1519
        %v1521 = vmul.f32 %v1510, 1.442695
        %v1522 = vpow.pop %v1521
        %v1523 = vmul.f32 %v1511, 1.442695
        %v1524 = vpow.pop %v1523
        %v1525 = vmul.f32 %v1512, 1.442695
        %v1526 = vpow.pop %v1525
        %v1527 = vmul.f32 %v1513, 1.442695
        %v1528 = vpow.pop %v1527
        %v1529 = vmul.f32 %v1514, 1.442695
        %v1530 = vpow.pop %v1529
        %v1531 = vsel %vm838, %v1516, 0.0
        %1532 = vadd.xlane.f32.xlu0 %v1531
        %v1533 = vpop.xlane.xlu0 %1532
        %v1534 = vsel %vm838, %v1518, 0.0
        %1535 = vadd.xlane.f32.xlu0 %v1534
        %v1536 = vpop.xlane.xlu0 %1535
        %v1537 = vsel %vm838, %v1520, 0.0
        %1538 = vadd.xlane.f32.xlu0 %v1537
        %v1539 = vpop.xlane.xlu0 %1538
        %v1540 = vsel %vm838, %v1522, 0.0
        %1541 = vadd.xlane.f32.xlu0 %v1540
        %v1542 = vpop.xlane.xlu0 %1541
        %v1543 = vsel %vm838, %v1524, 0.0
        %1544 = vadd.xlane.f32.xlu0 %v1543
        %v1545 = vpop.xlane.xlu0 %1544
        %v1546 = vsel %vm838, %v1526, 0.0
        %1547 = vadd.xlane.f32.xlu0 %v1546
        %v1548 = vpop.xlane.xlu0 %1547
        %v1549 = vsel %vm838, %v1528, 0.0
        %1550 = vadd.xlane.f32.xlu0 %v1549
        %v1551 = vpop.xlane.xlu0 %1550
        %v1552 = vsel %vm838, %v1530, 0.0
        %1553 = vadd.xlane.f32.xlu0 %v1552
        %v1554 = vpop.xlane.xlu0 %1553
        %v1555 = vrcp.pop %v1533
        %v1556 = vrcp.pop %v1536
        %v1557 = vrcp.pop %v1539
        %v1558 = vrcp.pop %v1542
        %v1559 = vrcp.pop %v1545
        %v1560 = vrcp.pop %v1548
        %v1561 = vrcp.pop %v1551
        %v1562 = vrcp.pop %v1554
        %v1563 = vmul.f32 %v1516, %v1555
        %v1564 = vmul.f32 %v1518, %v1556
        %v1565 = vmul.f32 %v1520, %v1557
        %v1566 = vmul.f32 %v1522, %v1558
        %v1567 = vmul.f32 %v1524, %v1559
        %v1568 = vmul.f32 %v1526, %v1560
        %v1569 = vmul.f32 %v1528, %v1561
        %v1570 = vmul.f32 %v1530, %v1562
        %v1571 = vpack.c.bf16 %v1564, %v1563
        %v1572 = vpack.c.bf16 %v1566, %v1565
        %v1573 = vpack.c.bf16 %v1568, %v1567
        %v1574 = vpack.c.bf16 %v1570, %v1569
        %v1576 = vsel %vm838, %v1571, 0
        %v1579 = vsel %vm838, %v1572, 0
        %v1582 = vsel %vm838, %v1573, 0
        %v1585 = vsel %vm838, %v1574, 0
        %1587 = vmatprep.subr.bf16.mxu0 0
        %1588 = vmatpush1.bf16.msra.mxu0 %v1390
        %1589 = vmatprep.subr.bf16.mxu0 0
        %1590 = vmatpush1.bf16.msra.mxu0 %v1391
        %1591 = vmatprep.subr.bf16.mxu0 0
        %1592 = vmatpush1.bf16.msra.mxu0 %v1392
        %1593 = vmatprep.subr.bf16.mxu0 0
        %1594 = vmatpush1.bf16.msra.mxu0 %v1393
        %1595 = vmatprep.subr.bf16.mxu0 0
        %1596 = vmatpush1.bf16.msra.mxu0 0
        %1597 = vmatprep.subr.bf16.mxu0 0
        %1598 = vmatpush1.bf16.msra.mxu0 0
        %1599 = vmatprep.subr.bf16.mxu0 0
        %1600 = vmatpush1.bf16.msra.mxu0 0
        %1601 = vmatprep.subr.bf16.mxu0 0
        %1602 = vmatpush1.bf16.msra.mxu0 0
        %1603 = vmatprep.subr.bf16.mxu0 0
        %1604 = vmatpush1.bf16.msra.mxu0 0
        %1605 = vmatprep.subr.bf16.mxu0 0
        %1606 = vmatpush1.bf16.msra.mxu0 0
        %1607 = vmatprep.subr.bf16.mxu0 0
        %1608 = vmatpush1.bf16.msra.mxu0 0
        %1609 = vmatprep.subr.bf16.mxu0 0
        %1610 = vmatpush1.bf16.msra.mxu0 0
        %1611 = vmatprep.subr.bf16.mxu0 0
        %1612 = vmatpush1.bf16.msra.mxu0 0
        %1613 = vmatprep.subr.bf16.mxu0 0
        %1614 = vmatpush1.bf16.msra.mxu0 0
        %1615 = vmatprep.subr.bf16.mxu0 0
        %1616 = vmatpush1.bf16.msra.mxu0 0
        %1617 = vmatprep.subr.bf16.mxu0 0
        %1618 = vmatpush1.bf16.msra.mxu0 0
        %1619 = vmatprep.mubr.bf16.mxu0 0
        %1620 = vmatmul.mubr.bf16.gmra.mrb[0].mxu0 %v1576
        %v1621 = vpop.f32.mrb[0].mxu0
        %v1622 = vadd.f32 0.0, %v1621
        %v1623 = vpop.f32.mrb[0].mxu0
        %v1624 = vpop.f32.mrb[0].mxu0
        %v1625 = vadd.f32 0.0, %v1624
        %v1626 = vpop.f32.mrb[0].mxu0
        %1627 = vmatprep.mubr.bf16.mxu0 0
        %1628 = vmatmul.mubr.bf16.gmra.mrb[0].mxu0 %v1579
        %v1629 = vpop.f32.mrb[0].mxu0
        %v1630 = vadd.f32 0.0, %v1629
        %v1631 = vpop.f32.mrb[0].mxu0
        %v1632 = vpop.f32.mrb[0].mxu0
        %v1633 = vadd.f32 0.0, %v1632
        %v1634 = vpop.f32.mrb[0].mxu0
        %1635 = vmatprep.mubr.bf16.mxu0 0
        %1636 = vmatmul.mubr.bf16.gmra.mrb[0].mxu0 %v1582
        %v1637 = vpop.f32.mrb[0].mxu0
        %v1638 = vadd.f32 0.0, %v1637
        %v1639 = vpop.f32.mrb[0].mxu0
        %v1640 = vpop.f32.mrb[0].mxu0
        %v1641 = vadd.f32 0.0, %v1640
        %v1642 = vpop.f32.mrb[0].mxu0
        %1643 = vmatprep.mubr.bf16.mxu0 0
        %1644 = vmatmul.mubr.bf16.gmra.mrb[0].mxu0 %v1585
        %v1645 = vpop.f32.mrb[0].mxu0
        %v1646 = vadd.f32 0.0, %v1645
        %v1647 = vpop.f32.mrb[0].mxu0
        %v1648 = vpop.f32.mrb[0].mxu0
        %v1649 = vadd.f32 0.0, %v1648
        %v1650 = vpop.f32.mrb[0].mxu0
        %1651 = vdwg.mxu0
        %v1652 = vpack.c.bf16 %v1625, %v1622
        %v1653 = vpack.c.bf16 %v1633, %v1630
        %v1654 = vpack.c.bf16 %v1641, %v1638
        %v1655 = vpack.c.bf16 %v1649, %v1646
        %s1656 = scalar_lea.vmem [#allocation4], 16
        %v1657 = vld [vmem:[%s1656] sm:$0xf]
        %v1658 = vld [vmem:[%s1656 + $0x4] sm:$0xf]
        %v1659 = vld [vmem:[%s1656 + $0x8] sm:$0xf]
        %v1660 = vld [vmem:[%s1656 + $0xc] sm:$0xf]
        %v1665 = vunpack.c.l.b16 %v1657
        %v1666 = vunpack.c.l.b16 %v1658
        %v1667 = vunpack.c.l.b16 %v1659
        %v1668 = vunpack.c.l.b16 %v1660
        %v1669 = vpack.c.b16 %v1666, %v1665
        %v1670 = vpack.c.b16 %v1668, %v1667
        %v1674 = vsel %vm302, %v1652, 0
        %v1677 = vsel %vm302, %v1653, 0
        %v1680 = vsel %vm302, %v1654, 0
        %v1683 = vsel %vm302, %v1655, 0
        %1685 = vmatprep.subr.bf16.mxu0 0
        %1686 = vmatpush1.bf16.msra.mxu0 %v1669
        %1687 = vmatprep.subr.bf16.mxu0 0
        %1688 = vmatpush1.bf16.msra.mxu0 %v1670
        %1689 = vmatprep.subr.bf16.mxu0 0
        %1690 = vmatpush1.bf16.msra.mxu0 0
        %1691 = vmatprep.subr.bf16.mxu0 0
        %1692 = vmatpush1.bf16.msra.mxu0 0
        %1693 = vmatprep.subr.bf16.mxu0 0
        %1694 = vmatpush1.bf16.msra.mxu0 0
        %1695 = vmatprep.subr.bf16.mxu0 0
        %1696 = vmatpush1.bf16.msra.mxu0 0
        %1697 = vmatprep.subr.bf16.mxu0 0
        %1698 = vmatpush1.bf16.msra.mxu0 0
        %1699 = vmatprep.subr.bf16.mxu0 0
        %1700 = vmatpush1.bf16.msra.mxu0 0
        %1701 = vmatprep.subr.bf16.mxu0 0
        %1702 = vmatpush1.bf16.msra.mxu0 0
        %1703 = vmatprep.subr.bf16.mxu0 0
        %1704 = vmatpush1.bf16.msra.mxu0 0
        %1705 = vmatprep.subr.bf16.mxu0 0
        %1706 = vmatpush1.bf16.msra.mxu0 0
        %1707 = vmatprep.subr.bf16.mxu0 0
        %1708 = vmatpush1.bf16.msra.mxu0 0
        %1709 = vmatprep.subr.bf16.mxu0 0
        %1710 = vmatpush1.bf16.msra.mxu0 0
        %1711 = vmatprep.subr.bf16.mxu0 0
        %1712 = vmatpush1.bf16.msra.mxu0 0
        %1713 = vmatprep.subr.bf16.mxu0 0
        %1714 = vmatpush1.bf16.msra.mxu0 0
        %1715 = vmatprep.subr.bf16.mxu0 0
        %1716 = vmatpush1.bf16.msra.mxu0 0
        %1717 = vmatprep.mubr.bf16.mxu0 0
        %1718 = vmatmul.mubr.bf16.gmra.mrb[0].mxu0 %v1674
        %v1719 = vpop.f32.mrb[0].mxu0
        %v1720 = vadd.f32 0.0, %v1719
        %v1721 = vpop.f32.mrb[0].mxu0
        %v1722 = vpop.f32.mrb[0].mxu0
        %v1723 = vadd.f32 0.0, %v1722
        %v1724 = vpop.f32.mrb[0].mxu0
        %1725 = vmatprep.mubr.bf16.mxu0 0
        %1726 = vmatmul.mubr.bf16.gmra.mrb[0].mxu0 %v1677
        %v1727 = vpop.f32.mrb[0].mxu0
        %v1728 = vadd.f32 0.0, %v1727
        %v1729 = vpop.f32.mrb[0].mxu0
        %v1730 = vpop.f32.mrb[0].mxu0
        %v1731 = vadd.f32 0.0, %v1730
        %v1732 = vpop.f32.mrb[0].mxu0
        %1733 = vmatprep.mubr.bf16.mxu0 0
        %1734 = vmatmul.mubr.bf16.gmra.mrb[0].mxu0 %v1680
        %v1735 = vpop.f32.mrb[0].mxu0
        %v1736 = vadd.f32 0.0, %v1735
        %v1737 = vpop.f32.mrb[0].mxu0
        %v1738 = vpop.f32.mrb[0].mxu0
        %v1739 = vadd.f32 0.0, %v1738
        %v1740 = vpop.f32.mrb[0].mxu0
        %1741 = vmatprep.mubr.bf16.mxu0 0
        %1742 = vmatmul.mubr.bf16.gmra.mrb[0].mxu0 %v1683
        %v1743 = vpop.f32.mrb[0].mxu0
        %v1744 = vadd.f32 0.0, %v1743
        %v1745 = vpop.f32.mrb[0].mxu0
        %v1746 = vpop.f32.mrb[0].mxu0
        %v1747 = vadd.f32 0.0, %v1746
        %v1748 = vpop.f32.mrb[0].mxu0
        %1749 = vdwg.mxu0
        %v1754 = vunpack.c.l.b16 %v1012
        %v1755 = vunpack.c.l.b16 %v1013
        %v1756 = vunpack.c.l.b16 %v1014
        %v1757 = vunpack.c.l.b16 %v1015
        %v1758 = vpack.c.b16 %v1755, %v1754
        %v1759 = vpack.c.b16 %v1757, %v1756
        %v1763 = vsel %vm302, %v1008, 0
        %v1766 = vsel %vm302, %v1009, 0
        %v1769 = vsel %vm302, %v1010, 0
        %v1772 = vsel %vm302, %v1011, 0
        %1774 = vmatprep.subr.bf16.mxu0 0
        %1775 = vmatpush1.bf16.msra.mxu0 %v1758
        %1776 = vmatprep.subr.bf16.mxu0 0
        %1777 = vmatpush1.bf16.msra.mxu0 %v1759
        %1778 = vmatprep.subr.bf16.mxu0 0
        %1779 = vmatpush1.bf16.msra.mxu0 0
        %1780 = vmatprep.subr.bf16.mxu0 0
        %1781 = vmatpush1.bf16.msra.mxu0 0
        %1782 = vmatprep.subr.bf16.mxu0 0
        %1783 = vmatpush1.bf16.msra.mxu0 0
        %1784 = vmatprep.subr.bf16.mxu0 0
        %1785 = vmatpush1.bf16.msra.mxu0 0
        %1786 = vmatprep.subr.bf16.mxu0 0
        %1787 = vmatpush1.bf16.msra.mxu0 0
        %1788 = vmatprep.subr.bf16.mxu0 0
        %1789 = vmatpush1.bf16.msra.mxu0 0
        %1790 = vmatprep.subr.bf16.mxu0 0
        %1791 = vmatpush1.bf16.msra.mxu0 0
        %1792 = vmatprep.subr.bf16.mxu0 0
        %1793 = vmatpush1.bf16.msra.mxu0 0
        %1794 = vmatprep.subr.bf16.mxu0 0
        %1795 = vmatpush1.bf16.msra.mxu0 0
        %1796 = vmatprep.subr.bf16.mxu0 0
        %1797 = vmatpush1.bf16.msra.mxu0 0
        %1798 = vmatprep.subr.bf16.mxu0 0
        %1799 = vmatpush1.bf16.msra.mxu0 0
        %1800 = vmatprep.subr.bf16.mxu0 0
        %1801 = vmatpush1.bf16.msra.mxu0 0
        %1802 = vmatprep.subr.bf16.mxu0 0
        %1803 = vmatpush1.bf16.msra.mxu0 0
        %1804 = vmatprep.subr.bf16.mxu0 0
        %1805 = vmatpush1.bf16.msra.mxu0 0
        %1806 = vmatprep.mubr.bf16.mxu0 0
        %1807 = vmatmul.mubr.bf16.gmra.mrb[0].mxu0 %v1763
        %v1808 = vpop.f32.mrb[0].mxu0
        %v1809 = vadd.f32 %v1720, %v1808
        %v1810 = vpop.f32.mrb[0].mxu0
        %v1811 = vpop.f32.mrb[0].mxu0
        %v1812 = vadd.f32 %v1723, %v1811
        %v1813 = vpop.f32.mrb[0].mxu0
        %1814 = vmatprep.mubr.bf16.mxu0 0
        %1815 = vmatmul.mubr.bf16.gmra.mrb[0].mxu0 %v1766
        %v1816 = vpop.f32.mrb[0].mxu0
        %v1817 = vadd.f32 %v1728, %v1816
        %v1818 = vpop.f32.mrb[0].mxu0
        %v1819 = vpop.f32.mrb[0].mxu0
        %v1820 = vadd.f32 %v1731, %v1819
        %v1821 = vpop.f32.mrb[0].mxu0
        %1822 = vmatprep.mubr.bf16.mxu0 0
        %1823 = vmatmul.mubr.bf16.gmra.mrb[0].mxu0 %v1769
        %v1824 = vpop.f32.mrb[0].mxu0
        %v1825 = vadd.f32 %v1736, %v1824
        %v1826 = vpop.f32.mrb[0].mxu0
        %v1827 = vpop.f32.mrb[0].mxu0
        %v1828 = vadd.f32 %v1739, %v1827
        %v1829 = vpop.f32.mrb[0].mxu0
        %1830 = vmatprep.mubr.bf16.mxu0 0
        %1831 = vmatmul.mubr.bf16.gmra.mrb[0].mxu0 %v1772
        %v1832 = vpop.f32.mrb[0].mxu0
        %v1833 = vadd.f32 %v1744, %v1832
        %v1834 = vpop.f32.mrb[0].mxu0
        %v1835 = vpop.f32.mrb[0].mxu0
        %v1836 = vadd.f32 %v1747, %v1835
        %v1837 = vpop.f32.mrb[0].mxu0
        %1838 = vdwg.mxu0
        %s1839 = scalar_lea.vmem %s1, 32
        %v1840 = vld [vmem:[%s1839] sm:$0xf]
        %v1841 = vld [vmem:[%s1839 + $0x4] sm:$0xf]
        %v1842 = vld [vmem:[%s1839 + $0x8] sm:$0xf]
        %v1843 = vld [vmem:[%s1839 + $0xc] sm:$0xf]
        %v1848 = vunpack.c.l.b16 %v1840
        %v1849 = vunpack.c.l.b16 %v1841
        %v1850 = vunpack.c.l.b16 %v1842
        %v1851 = vunpack.c.l.b16 %v1843
        %v1852 = vpack.c.b16 %v1849, %v1848
        %v1853 = vpack.c.b16 %v1851, %v1850
        %1856 = vmatprep.subr.bf16.mxu0 0
        %1857 = vmatpush1.bf16.msra.mxu0 %v1852
        %1858 = vmatprep.subr.bf16.mxu0 0
        %1859 = vmatpush1.bf16.msra.mxu0 %v1853
        %1860 = vmatprep.subr.bf16.mxu0 0
        %1861 = vmatpush1.bf16.msra.mxu0 0
        %1862 = vmatprep.subr.bf16.mxu0 0
        %1863 = vmatpush1.bf16.msra.mxu0 0
        %1864 = vmatprep.subr.bf16.mxu0 0
        %1865 = vmatpush1.bf16.msra.mxu0 0
        %1866 = vmatprep.subr.bf16.mxu0 0
        %1867 = vmatpush1.bf16.msra.mxu0 0
        %1868 = vmatprep.subr.bf16.mxu0 0
        %1869 = vmatpush1.bf16.msra.mxu0 0
        %1870 = vmatprep.subr.bf16.mxu0 0
        %1871 = vmatpush1.bf16.msra.mxu0 0
        %1872 = vmatprep.subr.bf16.mxu0 0
        %1873 = vmatpush1.bf16.msra.mxu0 0
        %1874 = vmatprep.subr.bf16.mxu0 0
        %1875 = vmatpush1.bf16.msra.mxu0 0
        %1876 = vmatprep.subr.bf16.mxu0 0
        %1877 = vmatpush1.bf16.msra.mxu0 0
        %1878 = vmatprep.subr.bf16.mxu0 0
        %1879 = vmatpush1.bf16.msra.mxu0 0
        %1880 = vmatprep.subr.bf16.mxu0 0
        %1881 = vmatpush1.bf16.msra.mxu0 0
        %1882 = vmatprep.subr.bf16.mxu0 0
        %1883 = vmatpush1.bf16.msra.mxu0 0
        %1884 = vmatprep.subr.bf16.mxu0 0
        %1885 = vmatpush1.bf16.msra.mxu0 0
        %1886 = vmatprep.subr.bf16.mxu0 0
        %1887 = vmatpush1.bf16.msra.mxu0 0
        %1888 = vmatprep.mubr.bf16.mxu0 0
        %1889 = vmatmul.mubr.bf16.gmra.mrb[0].mxu0 %v373
        %v1890 = vpop.f32.mrb[0].mxu0
        %v1891 = vadd.f32 0.0, %v1890
        %v1892 = vpop.f32.mrb[0].mxu0
        %v1893 = vpop.f32.mrb[0].mxu0
        %v1894 = vadd.f32 0.0, %v1893
        %v1895 = vpop.f32.mrb[0].mxu0
        %1896 = vmatprep.mubr.bf16.mxu0 0
        %1897 = vmatmul.mubr.bf16.gmra.mrb[0].mxu0 %v376
        %v1898 = vpop.f32.mrb[0].mxu0
        %v1899 = vadd.f32 0.0, %v1898
        %v1900 = vpop.f32.mrb[0].mxu0
        %v1901 = vpop.f32.mrb[0].mxu0
        %v1902 = vadd.f32 0.0, %v1901
        %v1903 = vpop.f32.mrb[0].mxu0
        %1904 = vmatprep.mubr.bf16.mxu0 0
        %1905 = vmatmul.mubr.bf16.gmra.mrb[0].mxu0 %v379
        %v1906 = vpop.f32.mrb[0].mxu0
        %v1907 = vadd.f32 0.0, %v1906
        %v1908 = vpop.f32.mrb[0].mxu0
        %v1909 = vpop.f32.mrb[0].mxu0
        %v1910 = vadd.f32 0.0, %v1909
        %v1911 = vpop.f32.mrb[0].mxu0
        %1912 = vmatprep.mubr.bf16.mxu0 0
        %1913 = vmatmul.mubr.bf16.gmra.mrb[0].mxu0 %v382
        %v1914 = vpop.f32.mrb[0].mxu0
        %v1915 = vadd.f32 0.0, %v1914
        %v1916 = vpop.f32.mrb[0].mxu0
        %v1917 = vpop.f32.mrb[0].mxu0
        %v1918 = vadd.f32 0.0, %v1917
        %v1919 = vpop.f32.mrb[0].mxu0
        %1920 = vdwg.mxu0
        %s1921 = scalar_lea.vmem %s2, 32
        %v1922 = vld [vmem:[%s1921] sm:$0xf]
        %v1923 = vld [vmem:[%s1921 + $0x4] sm:$0xf]
        %v1924 = vld [vmem:[%s1921 + $0x8] sm:$0xf]
        %v1925 = vld [vmem:[%s1921 + $0xc] sm:$0xf]
        %v1930 = vunpack.c.l.b16 %v1922
        %v1931 = vunpack.c.l.b16 %v1923
        %v1932 = vunpack.c.l.b16 %v1924
        %v1933 = vunpack.c.l.b16 %v1925
        %v1934 = vpack.c.b16 %v1931, %v1930
        %v1935 = vpack.c.b16 %v1933, %v1932
        %1938 = vmatprep.subr.bf16.mxu0 0
        %1939 = vmatpush1.bf16.msra.mxu0 %v1934
        %1940 = vmatprep.subr.bf16.mxu0 0
        %1941 = vmatpush1.bf16.msra.mxu0 %v1935
        %1942 = vmatprep.subr.bf16.mxu0 0
        %1943 = vmatpush1.bf16.msra.mxu0 0
        %1944 = vmatprep.subr.bf16.mxu0 0
        %1945 = vmatpush1.bf16.msra.mxu0 0
        %1946 = vmatprep.subr.bf16.mxu0 0
        %1947 = vmatpush1.bf16.msra.mxu0 0
        %1948 = vmatprep.subr.bf16.mxu0 0
        %1949 = vmatpush1.bf16.msra.mxu0 0
        %1950 = vmatprep.subr.bf16.mxu0 0
        %1951 = vmatpush1.bf16.msra.mxu0 0
        %1952 = vmatprep.subr.bf16.mxu0 0
        %1953 = vmatpush1.bf16.msra.mxu0 0
        %1954 = vmatprep.subr.bf16.mxu0 0
        %1955 = vmatpush1.bf16.msra.mxu0 0
        %1956 = vmatprep.subr.bf16.mxu0 0
        %1957 = vmatpush1.bf16.msra.mxu0 0
        %1958 = vmatprep.subr.bf16.mxu0 0
        %1959 = vmatpush1.bf16.msra.mxu0 0
        %1960 = vmatprep.subr.bf16.mxu0 0
        %1961 = vmatpush1.bf16.msra.mxu0 0
        %1962 = vmatprep.subr.bf16.mxu0 0
        %1963 = vmatpush1.bf16.msra.mxu0 0
        %1964 = vmatprep.subr.bf16.mxu0 0
        %1965 = vmatpush1.bf16.msra.mxu0 0
        %1966 = vmatprep.subr.bf16.mxu0 0
        %1967 = vmatpush1.bf16.msra.mxu0 0
        %1968 = vmatprep.subr.bf16.mxu0 0
        %1969 = vmatpush1.bf16.msra.mxu0 0
        %1970 = vmatprep.mubr.bf16.mxu0 0
        %1971 = vmatmul.mubr.bf16.gmra.mrb[0].mxu0 %v373
        %v1972 = vpop.f32.mrb[0].mxu0
        %v1973 = vadd.f32 0.0, %v1972
        %v1974 = vpop.f32.mrb[0].mxu0
        %v1975 = vpop.f32.mrb[0].mxu0
        %v1976 = vadd.f32 0.0, %v1975
        %v1977 = vpop.f32.mrb[0].mxu0
        %1978 = vmatprep.mubr.bf16.mxu0 0
        %1979 = vmatmul.mubr.bf16.gmra.mrb[0].mxu0 %v376
        %v1980 = vpop.f32.mrb[0].mxu0
        %v1981 = vadd.f32 0.0, %v1980
        %v1982 = vpop.f32.mrb[0].mxu0
        %v1983 = vpop.f32.mrb[0].mxu0
        %v1984 = vadd.f32 0.0, %v1983
        %v1985 = vpop.f32.mrb[0].mxu0
        %1986 = vmatprep.mubr.bf16.mxu0 0
        %1987 = vmatmul.mubr.bf16.gmra.mrb[0].mxu0 %v379
        %v1988 = vpop.f32.mrb[0].mxu0
        %v1989 = vadd.f32 0.0, %v1988
        %v1990 = vpop.f32.mrb[0].mxu0
        %v1991 = vpop.f32.mrb[0].mxu0
        %v1992 = vadd.f32 0.0, %v1991
        %v1993 = vpop.f32.mrb[0].mxu0
        %1994 = vmatprep.mubr.bf16.mxu0 0
        %1995 = vmatmul.mubr.bf16.gmra.mrb[0].mxu0 %v382
        %v1996 = vpop.f32.mrb[0].mxu0
        %v1997 = vadd.f32 0.0, %v1996
        %v1998 = vpop.f32.mrb[0].mxu0
        %v1999 = vpop.f32.mrb[0].mxu0
        %v2000 = vadd.f32 0.0, %v1999
        %v2001 = vpop.f32.mrb[0].mxu0
        %2002 = vdwg.mxu0
        %s2003 = scalar_lea.vmem [#allocation2], 32
        %v2004 = vld [vmem:[%s2003] sm:$0xf]
        %v2005 = vld [vmem:[%s2003 + $0x4] sm:$0xf]
        %v2006 = vld [vmem:[%s2003 + $0x8] sm:$0xf]
        %v2007 = vld [vmem:[%s2003 + $0xc] sm:$0xf]
        %v2012 = vunpack.c.l.b16 %v2004
        %v2013 = vunpack.c.l.b16 %v2005
        %v2014 = vunpack.c.l.b16 %v2006
        %v2015 = vunpack.c.l.b16 %v2007
        %v2016 = vpack.c.b16 %v2013, %v2012
        %v2017 = vpack.c.b16 %v2015, %v2014
        %2020 = vmatprep.subr.bf16.mxu0 0
        %2021 = vmatpush1.bf16.msra.mxu0 %v2016
        %2022 = vmatprep.subr.bf16.mxu0 0
        %2023 = vmatpush1.bf16.msra.mxu0 %v2017
        %2024 = vmatprep.subr.bf16.mxu0 0
        %2025 = vmatpush1.bf16.msra.mxu0 0
        %2026 = vmatprep.subr.bf16.mxu0 0
        %2027 = vmatpush1.bf16.msra.mxu0 0
        %2028 = vmatprep.subr.bf16.mxu0 0
        %2029 = vmatpush1.bf16.msra.mxu0 0
        %2030 = vmatprep.subr.bf16.mxu0 0
        %2031 = vmatpush1.bf16.msra.mxu0 0
        %2032 = vmatprep.subr.bf16.mxu0 0
        %2033 = vmatpush1.bf16.msra.mxu0 0
        %2034 = vmatprep.subr.bf16.mxu0 0
        %2035 = vmatpush1.bf16.msra.mxu0 0
        %2036 = vmatprep.subr.bf16.mxu0 0
        %2037 = vmatpush1.bf16.msra.mxu0 0
        %2038 = vmatprep.subr.bf16.mxu0 0
        %2039 = vmatpush1.bf16.msra.mxu0 0
        %2040 = vmatprep.subr.bf16.mxu0 0
        %2041 = vmatpush1.bf16.msra.mxu0 0
        %2042 = vmatprep.subr.bf16.mxu0 0
        %2043 = vmatpush1.bf16.msra.mxu0 0
        %2044 = vmatprep.subr.bf16.mxu0 0
        %2045 = vmatpush1.bf16.msra.mxu0 0
        %2046 = vmatprep.subr.bf16.mxu0 0
        %2047 = vmatpush1.bf16.msra.mxu0 0
        %2048 = vmatprep.subr.bf16.mxu0 0
        %2049 = vmatpush1.bf16.msra.mxu0 0
        %2050 = vmatprep.subr.bf16.mxu0 0
        %2051 = vmatpush1.bf16.msra.mxu0 0
        %2052 = vmatprep.mubr.bf16.mxu0 0
        %2053 = vmatmul.mubr.bf16.gmra.mrb[0].mxu0 %v373
        %v2054 = vpop.f32.mrb[0].mxu0
        %v2055 = vadd.f32 0.0, %v2054
        %v2056 = vpop.f32.mrb[0].mxu0
        %v2057 = vpop.f32.mrb[0].mxu0
        %v2058 = vadd.f32 0.0, %v2057
        %v2059 = vpop.f32.mrb[0].mxu0
        %2060 = vmatprep.mubr.bf16.mxu0 0
        %2061 = vmatmul.mubr.bf16.gmra.mrb[0].mxu0 %v376
        %v2062 = vpop.f32.mrb[0].mxu0
        %v2063 = vadd.f32 0.0, %v2062
        %v2064 = vpop.f32.mrb[0].mxu0
        %v2065 = vpop.f32.mrb[0].mxu0
        %v2066 = vadd.f32 0.0, %v2065
        %v2067 = vpop.f32.mrb[0].mxu0
        %2068 = vmatprep.mubr.bf16.mxu0 0
        %2069 = vmatmul.mubr.bf16.gmra.mrb[0].mxu0 %v379
        %v2070 = vpop.f32.mrb[0].mxu0
        %v2071 = vadd.f32 0.0, %v2070
        %v2072 = vpop.f32.mrb[0].mxu0
        %v2073 = vpop.f32.mrb[0].mxu0
        %v2074 = vadd.f32 0.0, %v2073
        %v2075 = vpop.f32.mrb[0].mxu0
        %2076 = vmatprep.mubr.bf16.mxu0 0
        %2077 = vmatmul.mubr.bf16.gmra.mrb[0].mxu0 %v382
        %v2078 = vpop.f32.mrb[0].mxu0
        %v2079 = vadd.f32 0.0, %v2078
        %v2080 = vpop.f32.mrb[0].mxu0
        %v2081 = vpop.f32.mrb[0].mxu0
        %v2082 = vadd.f32 0.0, %v2081
        %v2083 = vpop.f32.mrb[0].mxu0
        %2084 = vdwg.mxu0
        %v2085 = vmul.f32 %v1891, %v1891
        %v2086 = vmul.f32 %v1894, %v1894
        %v2087 = vmul.f32 %v1899, %v1899
        %v2088 = vmul.f32 %v1902, %v1902
        %v2089 = vmul.f32 %v1907, %v1907
        %v2090 = vmul.f32 %v1910, %v1910
        %v2091 = vmul.f32 %v1915, %v1915
        %v2092 = vmul.f32 %v1918, %v1918
        %v2093 = vsel %vm302, %v2085, 0.0
        %2094 = vadd.xlane.f32.xlu0 %v2093
        %v2095 = vpop.xlane.xlu0 %2094
        %v2096 = vsel %vm302, %v2086, 0.0
        %2097 = vadd.xlane.f32.xlu0 %v2096
        %v2098 = vpop.xlane.xlu0 %2097
        %v2099 = vsel %vm302, %v2087, 0.0
        %2100 = vadd.xlane.f32.xlu0 %v2099
        %v2101 = vpop.xlane.xlu0 %2100
        %v2102 = vsel %vm302, %v2088, 0.0
        %2103 = vadd.xlane.f32.xlu0 %v2102
        %v2104 = vpop.xlane.xlu0 %2103
        %v2105 = vsel %vm302, %v2089, 0.0
        %2106 = vadd.xlane.f32.xlu0 %v2105
        %v2107 = vpop.xlane.xlu0 %2106
        %v2108 = vsel %vm302, %v2090, 0.0
        %2109 = vadd.xlane.f32.xlu0 %v2108
        %v2110 = vpop.xlane.xlu0 %2109
        %v2111 = vsel %vm302, %v2091, 0.0
        %2112 = vadd.xlane.f32.xlu0 %v2111
        %v2113 = vpop.xlane.xlu0 %2112
        %v2114 = vsel %vm302, %v2092, 0.0
        %2115 = vadd.xlane.f32.xlu0 %v2114
        %v2116 = vpop.xlane.xlu0 %2115
        %v2117 = vmax.f32 %v2095, 1e-24
        %v2118 = vmax.f32 %v2098, 1e-24
        %v2119 = vmax.f32 %v2101, 1e-24
        %v2120 = vmax.f32 %v2104, 1e-24
        %v2121 = vmax.f32 %v2107, 1e-24
        %v2122 = vmax.f32 %v2110, 1e-24
        %v2123 = vmax.f32 %v2113, 1e-24
        %v2124 = vmax.f32 %v2116, 1e-24
        %v2125 = vrsqrt.pop %v2117
        %v2126 = vrsqrt.pop %v2118
        %v2127 = vrsqrt.pop %v2119
        %v2128 = vrsqrt.pop %v2120
        %v2129 = vrsqrt.pop %v2121
        %v2130 = vrsqrt.pop %v2122
        %v2131 = vrsqrt.pop %v2123
        %v2132 = vrsqrt.pop %v2124
        %v2133 = vmul.f32 %v1891, %v2125
        %v2134 = vmul.f32 %v1894, %v2126
        %v2135 = vmul.f32 %v1899, %v2127
        %v2136 = vmul.f32 %v1902, %v2128
        %v2137 = vmul.f32 %v1907, %v2129
        %v2138 = vmul.f32 %v1910, %v2130
        %v2139 = vmul.f32 %v1915, %v2131
        %v2140 = vmul.f32 %v1918, %v2132
        %v2141 = vpack.c.bf16 %v2134, %v2133
        %v2142 = vpack.c.bf16 %v2136, %v2135
        %v2143 = vpack.c.bf16 %v2138, %v2137
        %v2144 = vpack.c.bf16 %v2140, %v2139
        %v2145 = vmul.f32 %v1973, %v1973
        %v2146 = vmul.f32 %v1976, %v1976
        %v2147 = vmul.f32 %v1981, %v1981
        %v2148 = vmul.f32 %v1984, %v1984
        %v2149 = vmul.f32 %v1989, %v1989
        %v2150 = vmul.f32 %v1992, %v1992
        %v2151 = vmul.f32 %v1997, %v1997
        %v2152 = vmul.f32 %v2000, %v2000
        %v2153 = vsel %vm302, %v2145, 0.0
        %2154 = vadd.xlane.f32.xlu0 %v2153
        %v2155 = vpop.xlane.xlu0 %2154
        %v2156 = vsel %vm302, %v2146, 0.0
        %2157 = vadd.xlane.f32.xlu0 %v2156
        %v2158 = vpop.xlane.xlu0 %2157
        %v2159 = vsel %vm302, %v2147, 0.0
        %2160 = vadd.xlane.f32.xlu0 %v2159
        %v2161 = vpop.xlane.xlu0 %2160
        %v2162 = vsel %vm302, %v2148, 0.0
        %2163 = vadd.xlane.f32.xlu0 %v2162
        %v2164 = vpop.xlane.xlu0 %2163
        %v2165 = vsel %vm302, %v2149, 0.0
        %2166 = vadd.xlane.f32.xlu0 %v2165
        %v2167 = vpop.xlane.xlu0 %2166
        %v2168 = vsel %vm302, %v2150, 0.0
        %2169 = vadd.xlane.f32.xlu0 %v2168
        %v2170 = vpop.xlane.xlu0 %2169
        %v2171 = vsel %vm302, %v2151, 0.0
        %2172 = vadd.xlane.f32.xlu0 %v2171
        %v2173 = vpop.xlane.xlu0 %2172
        %v2174 = vsel %vm302, %v2152, 0.0
        %2175 = vadd.xlane.f32.xlu0 %v2174
        %v2176 = vpop.xlane.xlu0 %2175
        %v2177 = vmax.f32 %v2155, 1e-24
        %v2178 = vmax.f32 %v2158, 1e-24
        %v2179 = vmax.f32 %v2161, 1e-24
        %v2180 = vmax.f32 %v2164, 1e-24
        %v2181 = vmax.f32 %v2167, 1e-24
        %v2182 = vmax.f32 %v2170, 1e-24
        %v2183 = vmax.f32 %v2173, 1e-24
        %v2184 = vmax.f32 %v2176, 1e-24
        %v2185 = vrsqrt.pop %v2177
        %v2186 = vrsqrt.pop %v2178
        %v2187 = vrsqrt.pop %v2179
        %v2188 = vrsqrt.pop %v2180
        %v2189 = vrsqrt.pop %v2181
        %v2190 = vrsqrt.pop %v2182
        %v2191 = vrsqrt.pop %v2183
        %v2192 = vrsqrt.pop %v2184
        %v2193 = vmul.f32 %v1973, %v2185
        %v2194 = vmul.f32 %v1976, %v2186
        %v2195 = vmul.f32 %v1981, %v2187
        %v2196 = vmul.f32 %v1984, %v2188
        %v2197 = vmul.f32 %v1989, %v2189
        %v2198 = vmul.f32 %v1992, %v2190
        %v2199 = vmul.f32 %v1997, %v2191
        %v2200 = vmul.f32 %v2000, %v2192
        %v2201 = vmul.f32 %v2193, %v731
        %v2202 = vmul.f32 %v2194, %v731
        %v2203 = vmul.f32 %v2195, %v731
        %v2204 = vmul.f32 %v2196, %v731
        %v2205 = vmul.f32 %v2197, %v731
        %v2206 = vmul.f32 %v2198, %v731
        %v2207 = vmul.f32 %v2199, %v731
        %v2208 = vmul.f32 %v2200, %v731
        %v2209 = vpack.c.bf16 %v2202, %v2201
        %v2210 = vpack.c.bf16 %v2204, %v2203
        %v2211 = vpack.c.bf16 %v2206, %v2205
        %v2212 = vpack.c.bf16 %v2208, %v2207
        %v2213 = vpack.c.bf16 %v2058, %v2055
        %v2214 = vpack.c.bf16 %v2066, %v2063
        %v2215 = vpack.c.bf16 %v2074, %v2071
        %v2216 = vpack.c.bf16 %v2082, %v2079
        %v2218 = vsel %vm302, %v2141, 0
        %v2221 = vsel %vm302, %v2142, 0
        %v2224 = vsel %vm302, %v2143, 0
        %v2227 = vsel %vm302, %v2144, 0
        %v2230 = vsel %vm302, %v2209, 0
        %v2233 = vsel %vm302, %v2210, 0
        %v2236 = vsel %vm302, %v2211, 0
        %v2239 = vsel %vm302, %v2212, 0
        %2241 = vmatprep.subr.bf16.mxu0 0
        %2242 = vmatpush1.bf16.xpose.msra.mxu0 %v2230
        %2243 = vmatprep.subr.bf16.mxu0 0
        %2244 = vmatpush1.bf16.xpose.msra.mxu0 %v2233
        %2245 = vmatprep.subr.bf16.mxu0 0
        %2246 = vmatpush1.bf16.xpose.msra.mxu0 %v2236
        %2247 = vmatprep.subr.bf16.mxu0 0
        %2248 = vmatpush1.bf16.xpose.msra.mxu0 %v2239
        %2249 = vmatprep.subr.bf16.mxu0 0
        %2250 = vmatpush1.bf16.xpose.msra.mxu0 0
        %2251 = vmatprep.subr.bf16.mxu0 0
        %2252 = vmatpush1.bf16.xpose.msra.mxu0 0
        %2253 = vmatprep.subr.bf16.mxu0 0
        %2254 = vmatpush1.bf16.xpose.msra.mxu0 0
        %2255 = vmatprep.subr.bf16.mxu0 0
        %2256 = vmatpush1.bf16.xpose.msra.mxu0 0
        %2257 = vmatprep.subr.bf16.mxu0 0
        %2258 = vmatpush1.bf16.xpose.msra.mxu0 0
        %2259 = vmatprep.subr.bf16.mxu0 0
        %2260 = vmatpush1.bf16.xpose.msra.mxu0 0
        %2261 = vmatprep.subr.bf16.mxu0 0
        %2262 = vmatpush1.bf16.xpose.msra.mxu0 0
        %2263 = vmatprep.subr.bf16.mxu0 0
        %2264 = vmatpush1.bf16.xpose.msra.mxu0 0
        %2265 = vmatprep.subr.bf16.mxu0 0
        %2266 = vmatpush1.bf16.xpose.msra.mxu0 0
        %2267 = vmatprep.subr.bf16.mxu0 0
        %2268 = vmatpush1.bf16.xpose.msra.mxu0 0
        %2269 = vmatprep.subr.bf16.mxu0 0
        %2270 = vmatpush1.bf16.xpose.msra.mxu0 0
        %2271 = vmatprep.subr.bf16.mxu0 0
        %2272 = vmatpush1.bf16.xpose.msra.mxu0 0
        %2273 = vmatprep.mubr.bf16.mxu0 0
        %2274 = vmatmul.mubr.bf16.gmra.mrb[0].mxu0 %v2218
        %v2275 = vpop.f32.mrb[0].mxu0
        %v2276 = vadd.f32 0.0, %v2275
        %v2277 = vpop.f32.mrb[0].mxu0
        %v2278 = vpop.f32.mrb[0].mxu0
        %v2279 = vadd.f32 0.0, %v2278
        %v2280 = vpop.f32.mrb[0].mxu0
        %2281 = vmatprep.mubr.bf16.mxu0 0
        %2282 = vmatmul.mubr.bf16.gmra.mrb[0].mxu0 %v2221
        %v2283 = vpop.f32.mrb[0].mxu0
        %v2284 = vadd.f32 0.0, %v2283
        %v2285 = vpop.f32.mrb[0].mxu0
        %v2286 = vpop.f32.mrb[0].mxu0
        %v2287 = vadd.f32 0.0, %v2286
        %v2288 = vpop.f32.mrb[0].mxu0
        %2289 = vmatprep.mubr.bf16.mxu0 0
        %2290 = vmatmul.mubr.bf16.gmra.mrb[0].mxu0 %v2224
        %v2291 = vpop.f32.mrb[0].mxu0
        %v2292 = vadd.f32 0.0, %v2291
        %v2293 = vpop.f32.mrb[0].mxu0
        %v2294 = vpop.f32.mrb[0].mxu0
        %v2295 = vadd.f32 0.0, %v2294
        %v2296 = vpop.f32.mrb[0].mxu0
        %2297 = vmatprep.mubr.bf16.mxu0 0
        %2298 = vmatmul.mubr.bf16.gmra.mrb[0].mxu0 %v2227
        %v2299 = vpop.f32.mrb[0].mxu0
        %v2300 = vadd.f32 0.0, %v2299
        %v2301 = vpop.f32.mrb[0].mxu0
        %v2302 = vpop.f32.mrb[0].mxu0
        %v2303 = vadd.f32 0.0, %v2302
        %v2304 = vpop.f32.mrb[0].mxu0
        %2305 = vdwg.mxu0
        %v2306 = vsel %vm838, %v2276, -inf
        %2307 = vmax.xlane.f32.xlu0 %v2306
        %v2308 = vpop.xlane.xlu0 %2307
        %v2309 = vsel %vm838, %v2279, -inf
        %2310 = vmax.xlane.f32.xlu0 %v2309
        %v2311 = vpop.xlane.xlu0 %2310
        %v2312 = vsel %vm838, %v2284, -inf
        %2313 = vmax.xlane.f32.xlu0 %v2312
        %v2314 = vpop.xlane.xlu0 %2313
        %v2315 = vsel %vm838, %v2287, -inf
        %2316 = vmax.xlane.f32.xlu0 %v2315
        %v2317 = vpop.xlane.xlu0 %2316
        %v2318 = vsel %vm838, %v2292, -inf
        %2319 = vmax.xlane.f32.xlu0 %v2318
        %v2320 = vpop.xlane.xlu0 %2319
        %v2321 = vsel %vm838, %v2295, -inf
        %2322 = vmax.xlane.f32.xlu0 %v2321
        %v2323 = vpop.xlane.xlu0 %2322
        %v2324 = vsel %vm838, %v2300, -inf
        %2325 = vmax.xlane.f32.xlu0 %v2324
        %v2326 = vpop.xlane.xlu0 %2325
        %v2327 = vsel %vm838, %v2303, -inf
        %2328 = vmax.xlane.f32.xlu0 %v2327
        %v2329 = vpop.xlane.xlu0 %2328
        %v2330 = vsub.f32 %v2276, %v2308
        %v2331 = vsub.f32 %v2279, %v2311
        %v2332 = vsub.f32 %v2284, %v2314
        %v2333 = vsub.f32 %v2287, %v2317
        %v2334 = vsub.f32 %v2292, %v2320
        %v2335 = vsub.f32 %v2295, %v2323
        %v2336 = vsub.f32 %v2300, %v2326
        %v2337 = vsub.f32 %v2303, %v2329
        %v2338 = vmul.f32 %v2330, 1.442695
        %v2339 = vpow.pop %v2338
        %v2340 = vmul.f32 %v2331, 1.442695
        %v2341 = vpow.pop %v2340
        %v2342 = vmul.f32 %v2332, 1.442695
        %v2343 = vpow.pop %v2342
        %v2344 = vmul.f32 %v2333, 1.442695
        %v2345 = vpow.pop %v2344
        %v2346 = vmul.f32 %v2334, 1.442695
        %v2347 = vpow.pop %v2346
        %v2348 = vmul.f32 %v2335, 1.442695
        %v2349 = vpow.pop %v2348
        %v2350 = vmul.f32 %v2336, 1.442695
        %v2351 = vpow.pop %v2350
        %v2352 = vmul.f32 %v2337, 1.442695
        %v2353 = vpow.pop %v2352
        %v2354 = vsel %vm838, %v2339, 0.0
        %2355 = vadd.xlane.f32.xlu0 %v2354
        %v2356 = vpop.xlane.xlu0 %2355
        %v2357 = vsel %vm838, %v2341, 0.0
        %2358 = vadd.xlane.f32.xlu0 %v2357
        %v2359 = vpop.xlane.xlu0 %2358
        %v2360 = vsel %vm838, %v2343, 0.0
        %2361 = vadd.xlane.f32.xlu0 %v2360
        %v2362 = vpop.xlane.xlu0 %2361
        %v2363 = vsel %vm838, %v2345, 0.0
        %2364 = vadd.xlane.f32.xlu0 %v2363
        %v2365 = vpop.xlane.xlu0 %2364
        %v2366 = vsel %vm838, %v2347, 0.0
        %2367 = vadd.xlane.f32.xlu0 %v2366
        %v2368 = vpop.xlane.xlu0 %2367
        %v2369 = vsel %vm838, %v2349, 0.0
        %2370 = vadd.xlane.f32.xlu0 %v2369
        %v2371 = vpop.xlane.xlu0 %2370
        %v2372 = vsel %vm838, %v2351, 0.0
        %2373 = vadd.xlane.f32.xlu0 %v2372
        %v2374 = vpop.xlane.xlu0 %2373
        %v2375 = vsel %vm838, %v2353, 0.0
        %2376 = vadd.xlane.f32.xlu0 %v2375
        %v2377 = vpop.xlane.xlu0 %2376
        %v2378 = vrcp.pop %v2356
        %v2379 = vrcp.pop %v2359
        %v2380 = vrcp.pop %v2362
        %v2381 = vrcp.pop %v2365
        %v2382 = vrcp.pop %v2368
        %v2383 = vrcp.pop %v2371
        %v2384 = vrcp.pop %v2374
        %v2385 = vrcp.pop %v2377
        %v2386 = vmul.f32 %v2339, %v2378
        %v2387 = vmul.f32 %v2341, %v2379
        %v2388 = vmul.f32 %v2343, %v2380
        %v2389 = vmul.f32 %v2345, %v2381
        %v2390 = vmul.f32 %v2347, %v2382
        %v2391 = vmul.f32 %v2349, %v2383
        %v2392 = vmul.f32 %v2351, %v2384
        %v2393 = vmul.f32 %v2353, %v2385
        %v2394 = vpack.c.bf16 %v2387, %v2386
        %v2395 = vpack.c.bf16 %v2389, %v2388
        %v2396 = vpack.c.bf16 %v2391, %v2390
        %v2397 = vpack.c.bf16 %v2393, %v2392
        %v2399 = vsel %vm838, %v2394, 0
        %v2402 = vsel %vm838, %v2395, 0
        %v2405 = vsel %vm838, %v2396, 0
        %v2408 = vsel %vm838, %v2397, 0
        %2410 = vmatprep.subr.bf16.mxu0 0
        %2411 = vmatpush1.bf16.msra.mxu0 %v2213
        %2412 = vmatprep.subr.bf16.mxu0 0
        %2413 = vmatpush1.bf16.msra.mxu0 %v2214
        %2414 = vmatprep.subr.bf16.mxu0 0
        %2415 = vmatpush1.bf16.msra.mxu0 %v2215
        %2416 = vmatprep.subr.bf16.mxu0 0
        %2417 = vmatpush1.bf16.msra.mxu0 %v2216
        %2418 = vmatprep.subr.bf16.mxu0 0
        %2419 = vmatpush1.bf16.msra.mxu0 0
        %2420 = vmatprep.subr.bf16.mxu0 0
        %2421 = vmatpush1.bf16.msra.mxu0 0
        %2422 = vmatprep.subr.bf16.mxu0 0
        %2423 = vmatpush1.bf16.msra.mxu0 0
        %2424 = vmatprep.subr.bf16.mxu0 0
        %2425 = vmatpush1.bf16.msra.mxu0 0
        %2426 = vmatprep.subr.bf16.mxu0 0
        %2427 = vmatpush1.bf16.msra.mxu0 0
        %2428 = vmatprep.subr.bf16.mxu0 0
        %2429 = vmatpush1.bf16.msra.mxu0 0
        %2430 = vmatprep.subr.bf16.mxu0 0
        %2431 = vmatpush1.bf16.msra.mxu0 0
        %2432 = vmatprep.subr.bf16.mxu0 0
        %2433 = vmatpush1.bf16.msra.mxu0 0
        %2434 = vmatprep.subr.bf16.mxu0 0
        %2435 = vmatpush1.bf16.msra.mxu0 0
        %2436 = vmatprep.subr.bf16.mxu0 0
        %2437 = vmatpush1.bf16.msra.mxu0 0
        %2438 = vmatprep.subr.bf16.mxu0 0
        %2439 = vmatpush1.bf16.msra.mxu0 0
        %2440 = vmatprep.subr.bf16.mxu0 0
        %2441 = vmatpush1.bf16.msra.mxu0 0
        %2442 = vmatprep.mubr.bf16.mxu0 0
        %2443 = vmatmul.mubr.bf16.gmra.mrb[0].mxu0 %v2399
        %v2444 = vpop.f32.mrb[0].mxu0
        %v2445 = vadd.f32 0.0, %v2444
        %v2446 = vpop.f32.mrb[0].mxu0
        %v2447 = vpop.f32.mrb[0].mxu0
        %v2448 = vadd.f32 0.0, %v2447
        %v2449 = vpop.f32.mrb[0].mxu0
        %2450 = vmatprep.mubr.bf16.mxu0 0
        %2451 = vmatmul.mubr.bf16.gmra.mrb[0].mxu0 %v2402
        %v2452 = vpop.f32.mrb[0].mxu0
        %v2453 = vadd.f32 0.0, %v2452
        %v2454 = vpop.f32.mrb[0].mxu0
        %v2455 = vpop.f32.mrb[0].mxu0
        %v2456 = vadd.f32 0.0, %v2455
        %v2457 = vpop.f32.mrb[0].mxu0
        %2458 = vmatprep.mubr.bf16.mxu0 0
        %2459 = vmatmul.mubr.bf16.gmra.mrb[0].mxu0 %v2405
        %v2460 = vpop.f32.mrb[0].mxu0
        %v2461 = vadd.f32 0.0, %v2460
        %v2462 = vpop.f32.mrb[0].mxu0
        %v2463 = vpop.f32.mrb[0].mxu0
        %v2464 = vadd.f32 0.0, %v2463
        %v2465 = vpop.f32.mrb[0].mxu0
        %2466 = vmatprep.mubr.bf16.mxu0 0
        %2467 = vmatmul.mubr.bf16.gmra.mrb[0].mxu0 %v2408
        %v2468 = vpop.f32.mrb[0].mxu0
        %v2469 = vadd.f32 0.0, %v2468
        %v2470 = vpop.f32.mrb[0].mxu0
        %v2471 = vpop.f32.mrb[0].mxu0
        %v2472 = vadd.f32 0.0, %v2471
        %v2473 = vpop.f32.mrb[0].mxu0
        %2474 = vdwg.mxu0
        %v2475 = vpack.c.bf16 %v2448, %v2445
        %v2476 = vpack.c.bf16 %v2456, %v2453
        %v2477 = vpack.c.bf16 %v2464, %v2461
        %v2478 = vpack.c.bf16 %v2472, %v2469
        %s2479 = scalar_lea.vmem [#allocation4], 32
        %v2480 = vld [vmem:[%s2479] sm:$0xf]
        %v2481 = vld [vmem:[%s2479 + $0x4] sm:$0xf]
        %v2482 = vld [vmem:[%s2479 + $0x8] sm:$0xf]
        %v2483 = vld [vmem:[%s2479 + $0xc] sm:$0xf]
        %v2488 = vunpack.c.l.b16 %v2480
        %v2489 = vunpack.c.l.b16 %v2481
        %v2490 = vunpack.c.l.b16 %v2482
        %v2491 = vunpack.c.l.b16 %v2483
        %v2492 = vpack.c.b16 %v2489, %v2488
        %v2493 = vpack.c.b16 %v2491, %v2490
        %v2497 = vsel %vm302, %v2475, 0
        %v2500 = vsel %vm302, %v2476, 0
        %v2503 = vsel %vm302, %v2477, 0
        %v2506 = vsel %vm302, %v2478, 0
        %2508 = vmatprep.subr.bf16.mxu0 0
        %2509 = vmatpush1.bf16.msra.mxu0 %v2492
        %2510 = vmatprep.subr.bf16.mxu0 0
        %2511 = vmatpush1.bf16.msra.mxu0 %v2493
        %2512 = vmatprep.subr.bf16.mxu0 0
        %2513 = vmatpush1.bf16.msra.mxu0 0
        %2514 = vmatprep.subr.bf16.mxu0 0
        %2515 = vmatpush1.bf16.msra.mxu0 0
        %2516 = vmatprep.subr.bf16.mxu0 0
        %2517 = vmatpush1.bf16.msra.mxu0 0
        %2518 = vmatprep.subr.bf16.mxu0 0
        %2519 = vmatpush1.bf16.msra.mxu0 0
        %2520 = vmatprep.subr.bf16.mxu0 0
        %2521 = vmatpush1.bf16.msra.mxu0 0
        %2522 = vmatprep.subr.bf16.mxu0 0
        %2523 = vmatpush1.bf16.msra.mxu0 0
        %2524 = vmatprep.subr.bf16.mxu0 0
        %2525 = vmatpush1.bf16.msra.mxu0 0
        %2526 = vmatprep.subr.bf16.mxu0 0
        %2527 = vmatpush1.bf16.msra.mxu0 0
        %2528 = vmatprep.subr.bf16.mxu0 0
        %2529 = vmatpush1.bf16.msra.mxu0 0
        %2530 = vmatprep.subr.bf16.mxu0 0
        %2531 = vmatpush1.bf16.msra.mxu0 0
        %2532 = vmatprep.subr.bf16.mxu0 0
        %2533 = vmatpush1.bf16.msra.mxu0 0
        %2534 = vmatprep.subr.bf16.mxu0 0
        %2535 = vmatpush1.bf16.msra.mxu0 0
        %2536 = vmatprep.subr.bf16.mxu0 0
        %2537 = vmatpush1.bf16.msra.mxu0 0
        %2538 = vmatprep.subr.bf16.mxu0 0
        %2539 = vmatpush1.bf16.msra.mxu0 0
        %2540 = vmatprep.mubr.bf16.mxu0 0
        %2541 = vmatmul.mubr.bf16.gmra.mrb[0].mxu0 %v2497
        %v2542 = vpop.f32.mrb[0].mxu0
        %v2543 = vadd.f32 0.0, %v2542
        %v2544 = vpop.f32.mrb[0].mxu0
        %v2545 = vpop.f32.mrb[0].mxu0
        %v2546 = vadd.f32 0.0, %v2545
        %v2547 = vpop.f32.mrb[0].mxu0
        %2548 = vmatprep.mubr.bf16.mxu0 0
        %2549 = vmatmul.mubr.bf16.gmra.mrb[0].mxu0 %v2500
        %v2550 = vpop.f32.mrb[0].mxu0
        %v2551 = vadd.f32 0.0, %v2550
        %v2552 = vpop.f32.mrb[0].mxu0
        %v2553 = vpop.f32.mrb[0].mxu0
        %v2554 = vadd.f32 0.0, %v2553
        %v2555 = vpop.f32.mrb[0].mxu0
        %2556 = vmatprep.mubr.bf16.mxu0 0
        %2557 = vmatmul.mubr.bf16.gmra.mrb[0].mxu0 %v2503
        %v2558 = vpop.f32.mrb[0].mxu0
        %v2559 = vadd.f32 0.0, %v2558
        %v2560 = vpop.f32.mrb[0].mxu0
        %v2561 = vpop.f32.mrb[0].mxu0
        %v2562 = vadd.f32 0.0, %v2561
        %v2563 = vpop.f32.mrb[0].mxu0
        %2564 = vmatprep.mubr.bf16.mxu0 0
        %2565 = vmatmul.mubr.bf16.gmra.mrb[0].mxu0 %v2506
        %v2566 = vpop.f32.mrb[0].mxu0
        %v2567 = vadd.f32 0.0, %v2566
        %v2568 = vpop.f32.mrb[0].mxu0
        %v2569 = vpop.f32.mrb[0].mxu0
        %v2570 = vadd.f32 0.0, %v2569
        %v2571 = vpop.f32.mrb[0].mxu0
        %2572 = vdwg.mxu0
        %v2573 = vadd.f32 %v1809, %v2543
        %v2574 = vadd.f32 %v1812, %v2546
        %v2575 = vadd.f32 %v1817, %v2551
        %v2576 = vadd.f32 %v1820, %v2554
        %v2577 = vadd.f32 %v1825, %v2559
        %v2578 = vadd.f32 %v1828, %v2562
        %v2579 = vadd.f32 %v1833, %v2567
        %v2580 = vadd.f32 %v1836, %v2570
        %s2581 = scalar_lea.vmem %s1, 48
        %v2582 = vld [vmem:[%s2581] sm:$0xf]
        %v2583 = vld [vmem:[%s2581 + $0x4] sm:$0xf]
        %v2584 = vld [vmem:[%s2581 + $0x8] sm:$0xf]
        %v2585 = vld [vmem:[%s2581 + $0xc] sm:$0xf]
        %v2590 = vunpack.c.l.b16 %v2582
        %v2591 = vunpack.c.l.b16 %v2583
        %v2592 = vunpack.c.l.b16 %v2584
        %v2593 = vunpack.c.l.b16 %v2585
        %v2594 = vpack.c.b16 %v2591, %v2590
        %v2595 = vpack.c.b16 %v2593, %v2592
        %2598 = vmatprep.subr.bf16.mxu0 0
        %2599 = vmatpush1.bf16.msra.mxu0 %v2594
        %2600 = vmatprep.subr.bf16.mxu0 0
        %2601 = vmatpush1.bf16.msra.mxu0 %v2595
        %2602 = vmatprep.subr.bf16.mxu0 0
        %2603 = vmatpush1.bf16.msra.mxu0 0
        %2604 = vmatprep.subr.bf16.mxu0 0
        %2605 = vmatpush1.bf16.msra.mxu0 0
        %2606 = vmatprep.subr.bf16.mxu0 0
        %2607 = vmatpush1.bf16.msra.mxu0 0
        %2608 = vmatprep.subr.bf16.mxu0 0
        %2609 = vmatpush1.bf16.msra.mxu0 0
        %2610 = vmatprep.subr.bf16.mxu0 0
        %2611 = vmatpush1.bf16.msra.mxu0 0
        %2612 = vmatprep.subr.bf16.mxu0 0
        %2613 = vmatpush1.bf16.msra.mxu0 0
        %2614 = vmatprep.subr.bf16.mxu0 0
        %2615 = vmatpush1.bf16.msra.mxu0 0
        %2616 = vmatprep.subr.bf16.mxu0 0
        %2617 = vmatpush1.bf16.msra.mxu0 0
        %2618 = vmatprep.subr.bf16.mxu0 0
        %2619 = vmatpush1.bf16.msra.mxu0 0
        %2620 = vmatprep.subr.bf16.mxu0 0
        %2621 = vmatpush1.bf16.msra.mxu0 0
        %2622 = vmatprep.subr.bf16.mxu0 0
        %2623 = vmatpush1.bf16.msra.mxu0 0
        %2624 = vmatprep.subr.bf16.mxu0 0
        %2625 = vmatpush1.bf16.msra.mxu0 0
        %2626 = vmatprep.subr.bf16.mxu0 0
        %2627 = vmatpush1.bf16.msra.mxu0 0
        %2628 = vmatprep.subr.bf16.mxu0 0
        %2629 = vmatpush1.bf16.msra.mxu0 0
        %2630 = vmatprep.mubr.bf16.mxu0 0
        %2631 = vmatmul.mubr.bf16.gmra.mrb[0].mxu0 %v373
        %v2632 = vpop.f32.mrb[0].mxu0
        %v2633 = vadd.f32 0.0, %v2632
        %v2634 = vpop.f32.mrb[0].mxu0
        %v2635 = vpop.f32.mrb[0].mxu0
        %v2636 = vadd.f32 0.0, %v2635
        %v2637 = vpop.f32.mrb[0].mxu0
        %2638 = vmatprep.mubr.bf16.mxu0 0
        %2639 = vmatmul.mubr.bf16.gmra.mrb[0].mxu0 %v376
        %v2640 = vpop.f32.mrb[0].mxu0
        %v2641 = vadd.f32 0.0, %v2640
        %v2642 = vpop.f32.mrb[0].mxu0
        %v2643 = vpop.f32.mrb[0].mxu0
        %v2644 = vadd.f32 0.0, %v2643
        %v2645 = vpop.f32.mrb[0].mxu0
        %2646 = vmatprep.mubr.bf16.mxu0 0
        %2647 = vmatmul.mubr.bf16.gmra.mrb[0].mxu0 %v379
        %v2648 = vpop.f32.mrb[0].mxu0
        %v2649 = vadd.f32 0.0, %v2648
        %v2650 = vpop.f32.mrb[0].mxu0
        %v2651 = vpop.f32.mrb[0].mxu0
        %v2652 = vadd.f32 0.0, %v2651
        %v2653 = vpop.f32.mrb[0].mxu0
        %2654 = vmatprep.mubr.bf16.mxu0 0
        %2655 = vmatmul.mubr.bf16.gmra.mrb[0].mxu0 %v382
        %v2656 = vpop.f32.mrb[0].mxu0
        %v2657 = vadd.f32 0.0, %v2656
        %v2658 = vpop.f32.mrb[0].mxu0
        %v2659 = vpop.f32.mrb[0].mxu0
        %v2660 = vadd.f32 0.0, %v2659
        %v2661 = vpop.f32.mrb[0].mxu0
        %2662 = vdwg.mxu0
        %s2663 = scalar_lea.vmem %s2, 48
        %v2664 = vld [vmem:[%s2663] sm:$0xf]
        %v2665 = vld [vmem:[%s2663 + $0x4] sm:$0xf]
        %v2666 = vld [vmem:[%s2663 + $0x8] sm:$0xf]
        %v2667 = vld [vmem:[%s2663 + $0xc] sm:$0xf]
        %v2672 = vunpack.c.l.b16 %v2664
        %v2673 = vunpack.c.l.b16 %v2665
        %v2674 = vunpack.c.l.b16 %v2666
        %v2675 = vunpack.c.l.b16 %v2667
        %v2676 = vpack.c.b16 %v2673, %v2672
        %v2677 = vpack.c.b16 %v2675, %v2674
        %2680 = vmatprep.subr.bf16.mxu0 0
        %2681 = vmatpush1.bf16.msra.mxu0 %v2676
        %2682 = vmatprep.subr.bf16.mxu0 0
        %2683 = vmatpush1.bf16.msra.mxu0 %v2677
        %2684 = vmatprep.subr.bf16.mxu0 0
        %2685 = vmatpush1.bf16.msra.mxu0 0
        %2686 = vmatprep.subr.bf16.mxu0 0
        %2687 = vmatpush1.bf16.msra.mxu0 0
        %2688 = vmatprep.subr.bf16.mxu0 0
        %2689 = vmatpush1.bf16.msra.mxu0 0
        %2690 = vmatprep.subr.bf16.mxu0 0
        %2691 = vmatpush1.bf16.msra.mxu0 0
        %2692 = vmatprep.subr.bf16.mxu0 0
        %2693 = vmatpush1.bf16.msra.mxu0 0
        %2694 = vmatprep.subr.bf16.mxu0 0
        %2695 = vmatpush1.bf16.msra.mxu0 0
        %2696 = vmatprep.subr.bf16.mxu0 0
        %2697 = vmatpush1.bf16.msra.mxu0 0
        %2698 = vmatprep.subr.bf16.mxu0 0
        %2699 = vmatpush1.bf16.msra.mxu0 0
        %2700 = vmatprep.subr.bf16.mxu0 0
        %2701 = vmatpush1.bf16.msra.mxu0 0
        %2702 = vmatprep.subr.bf16.mxu0 0
        %2703 = vmatpush1.bf16.msra.mxu0 0
        %2704 = vmatprep.subr.bf16.mxu0 0
        %2705 = vmatpush1.bf16.msra.mxu0 0
        %2706 = vmatprep.subr.bf16.mxu0 0
        %2707 = vmatpush1.bf16.msra.mxu0 0
        %2708 = vmatprep.subr.bf16.mxu0 0
        %2709 = vmatpush1.bf16.msra.mxu0 0
        %2710 = vmatprep.subr.bf16.mxu0 0
        %2711 = vmatpush1.bf16.msra.mxu0 0
        %2712 = vmatprep.mubr.bf16.mxu0 0
        %2713 = vmatmul.mubr.bf16.gmra.mrb[0].mxu0 %v373
        %v2714 = vpop.f32.mrb[0].mxu0
        %v2715 = vadd.f32 0.0, %v2714
        %v2716 = vpop.f32.mrb[0].mxu0
        %v2717 = vpop.f32.mrb[0].mxu0
        %v2718 = vadd.f32 0.0, %v2717
        %v2719 = vpop.f32.mrb[0].mxu0
        %2720 = vmatprep.mubr.bf16.mxu0 0
        %2721 = vmatmul.mubr.bf16.gmra.mrb[0].mxu0 %v376
        %v2722 = vpop.f32.mrb[0].mxu0
        %v2723 = vadd.f32 0.0, %v2722
        %v2724 = vpop.f32.mrb[0].mxu0
        %v2725 = vpop.f32.mrb[0].mxu0
        %v2726 = vadd.f32 0.0, %v2725
        %v2727 = vpop.f32.mrb[0].mxu0
        %2728 = vmatprep.mubr.bf16.mxu0 0
        %2729 = vmatmul.mubr.bf16.gmra.mrb[0].mxu0 %v379
        %v2730 = vpop.f32.mrb[0].mxu0
        %v2731 = vadd.f32 0.0, %v2730
        %v2732 = vpop.f32.mrb[0].mxu0
        %v2733 = vpop.f32.mrb[0].mxu0
        %v2734 = vadd.f32 0.0, %v2733
        %v2735 = vpop.f32.mrb[0].mxu0
        %2736 = vmatprep.mubr.bf16.mxu0 0
        %2737 = vmatmul.mubr.bf16.gmra.mrb[0].mxu0 %v382
        %v2738 = vpop.f32.mrb[0].mxu0
        %v2739 = vadd.f32 0.0, %v2738
        %v2740 = vpop.f32.mrb[0].mxu0
        %v2741 = vpop.f32.mrb[0].mxu0
        %v2742 = vadd.f32 0.0, %v2741
        %v2743 = vpop.f32.mrb[0].mxu0
        %2744 = vdwg.mxu0
        %s2745 = scalar_lea.vmem [#allocation2], 48
        %v2746 = vld [vmem:[%s2745] sm:$0xf]
        %v2747 = vld [vmem:[%s2745 + $0x4] sm:$0xf]
        %v2748 = vld [vmem:[%s2745 + $0x8] sm:$0xf]
        %v2749 = vld [vmem:[%s2745 + $0xc] sm:$0xf]
        %v2754 = vunpack.c.l.b16 %v2746
        %v2755 = vunpack.c.l.b16 %v2747
        %v2756 = vunpack.c.l.b16 %v2748
        %v2757 = vunpack.c.l.b16 %v2749
        %v2758 = vpack.c.b16 %v2755, %v2754
        %v2759 = vpack.c.b16 %v2757, %v2756
        %2762 = vmatprep.subr.bf16.mxu0 0
        %2763 = vmatpush1.bf16.msra.mxu0 %v2758
        %2764 = vmatprep.subr.bf16.mxu0 0
        %2765 = vmatpush1.bf16.msra.mxu0 %v2759
        %2766 = vmatprep.subr.bf16.mxu0 0
        %2767 = vmatpush1.bf16.msra.mxu0 0
        %2768 = vmatprep.subr.bf16.mxu0 0
        %2769 = vmatpush1.bf16.msra.mxu0 0
        %2770 = vmatprep.subr.bf16.mxu0 0
        %2771 = vmatpush1.bf16.msra.mxu0 0
        %2772 = vmatprep.subr.bf16.mxu0 0
        %2773 = vmatpush1.bf16.msra.mxu0 0
        %2774 = vmatprep.subr.bf16.mxu0 0
        %2775 = vmatpush1.bf16.msra.mxu0 0
        %2776 = vmatprep.subr.bf16.mxu0 0
        %2777 = vmatpush1.bf16.msra.mxu0 0
        %2778 = vmatprep.subr.bf16.mxu0 0
        %2779 = vmatpush1.bf16.msra.mxu0 0
        %2780 = vmatprep.subr.bf16.mxu0 0
        %2781 = vmatpush1.bf16.msra.mxu0 0
        %2782 = vmatprep.subr.bf16.mxu0 0
        %2783 = vmatpush1.bf16.msra.mxu0 0
        %2784 = vmatprep.subr.bf16.mxu0 0
        %2785 = vmatpush1.bf16.msra.mxu0 0
        %2786 = vmatprep.subr.bf16.mxu0 0
        %2787 = vmatpush1.bf16.msra.mxu0 0
        %2788 = vmatprep.subr.bf16.mxu0 0
        %2789 = vmatpush1.bf16.msra.mxu0 0
        %2790 = vmatprep.subr.bf16.mxu0 0
        %2791 = vmatpush1.bf16.msra.mxu0 0
        %2792 = vmatprep.subr.bf16.mxu0 0
        %2793 = vmatpush1.bf16.msra.mxu0 0
        %2794 = vmatprep.mubr.bf16.mxu0 0
        %2795 = vmatmul.mubr.bf16.gmra.mrb[0].mxu0 %v373
        %v2796 = vpop.f32.mrb[0].mxu0
        %v2797 = vadd.f32 0.0, %v2796
        %v2798 = vpop.f32.mrb[0].mxu0
        %v2799 = vpop.f32.mrb[0].mxu0
        %v2800 = vadd.f32 0.0, %v2799
        %v2801 = vpop.f32.mrb[0].mxu0
        %2802 = vmatprep.mubr.bf16.mxu0 0
        %2803 = vmatmul.mubr.bf16.gmra.mrb[0].mxu0 %v376
        %v2804 = vpop.f32.mrb[0].mxu0
        %v2805 = vadd.f32 0.0, %v2804
        %v2806 = vpop.f32.mrb[0].mxu0
        %v2807 = vpop.f32.mrb[0].mxu0
        %v2808 = vadd.f32 0.0, %v2807
        %v2809 = vpop.f32.mrb[0].mxu0
        %2810 = vmatprep.mubr.bf16.mxu0 0
        %2811 = vmatmul.mubr.bf16.gmra.mrb[0].mxu0 %v379
        %v2812 = vpop.f32.mrb[0].mxu0
        %v2813 = vadd.f32 0.0, %v2812
        %v2814 = vpop.f32.mrb[0].mxu0
        %v2815 = vpop.f32.mrb[0].mxu0
        %v2816 = vadd.f32 0.0, %v2815
        %v2817 = vpop.f32.mrb[0].mxu0
        %2818 = vmatprep.mubr.bf16.mxu0 0
        %2819 = vmatmul.mubr.bf16.gmra.mrb[0].mxu0 %v382
        %v2820 = vpop.f32.mrb[0].mxu0
        %v2821 = vadd.f32 0.0, %v2820
        %v2822 = vpop.f32.mrb[0].mxu0
        %v2823 = vpop.f32.mrb[0].mxu0
        %v2824 = vadd.f32 0.0, %v2823
        %v2825 = vpop.f32.mrb[0].mxu0
        %2826 = vdwg.mxu0
        %v2827 = vmul.f32 %v2633, %v2633
        %v2828 = vmul.f32 %v2636, %v2636
        %v2829 = vmul.f32 %v2641, %v2641
        %v2830 = vmul.f32 %v2644, %v2644
        %v2831 = vmul.f32 %v2649, %v2649
        %v2832 = vmul.f32 %v2652, %v2652
        %v2833 = vmul.f32 %v2657, %v2657
        %v2834 = vmul.f32 %v2660, %v2660
        %v2835 = vsel %vm302, %v2827, 0.0
        %2836 = vadd.xlane.f32.xlu0 %v2835
        %v2837 = vpop.xlane.xlu0 %2836
        %v2838 = vsel %vm302, %v2828, 0.0
        %2839 = vadd.xlane.f32.xlu0 %v2838
        %v2840 = vpop.xlane.xlu0 %2839
        %v2841 = vsel %vm302, %v2829, 0.0
        %2842 = vadd.xlane.f32.xlu0 %v2841
        %v2843 = vpop.xlane.xlu0 %2842
        %v2844 = vsel %vm302, %v2830, 0.0
        %2845 = vadd.xlane.f32.xlu0 %v2844
        %v2846 = vpop.xlane.xlu0 %2845
        %v2847 = vsel %vm302, %v2831, 0.0
        %2848 = vadd.xlane.f32.xlu0 %v2847
        %v2849 = vpop.xlane.xlu0 %2848
        %v2850 = vsel %vm302, %v2832, 0.0
        %2851 = vadd.xlane.f32.xlu0 %v2850
        %v2852 = vpop.xlane.xlu0 %2851
        %v2853 = vsel %vm302, %v2833, 0.0
        %2854 = vadd.xlane.f32.xlu0 %v2853
        %v2855 = vpop.xlane.xlu0 %2854
        %v2856 = vsel %vm302, %v2834, 0.0
        %2857 = vadd.xlane.f32.xlu0 %v2856
        %v2858 = vpop.xlane.xlu0 %2857
        %v2859 = vmax.f32 %v2837, 1e-24
        %v2860 = vmax.f32 %v2840, 1e-24
        %v2861 = vmax.f32 %v2843, 1e-24
        %v2862 = vmax.f32 %v2846, 1e-24
        %v2863 = vmax.f32 %v2849, 1e-24
        %v2864 = vmax.f32 %v2852, 1e-24
        %v2865 = vmax.f32 %v2855, 1e-24
        %v2866 = vmax.f32 %v2858, 1e-24
        %v2867 = vrsqrt.pop %v2859
        %v2868 = vrsqrt.pop %v2860
        %v2869 = vrsqrt.pop %v2861
        %v2870 = vrsqrt.pop %v2862
        %v2871 = vrsqrt.pop %v2863
        %v2872 = vrsqrt.pop %v2864
        %v2873 = vrsqrt.pop %v2865
        %v2874 = vrsqrt.pop %v2866
        %v2875 = vmul.f32 %v2633, %v2867
        %v2876 = vmul.f32 %v2636, %v2868
        %v2877 = vmul.f32 %v2641, %v2869
        %v2878 = vmul.f32 %v2644, %v2870
        %v2879 = vmul.f32 %v2649, %v2871
        %v2880 = vmul.f32 %v2652, %v2872
        %v2881 = vmul.f32 %v2657, %v2873
        %v2882 = vmul.f32 %v2660, %v2874
        %v2883 = vpack.c.bf16 %v2876, %v2875
        %v2884 = vpack.c.bf16 %v2878, %v2877
        %v2885 = vpack.c.bf16 %v2880, %v2879
        %v2886 = vpack.c.bf16 %v2882, %v2881
        %v2887 = vmul.f32 %v2715, %v2715
        %v2888 = vmul.f32 %v2718, %v2718
        %v2889 = vmul.f32 %v2723, %v2723
        %v2890 = vmul.f32 %v2726, %v2726
        %v2891 = vmul.f32 %v2731, %v2731
        %v2892 = vmul.f32 %v2734, %v2734
        %v2893 = vmul.f32 %v2739, %v2739
        %v2894 = vmul.f32 %v2742, %v2742
        %v2895 = vsel %vm302, %v2887, 0.0
        %2896 = vadd.xlane.f32.xlu0 %v2895
        %v2897 = vpop.xlane.xlu0 %2896
        %v2898 = vsel %vm302, %v2888, 0.0
        %2899 = vadd.xlane.f32.xlu0 %v2898
        %v2900 = vpop.xlane.xlu0 %2899
        %v2901 = vsel %vm302, %v2889, 0.0
        %2902 = vadd.xlane.f32.xlu0 %v2901
        %v2903 = vpop.xlane.xlu0 %2902
        %v2904 = vsel %vm302, %v2890, 0.0
        %2905 = vadd.xlane.f32.xlu0 %v2904
        %v2906 = vpop.xlane.xlu0 %2905
        %v2907 = vsel %vm302, %v2891, 0.0
        %2908 = vadd.xlane.f32.xlu0 %v2907
        %v2909 = vpop.xlane.xlu0 %2908
        %v2910 = vsel %vm302, %v2892, 0.0
        %2911 = vadd.xlane.f32.xlu0 %v2910
        %v2912 = vpop.xlane.xlu0 %2911
        %v2913 = vsel %vm302, %v2893, 0.0
        %2914 = vadd.xlane.f32.xlu0 %v2913
        %v2915 = vpop.xlane.xlu0 %2914
        %v2916 = vsel %vm302, %v2894, 0.0
        %2917 = vadd.xlane.f32.xlu0 %v2916
        %v2918 = vpop.xlane.xlu0 %2917
        %v2919 = vmax.f32 %v2897, 1e-24
        %v2920 = vmax.f32 %v2900, 1e-24
        %v2921 = vmax.f32 %v2903, 1e-24
        %v2922 = vmax.f32 %v2906, 1e-24
        %v2923 = vmax.f32 %v2909, 1e-24
        %v2924 = vmax.f32 %v2912, 1e-24
        %v2925 = vmax.f32 %v2915, 1e-24
        %v2926 = vmax.f32 %v2918, 1e-24
        %v2927 = vrsqrt.pop %v2919
        %v2928 = vrsqrt.pop %v2920
        %v2929 = vrsqrt.pop %v2921
        %v2930 = vrsqrt.pop %v2922
        %v2931 = vrsqrt.pop %v2923
        %v2932 = vrsqrt.pop %v2924
        %v2933 = vrsqrt.pop %v2925
        %v2934 = vrsqrt.pop %v2926
        %v2935 = vmul.f32 %v2715, %v2927
        %v2936 = vmul.f32 %v2718, %v2928
        %v2937 = vmul.f32 %v2723, %v2929
        %v2938 = vmul.f32 %v2726, %v2930
        %v2939 = vmul.f32 %v2731, %v2931
        %v2940 = vmul.f32 %v2734, %v2932
        %v2941 = vmul.f32 %v2739, %v2933
        %v2942 = vmul.f32 %v2742, %v2934
        %v2943 = vmul.f32 %v2935, %v731
        %v2944 = vmul.f32 %v2936, %v731
        %v2945 = vmul.f32 %v2937, %v731
        %v2946 = vmul.f32 %v2938, %v731
        %v2947 = vmul.f32 %v2939, %v731
        %v2948 = vmul.f32 %v2940, %v731
        %v2949 = vmul.f32 %v2941, %v731
        %v2950 = vmul.f32 %v2942, %v731
        %v2951 = vpack.c.bf16 %v2944, %v2943
        %v2952 = vpack.c.bf16 %v2946, %v2945
        %v2953 = vpack.c.bf16 %v2948, %v2947
        %v2954 = vpack.c.bf16 %v2950, %v2949
        %v2955 = vpack.c.bf16 %v2800, %v2797
        %v2956 = vpack.c.bf16 %v2808, %v2805
        %v2957 = vpack.c.bf16 %v2816, %v2813
        %v2958 = vpack.c.bf16 %v2824, %v2821
        %v2960 = vsel %vm302, %v2883, 0
        %v2963 = vsel %vm302, %v2884, 0
        %v2966 = vsel %vm302, %v2885, 0
        %v2969 = vsel %vm302, %v2886, 0
        %v2972 = vsel %vm302, %v2951, 0
        %v2975 = vsel %vm302, %v2952, 0
        %v2978 = vsel %vm302, %v2953, 0
        %v2981 = vsel %vm302, %v2954, 0
        %2983 = vmatprep.subr.bf16.mxu0 0
        %2984 = vmatpush1.bf16.xpose.msra.mxu0 %v2972
        %2985 = vmatprep.subr.bf16.mxu0 0
        %2986 = vmatpush1.bf16.xpose.msra.mxu0 %v2975
        %2987 = vmatprep.subr.bf16.mxu0 0
        %2988 = vmatpush1.bf16.xpose.msra.mxu0 %v2978
        %2989 = vmatprep.subr.bf16.mxu0 0
        %2990 = vmatpush1.bf16.xpose.msra.mxu0 %v2981
        %2991 = vmatprep.subr.bf16.mxu0 0
        %2992 = vmatpush1.bf16.xpose.msra.mxu0 0
        %2993 = vmatprep.subr.bf16.mxu0 0
        %2994 = vmatpush1.bf16.xpose.msra.mxu0 0
        %2995 = vmatprep.subr.bf16.mxu0 0
        %2996 = vmatpush1.bf16.xpose.msra.mxu0 0
        %2997 = vmatprep.subr.bf16.mxu0 0
        %2998 = vmatpush1.bf16.xpose.msra.mxu0 0
        %2999 = vmatprep.subr.bf16.mxu0 0
        %3000 = vmatpush1.bf16.xpose.msra.mxu0 0
        %3001 = vmatprep.subr.bf16.mxu0 0
        %3002 = vmatpush1.bf16.xpose.msra.mxu0 0
        %3003 = vmatprep.subr.bf16.mxu0 0
        %3004 = vmatpush1.bf16.xpose.msra.mxu0 0
        %3005 = vmatprep.subr.bf16.mxu0 0
        %3006 = vmatpush1.bf16.xpose.msra.mxu0 0
        %3007 = vmatprep.subr.bf16.mxu0 0
        %3008 = vmatpush1.bf16.xpose.msra.mxu0 0
        %3009 = vmatprep.subr.bf16.mxu0 0
        %3010 = vmatpush1.bf16.xpose.msra.mxu0 0
        %3011 = vmatprep.subr.bf16.mxu0 0
        %3012 = vmatpush1.bf16.xpose.msra.mxu0 0
        %3013 = vmatprep.subr.bf16.mxu0 0
        %3014 = vmatpush1.bf16.xpose.msra.mxu0 0
        %3015 = vmatprep.mubr.bf16.mxu0 0
        %3016 = vmatmul.mubr.bf16.gmra.mrb[0].mxu0 %v2960
        %v3017 = vpop.f32.mrb[0].mxu0
        %v3018 = vadd.f32 0.0, %v3017
        %v3019 = vpop.f32.mrb[0].mxu0
        %v3020 = vpop.f32.mrb[0].mxu0
        %v3021 = vadd.f32 0.0, %v3020
        %v3022 = vpop.f32.mrb[0].mxu0
        %3023 = vmatprep.mubr.bf16.mxu0 0
        %3024 = vmatmul.mubr.bf16.gmra.mrb[0].mxu0 %v2963
        %v3025 = vpop.f32.mrb[0].mxu0
        %v3026 = vadd.f32 0.0, %v3025
        %v3027 = vpop.f32.mrb[0].mxu0
        %v3028 = vpop.f32.mrb[0].mxu0
        %v3029 = vadd.f32 0.0, %v3028
        %v3030 = vpop.f32.mrb[0].mxu0
        %3031 = vmatprep.mubr.bf16.mxu0 0
        %3032 = vmatmul.mubr.bf16.gmra.mrb[0].mxu0 %v2966
        %v3033 = vpop.f32.mrb[0].mxu0
        %v3034 = vadd.f32 0.0, %v3033
        %v3035 = vpop.f32.mrb[0].mxu0
        %v3036 = vpop.f32.mrb[0].mxu0
        %v3037 = vadd.f32 0.0, %v3036
        %v3038 = vpop.f32.mrb[0].mxu0
        %3039 = vmatprep.mubr.bf16.mxu0 0
        %3040 = vmatmul.mubr.bf16.gmra.mrb[0].mxu0 %v2969
        %v3041 = vpop.f32.mrb[0].mxu0
        %v3042 = vadd.f32 0.0, %v3041
        %v3043 = vpop.f32.mrb[0].mxu0
        %v3044 = vpop.f32.mrb[0].mxu0
        %v3045 = vadd.f32 0.0, %v3044
        %v3046 = vpop.f32.mrb[0].mxu0
        %3047 = vdwg.mxu0
        %v3048 = vsel %vm838, %v3018, -inf
        %3049 = vmax.xlane.f32.xlu0 %v3048
        %v3050 = vpop.xlane.xlu0 %3049
        %v3051 = vsel %vm838, %v3021, -inf
        %3052 = vmax.xlane.f32.xlu0 %v3051
        %v3053 = vpop.xlane.xlu0 %3052
        %v3054 = vsel %vm838, %v3026, -inf
        %3055 = vmax.xlane.f32.xlu0 %v3054
        %v3056 = vpop.xlane.xlu0 %3055
        %v3057 = vsel %vm838, %v3029, -inf
        %3058 = vmax.xlane.f32.xlu0 %v3057
        %v3059 = vpop.xlane.xlu0 %3058
        %v3060 = vsel %vm838, %v3034, -inf
        %3061 = vmax.xlane.f32.xlu0 %v3060
        %v3062 = vpop.xlane.xlu0 %3061
        %v3063 = vsel %vm838, %v3037, -inf
        %3064 = vmax.xlane.f32.xlu0 %v3063
        %v3065 = vpop.xlane.xlu0 %3064
        %v3066 = vsel %vm838, %v3042, -inf
        %3067 = vmax.xlane.f32.xlu0 %v3066
        %v3068 = vpop.xlane.xlu0 %3067
        %v3069 = vsel %vm838, %v3045, -inf
        %3070 = vmax.xlane.f32.xlu0 %v3069
        %v3071 = vpop.xlane.xlu0 %3070
        %v3072 = vsub.f32 %v3018, %v3050
        %v3073 = vsub.f32 %v3021, %v3053
        %v3074 = vsub.f32 %v3026, %v3056
        %v3075 = vsub.f32 %v3029, %v3059
        %v3076 = vsub.f32 %v3034, %v3062
        %v3077 = vsub.f32 %v3037, %v3065
        %v3078 = vsub.f32 %v3042, %v3068
        %v3079 = vsub.f32 %v3045, %v3071
        %v3080 = vmul.f32 %v3072, 1.442695
        %v3081 = vpow.pop %v3080
        %v3082 = vmul.f32 %v3073, 1.442695
        %v3083 = vpow.pop %v3082
        %v3084 = vmul.f32 %v3074, 1.442695
        %v3085 = vpow.pop %v3084
        %v3086 = vmul.f32 %v3075, 1.442695
        %v3087 = vpow.pop %v3086
        %v3088 = vmul.f32 %v3076, 1.442695
        %v3089 = vpow.pop %v3088
        %v3090 = vmul.f32 %v3077, 1.442695
        %v3091 = vpow.pop %v3090
        %v3092 = vmul.f32 %v3078, 1.442695
        %v3093 = vpow.pop %v3092
        %v3094 = vmul.f32 %v3079, 1.442695
        %v3095 = vpow.pop %v3094
        %v3096 = vsel %vm838, %v3081, 0.0
        %3097 = vadd.xlane.f32.xlu0 %v3096
        %v3098 = vpop.xlane.xlu0 %3097
        %v3099 = vsel %vm838, %v3083, 0.0
        %3100 = vadd.xlane.f32.xlu0 %v3099
        %v3101 = vpop.xlane.xlu0 %3100
        %v3102 = vsel %vm838, %v3085, 0.0
        %3103 = vadd.xlane.f32.xlu0 %v3102
        %v3104 = vpop.xlane.xlu0 %3103
        %v3105 = vsel %vm838, %v3087, 0.0
        %3106 = vadd.xlane.f32.xlu0 %v3105
        %v3107 = vpop.xlane.xlu0 %3106
        %v3108 = vsel %vm838, %v3089, 0.0
        %3109 = vadd.xlane.f32.xlu0 %v3108
        %v3110 = vpop.xlane.xlu0 %3109
        %v3111 = vsel %vm838, %v3091, 0.0
        %3112 = vadd.xlane.f32.xlu0 %v3111
        %v3113 = vpop.xlane.xlu0 %3112
        %v3114 = vsel %vm838, %v3093, 0.0
        %3115 = vadd.xlane.f32.xlu0 %v3114
        %v3116 = vpop.xlane.xlu0 %3115
        %v3117 = vsel %vm838, %v3095, 0.0
        %3118 = vadd.xlane.f32.xlu0 %v3117
        %v3119 = vpop.xlane.xlu0 %3118
        %v3120 = vrcp.pop %v3098
        %v3121 = vrcp.pop %v3101
        %v3122 = vrcp.pop %v3104
        %v3123 = vrcp.pop %v3107
        %v3124 = vrcp.pop %v3110
        %v3125 = vrcp.pop %v3113
        %v3126 = vrcp.pop %v3116
        %v3127 = vrcp.pop %v3119
        %v3128 = vmul.f32 %v3081, %v3120
        %v3129 = vmul.f32 %v3083, %v3121
        %v3130 = vmul.f32 %v3085, %v3122
        %v3131 = vmul.f32 %v3087, %v3123
        %v3132 = vmul.f32 %v3089, %v3124
        %v3133 = vmul.f32 %v3091, %v3125
        %v3134 = vmul.f32 %v3093, %v3126
        %v3135 = vmul.f32 %v3095, %v3127
        %v3136 = vpack.c.bf16 %v3129, %v3128
        %v3137 = vpack.c.bf16 %v3131, %v3130
        %v3138 = vpack.c.bf16 %v3133, %v3132
        %v3139 = vpack.c.bf16 %v3135, %v3134
        %v3141 = vsel %vm838, %v3136, 0
        %v3144 = vsel %vm838, %v3137, 0
        %v3147 = vsel %vm838, %v3138, 0
        %v3150 = vsel %vm838, %v3139, 0
        %3152 = vmatprep.subr.bf16.mxu0 0
        %3153 = vmatpush1.bf16.msra.mxu0 %v2955
        %3154 = vmatprep.subr.bf16.mxu0 0
        %3155 = vmatpush1.bf16.msra.mxu0 %v2956
        %3156 = vmatprep.subr.bf16.mxu0 0
        %3157 = vmatpush1.bf16.msra.mxu0 %v2957
        %3158 = vmatprep.subr.bf16.mxu0 0
        %3159 = vmatpush1.bf16.msra.mxu0 %v2958
        %3160 = vmatprep.subr.bf16.mxu0 0
        %3161 = vmatpush1.bf16.msra.mxu0 0
        %3162 = vmatprep.subr.bf16.mxu0 0
        %3163 = vmatpush1.bf16.msra.mxu0 0
        %3164 = vmatprep.subr.bf16.mxu0 0
        %3165 = vmatpush1.bf16.msra.mxu0 0
        %3166 = vmatprep.subr.bf16.mxu0 0
        %3167 = vmatpush1.bf16.msra.mxu0 0
        %3168 = vmatprep.subr.bf16.mxu0 0
        %3169 = vmatpush1.bf16.msra.mxu0 0
        %3170 = vmatprep.subr.bf16.mxu0 0
        %3171 = vmatpush1.bf16.msra.mxu0 0
        %3172 = vmatprep.subr.bf16.mxu0 0
        %3173 = vmatpush1.bf16.msra.mxu0 0
        %3174 = vmatprep.subr.bf16.mxu0 0
        %3175 = vmatpush1.bf16.msra.mxu0 0
        %3176 = vmatprep.subr.bf16.mxu0 0
        %3177 = vmatpush1.bf16.msra.mxu0 0
        %3178 = vmatprep.subr.bf16.mxu0 0
        %3179 = vmatpush1.bf16.msra.mxu0 0
        %3180 = vmatprep.subr.bf16.mxu0 0
        %3181 = vmatpush1.bf16.msra.mxu0 0
        %3182 = vmatprep.subr.bf16.mxu0 0
        %3183 = vmatpush1.bf16.msra.mxu0 0
        %3184 = vmatprep.mubr.bf16.mxu0 0
        %3185 = vmatmul.mubr.bf16.gmra.mrb[0].mxu0 %v3141
        %v3186 = vpop.f32.mrb[0].mxu0
        %v3187 = vadd.f32 0.0, %v3186
        %v3188 = vpop.f32.mrb[0].mxu0
        %v3189 = vpop.f32.mrb[0].mxu0
        %v3190 = vadd.f32 0.0, %v3189
        %v3191 = vpop.f32.mrb[0].mxu0
        %3192 = vmatprep.mubr.bf16.mxu0 0
        %3193 = vmatmul.mubr.bf16.gmra.mrb[0].mxu0 %v3144
        %v3194 = vpop.f32.mrb[0].mxu0
        %v3195 = vadd.f32 0.0, %v3194
        %v3196 = vpop.f32.mrb[0].mxu0
        %v3197 = vpop.f32.mrb[0].mxu0
        %v3198 = vadd.f32 0.0, %v3197
        %v3199 = vpop.f32.mrb[0].mxu0
        %3200 = vmatprep.mubr.bf16.mxu0 0
        %3201 = vmatmul.mubr.bf16.gmra.mrb[0].mxu0 %v3147
        %v3202 = vpop.f32.mrb[0].mxu0
        %v3203 = vadd.f32 0.0, %v3202
        %v3204 = vpop.f32.mrb[0].mxu0
        %v3205 = vpop.f32.mrb[0].mxu0
        %v3206 = vadd.f32 0.0, %v3205
        %v3207 = vpop.f32.mrb[0].mxu0
        %3208 = vmatprep.mubr.bf16.mxu0 0
        %3209 = vmatmul.mubr.bf16.gmra.mrb[0].mxu0 %v3150
        %v3210 = vpop.f32.mrb[0].mxu0
        %v3211 = vadd.f32 0.0, %v3210
        %v3212 = vpop.f32.mrb[0].mxu0
        %v3213 = vpop.f32.mrb[0].mxu0
        %v3214 = vadd.f32 0.0, %v3213
        %v3215 = vpop.f32.mrb[0].mxu0
        %3216 = vdwg.mxu0
        %v3217 = vpack.c.bf16 %v3190, %v3187
        %v3218 = vpack.c.bf16 %v3198, %v3195
        %v3219 = vpack.c.bf16 %v3206, %v3203
        %v3220 = vpack.c.bf16 %v3214, %v3211
        %s3221 = scalar_lea.vmem [#allocation4], 48
        %v3222 = vld [vmem:[%s3221] sm:$0xf]
        %v3223 = vld [vmem:[%s3221 + $0x4] sm:$0xf]
        %v3224 = vld [vmem:[%s3221 + $0x8] sm:$0xf]
        %v3225 = vld [vmem:[%s3221 + $0xc] sm:$0xf]
        %v3230 = vunpack.c.l.b16 %v3222
        %v3231 = vunpack.c.l.b16 %v3223
        %v3232 = vunpack.c.l.b16 %v3224
        %v3233 = vunpack.c.l.b16 %v3225
        %v3234 = vpack.c.b16 %v3231, %v3230
        %v3235 = vpack.c.b16 %v3233, %v3232
        %v3239 = vsel %vm302, %v3217, 0
        %v3242 = vsel %vm302, %v3218, 0
        %v3245 = vsel %vm302, %v3219, 0
        %v3248 = vsel %vm302, %v3220, 0
        %3250 = vmatprep.subr.bf16.mxu0 0
        %3251 = vmatpush1.bf16.msra.mxu0 %v3234
        %3252 = vmatprep.subr.bf16.mxu0 0
        %3253 = vmatpush1.bf16.msra.mxu0 %v3235
        %3254 = vmatprep.subr.bf16.mxu0 0
        %3255 = vmatpush1.bf16.msra.mxu0 0
        %3256 = vmatprep.subr.bf16.mxu0 0
        %3257 = vmatpush1.bf16.msra.mxu0 0
        %3258 = vmatprep.subr.bf16.mxu0 0
        %3259 = vmatpush1.bf16.msra.mxu0 0
        %3260 = vmatprep.subr.bf16.mxu0 0
        %3261 = vmatpush1.bf16.msra.mxu0 0
        %3262 = vmatprep.subr.bf16.mxu0 0
        %3263 = vmatpush1.bf16.msra.mxu0 0
        %3264 = vmatprep.subr.bf16.mxu0 0
        %3265 = vmatpush1.bf16.msra.mxu0 0
        %3266 = vmatprep.subr.bf16.mxu0 0
        %3267 = vmatpush1.bf16.msra.mxu0 0
        %3268 = vmatprep.subr.bf16.mxu0 0
        %3269 = vmatpush1.bf16.msra.mxu0 0
        %3270 = vmatprep.subr.bf16.mxu0 0
        %3271 = vmatpush1.bf16.msra.mxu0 0
        %3272 = vmatprep.subr.bf16.mxu0 0
        %3273 = vmatpush1.bf16.msra.mxu0 0
        %3274 = vmatprep.subr.bf16.mxu0 0
        %3275 = vmatpush1.bf16.msra.mxu0 0
        %3276 = vmatprep.subr.bf16.mxu0 0
        %3277 = vmatpush1.bf16.msra.mxu0 0
        %3278 = vmatprep.subr.bf16.mxu0 0
        %3279 = vmatpush1.bf16.msra.mxu0 0
        %3280 = vmatprep.subr.bf16.mxu0 0
        %3281 = vmatpush1.bf16.msra.mxu0 0
        %3282 = vmatprep.mubr.bf16.mxu0 0
        %3283 = vmatmul.mubr.bf16.gmra.mrb[0].mxu0 %v3239
        %v3284 = vpop.f32.mrb[0].mxu0
        %v3285 = vadd.f32 0.0, %v3284
        %v3286 = vpop.f32.mrb[0].mxu0
        %v3287 = vpop.f32.mrb[0].mxu0
        %v3288 = vadd.f32 0.0, %v3287
        %v3289 = vpop.f32.mrb[0].mxu0
        %3290 = vmatprep.mubr.bf16.mxu0 0
        %3291 = vmatmul.mubr.bf16.gmra.mrb[0].mxu0 %v3242
        %v3292 = vpop.f32.mrb[0].mxu0
        %v3293 = vadd.f32 0.0, %v3292
        %v3294 = vpop.f32.mrb[0].mxu0
        %v3295 = vpop.f32.mrb[0].mxu0
        %v3296 = vadd.f32 0.0, %v3295
        %v3297 = vpop.f32.mrb[0].mxu0
        %3298 = vmatprep.mubr.bf16.mxu0 0
        %3299 = vmatmul.mubr.bf16.gmra.mrb[0].mxu0 %v3245
        %v3300 = vpop.f32.mrb[0].mxu0
        %v3301 = vadd.f32 0.0, %v3300
        %v3302 = vpop.f32.mrb[0].mxu0
        %v3303 = vpop.f32.mrb[0].mxu0
        %v3304 = vadd.f32 0.0, %v3303
        %v3305 = vpop.f32.mrb[0].mxu0
        %3306 = vmatprep.mubr.bf16.mxu0 0
        %3307 = vmatmul.mubr.bf16.gmra.mrb[0].mxu0 %v3248
        %v3308 = vpop.f32.mrb[0].mxu0
        %v3309 = vadd.f32 0.0, %v3308
        %v3310 = vpop.f32.mrb[0].mxu0
        %v3311 = vpop.f32.mrb[0].mxu0
        %v3312 = vadd.f32 0.0, %v3311
        %v3313 = vpop.f32.mrb[0].mxu0
        %3314 = vdwg.mxu0
        %v3315 = vadd.f32 %v2573, %v3285
        %v3316 = vadd.f32 %v2574, %v3288
        %v3317 = vadd.f32 %v2575, %v3293
        %v3318 = vadd.f32 %v2576, %v3296
        %v3319 = vadd.f32 %v2577, %v3301
        %v3320 = vadd.f32 %v2578, %v3304
        %v3321 = vadd.f32 %v2579, %v3309
        %v3322 = vadd.f32 %v2580, %v3312
        %3323 = vst.msk [vmem:[%s283] sm:$0xff] %vm302, %v3315
        %3324 = vst.msk [vmem:[%s283 + $0x8] sm:$0xff] %vm302, %v3316
        %3325 = vst.msk [vmem:[%s283 + $0x10] sm:$0xff] %vm302, %v3317
        %3326 = vst.msk [vmem:[%s283 + $0x18] sm:$0xff] %vm302, %v3318
        %3327 = vst.msk [vmem:[%s283 + $0x20] sm:$0xff] %vm302, %v3319
        %3328 = vst.msk [vmem:[%s283 + $0x28] sm:$0xff] %vm302, %v3320
        %3329 = vst.msk [vmem:[%s283 + $0x30] sm:$0xff] %vm302, %v3321
        %3330 = vst.msk [vmem:[%s283 + $0x38] sm:$0xff] %vm302, %v3322
        %s3331 = smul.u32 8, %s19
        %p3332 = scmp.lt.s32.totalorder %s3331, 15
        %s3333 = scalar_select %p3332, %s3331, 15
        %s3334 = smul.addr %s3333, 8
        %s3335 = scalar_lea.vmem %s6, %s3334
        // Predicated region
        $region53: #{tpu_custom_call.1} parent=43 // pred_check
          %p3336 = pneg %p168
        $region54: #{tpu_custom_call.1} parent=43 // pred_check_branch
          %3338 = sbr.rel (%p3336) target = $region56
        $region55: #{tpu_custom_call.1} parent=43 // pred_region
          %s3339 = smul.u32 8, %s19
        $region56: #{tpu_custom_call.1} parent=43 // pred_fallthru
          _
      $region44: #{tpu_custom_call.1} parent=5 // pred_fallthru
        _
      %p3340 = scmp.le.s32.totalorder 2, %s14
      // Predicated region
      $region57: #{tpu_custom_call.1} parent=5 // pred_check
        %p3341 = pneg %p3340
      $region58: #{tpu_custom_call.1} parent=5 // pred_check_branch
        %3343 = sbr.rel (%p3341) target = $region60
      $region59: #{tpu_custom_call.1} parent=5 // pred_region
        %s3344 = ssub.s32 %s14, 2
        // Predicated region
        $region61: #{tpu_custom_call.1} parent=59 // pred_check
          %p3345 = pneg %p174
        $region62: #{tpu_custom_call.1} parent=59 // pred_check_branch
          %3347 = sbr.rel (%p3345) target = $region64
        $region63: #{tpu_custom_call.1} parent=59 // pred_region
          %s3348 = smul.u32 8, %s20
          %p3349 = scmp.lt.s32.totalorder %s3348, 15
          %s3350 = scalar_select %p3349, %s3348, 15
          %s3351 = smul.addr %s3350, 8
          %s3352 = scalar_lea.vmem %s6, %s3351
        $region64: #{tpu_custom_call.1} parent=59 // pred_fallthru
          _
      $region60: #{tpu_custom_call.1} parent=5 // pred_fallthru
        _
    $region6: #{tpu_custom_call.1} parent=1 // loop_footer
      %s18 = sadd.s32 1, %s14
    $region7: #{tpu_custom_call.1} parent=1 // loop_footer_branch
      %13 = sbr.rel target = $region3
    $region8: #{tpu_custom_call.1} parent=1 // loop_exit
      _
    %3353 = vsyncpa [#allocation3], 1
    %s3354 = scalar_lea.sflag [#allocation3], 1
    %3355 = vsyncpa %s3354, 1
    %3356 = vsyncpa [#allocation5], 1

</llo_original>
